<compile_context>
chip_gen: v7x
topology: tpu7x:2x2x1
jax: 0.10.0
libtpu: 0.0.40
codegen_flags: <defaults>
</compile_context>

<pallas_src>
import math

import jax
import jax.numpy as jnp
from jax.experimental import pallas as pl
from jax.experimental.pallas import tpu as pltpu

EPS = 1e-10
MASK_FILL = -10000.0

_HAS_EINSHAPE = hasattr(pltpu, "einshape")


def _vmem_limit_bytes(arrays, floor=32 << 20, cap=64 << 20):
    total = sum(int(a.size) * a.dtype.itemsize for a in arrays)
    return int(min(cap, max(floor, 4 * total)))


# --------------------------- fused layer stack -------------------------------

def decoder_forward(dec_ids, enc, pad_mask, mask, params, n_head):
    """Full decoder forward.

    dec_ids: (B, S_dec) int32 token ids
    enc:     (B, S_enc, D) float32 encoder output (or None)
    pad_mask:(B, 1, S_dec, S_enc) 0/1 cross-attention mask (or None)
    mask:    (B, 1, S_dec, S_dec) 0/1 self-attention mask
    """
    B, Sd = dec_ids.shape
    V, D = params['tok_emb'].shape
    H = n_head
    Dh = D // H
    lp = params['layers']
    n_layer = lp['wqkv1'].shape[0]
    has_cross = enc is not None
    Se = enc.shape[1] if has_cross else 0
    scale = 1.0 / math.sqrt(Dh)

    # Embedding: gather + positional encoding (XLA glue; no one-hot matmul,
    # no tok_emb / one-hot residency inside the kernel).
    x0 = (params['tok_emb'][dec_ids]
          + params['pos_enc'][:Sd][None, :, :]).astype(jnp.float32)     # (B,Sd,D)

    self_mask = mask[:, 0].astype(jnp.float32)                          # (B,Sd,Sd)

    inputs = [x0, self_mask]
    if has_cross:
        inputs += [enc.astype(jnp.float32), pad_mask[:, 0].astype(jnp.float32)]

    layer_keys = ['wqkv1', 'bqkv1', 'wo1', 'bo1', 'g1', 'be1']
    if has_cross:
        layer_keys += ['wq2', 'bq2', 'wkv2', 'bkv2', 'wo2', 'bo2', 'g2', 'be2']
    layer_keys += ['w1', 'b1', 'w2', 'b2', 'g3', 'be3']
    weights = [lp[k] for k in layer_keys]

    # ---------------------------- in-kernel helpers --------------------------

    def layer_norm(x, gamma, beta):
        mean = jnp.mean(x, axis=-1, keepdims=True)
        var = jnp.mean(jnp.square(x - mean), axis=-1, keepdims=True)
        var = jnp.maximum(var, EPS)                    # torch.clamp(var, min=eps)
        inv = jax.lax.rsqrt(var + EPS)                 # EUP rsqrt, no VALU divide
        return gamma * ((x - mean) * inv) + beta

    def split_heads(x2d, S):
        x3 = x2d.reshape(S, H, Dh)
        if _HAS_EINSHAPE:
            return pltpu.einshape("mhd->hmd", x3)      # (H, S, Dh)
        return jnp.swapaxes(x3, 0, 1)

    def merge_heads(x3, S):
        if _HAS_EINSHAPE:
            y = pltpu.einshape("hmd->mhd", x3)         # (S, H, Dh)
        else:
            y = jnp.swapaxes(x3, 0, 1)
        return y.reshape(S, D)

    def mha(q, k, v, mask2d, Sq, Sk):
        # q: (Sq, D), k/v: (Sk, D), mask2d: (Sq, Sk) -> (Sq, D)
        qh = split_heads(q, Sq).astype(jnp.bfloat16)
        kh = split_heads(k, Sk).astype(jnp.bfloat16)
        vh = split_heads(v, Sk).astype(jnp.bfloat16)
        # One head-batched contraction instead of H tiny matmuls.
        s = jnp.einsum('hqd,hkd->hqk', qh, kh,
                       preferred_element_type=jnp.float32) * scale
        # Mask hoisted out of the head dimension (computed once, broadcast).
        mask_add = jnp.where(mask2d == 0.0, MASK_FILL, 0.0)[None, :, :]
        s = s + mask_add
        s_max = jnp.max(s, axis=-1, keepdims=True)
        p = jnp.exp(s - s_max)
        denom = jnp.sum(p, axis=-1, keepdims=True)
        p = p * pl.reciprocal(denom, approx=True)      # EUP reciprocal
        o = jnp.einsum('hqk,hkd->hqd', p.astype(jnp.bfloat16), vh,
                       preferred_element_type=jnp.float32)
        return merge_heads(o, Sq)

    def mm(x, w_ref, b_ref):
        # bf16 weights, f32 accumulation, f32 bias.
        return (jnp.dot(x.astype(jnp.bfloat16), w_ref[...],
                        preferred_element_type=jnp.float32) + b_ref[...])

    # -------------------------------- kernel ---------------------------------

    def kernel(*refs):
        it = iter(refs)
        x0_ref = next(it); self_mask_ref = next(it)
        if has_cross:
            enc_ref = next(it); pad_mask_ref = next(it)
        wqkv1 = next(it); bqkv1 = next(it)
        wo1 = next(it); bo1 = next(it)
        g1 = next(it); be1 = next(it)
        if has_cross:
            wq2 = next(it); bq2 = next(it)
            wkv2 = next(it); bkv2 = next(it)
            wo2 = next(it); bo2 = next(it)
            g2 = next(it); be2 = next(it)
        w1 = next(it); b1 = next(it)
        w2 = next(it); b2 = next(it)
        g3 = next(it); be3 = next(it)
        x_ref = next(it)                 # output block (1, Sd, D), resident over l

        l = pl.program_id(1)

        @pl.when(l == 0)
        def _():
            x_ref[0] = x0_ref[...]       # init carry with the embedding

        x = x_ref[0]                     # (Sd, D) f32, carried across layers

        # ---- self attention (fused QKV) + residual LayerNorm ----
        qkv = mm(x, wqkv1, bqkv1)
        a = mha(qkv[:, 0:D], qkv[:, D:2 * D], qkv[:, 2 * D:3 * D],
                self_mask_ref[...], Sd, Sd)
        a = mm(a, wo1, bo1)
        x = layer_norm(a + x, g1[...], be1[...])

        # ---- cross attention (fused KV) + residual LayerNorm ----
        if has_cross:
            q = mm(x, wq2, bq2)
            kv = mm(enc_ref[...], wkv2, bkv2)
            a = mha(q, kv[:, 0:D], kv[:, D:2 * D], pad_mask_ref[...], Sd, Se)
            a = mm(a, wo2, bo2)
            x = layer_norm(a + x, g2[...], be2[...])

        # ---- FFN + residual LayerNorm ----
        # TODO(synk): at very large Sd*ffn_hidden, row-chunk the FFN matmuls
        # with an inner pl.loop; batch tiling already bounds rows per step here.
        h = jnp.maximum(mm(x, w1, b1), 0.0)
        f = mm(h, w2, b2)
        x = layer_norm(f + x, g3[...], be3[...])

        x_ref[0] = x

    # ------------------------------ specs / call ------------------------------

    def batch_spec(a):   # (B, r, c): one batch slab per outer grid step
        return pl.BlockSpec((None,) + a.shape[1:], lambda b, l: (b, 0, 0))

    def layer_spec(a):   # (L, r, c): one layer slab per inner grid step
        return pl.BlockSpec((None,) + a.shape[1:], lambda b, l: (l, 0, 0))

    # TODO(synk): on VMEM-tight v7x the batch-blocked constants could use
    # pipeline_mode=pl.Buffered(1); left default-buffered for portability.
    in_specs = [batch_spec(a) for a in inputs] + [layer_spec(a) for a in weights]
    out_spec = pl.BlockSpec((1, Sd, D), lambda b, l: (b, 0, 0))

    x_final = pl.pallas_call(
        kernel,
        out_shape=jax.ShapeDtypeStruct((B, Sd, D), jnp.float32),
        grid_spec=pltpu.PrefetchScalarGridSpec(
            num_scalar_prefetch=0,
            grid=(B, n_layer),
            in_specs=in_specs,
            out_specs=out_spec,
        ),
        compiler_params=pltpu.CompilerParams(
            dimension_semantics=("parallel", "arbitrary"),
            vmem_limit_bytes=_vmem_limit_bytes(inputs + weights)),
    )(*(inputs + weights))

    logits = vocab_projection(x_final.reshape(B * Sd, D),
                              params['fc_w'], params['fc_b'])
    return logits.reshape(B, Sd, V)


# ------------------------- tiled vocab projection ----------------------------

def vocab_projection(x2d, fc_w, fc_b):
    """Separate lane-tiled matmul kernel: (N, D) @ (D, V) + b."""
    N, D = x2d.shape
    V = fc_w.shape[1]
    tm = 128 if N >= 128 else max(8, ((N + 7) // 8) * 8)
    tn = 256 if V >= 512 else 128
    Np = ((N + tm - 1) // tm) * tm
    Vp = ((V + tn - 1) // tn) * tn

    x_p = jnp.pad(x2d, ((0, Np - N), (0, 0)))
    w_p = jnp.pad(fc_w, ((0, 0), (0, Vp - V)))
    b_p = jnp.pad(fc_b, ((0, 0), (0, Vp - V)))

    def proj_kernel(x_ref, w_ref, b_ref, o_ref):
        o_ref[...] = (jnp.dot(x_ref[...], w_ref[...],
                              preferred_element_type=jnp.float32) + b_ref[...])

    tile_bytes = 4 * (tm * D + D * tn + tn + tm * tn)
    vmem_limit = int(min(64 << 20, max(32 << 20, 6 * tile_bytes)))

    logits = pl.pallas_call(
        proj_kernel,
        out_shape=jax.ShapeDtypeStruct((Np, Vp), jnp.float32),
        grid_spec=pltpu.PrefetchScalarGridSpec(
            num_scalar_prefetch=0,
            grid=(Np // tm, Vp // tn),
            in_specs=[pl.BlockSpec((tm, D), lambda i, j: (i, 0)),
                      pl.BlockSpec((D, tn), lambda i, j: (0, j)),
                      pl.BlockSpec((1, tn), lambda i, j: (0, j))],
            out_specs=pl.BlockSpec((tm, tn), lambda i, j: (i, j)),
        ),
        compiler_params=pltpu.CompilerParams(
            dimension_semantics=("parallel", "parallel"),
            vmem_limit_bytes=vmem_limit),
    )(x_p, w_p, b_p)
    return logits[:N, :V]


# ------------------------------ param init ----------------------------------

def make_pos_encoding(seq_len, d_model):
    pos = jnp.arange(seq_len, dtype=jnp.float32)[:, None]
    ind = jnp.arange(0, d_model, 2, dtype=jnp.float32)
    angle = pos / (10000.0 ** (ind / d_model))
    enc = jnp.zeros((seq_len, d_model), jnp.float32)
    enc = enc.at[:, 0::2].set(jnp.sin(angle))
    enc = enc.at[:, 1::2].set(jnp.cos(angle))
    return enc


def init_params(key, vocab_size, seq_len, d_model, ffn_hidden, n_layer,
                weight_dtype=jnp.bfloat16):
    D, Hf, L = d_model, ffn_hidden, n_layer
    ks = jax.random.split(key, 10)

    def dense(k, din, dout, scale=0.05):
        kw, kb = jax.random.split(k)
        w = (scale * jax.random.normal(kw, (L, din, dout), jnp.float32)
             ).astype(weight_dtype)                    # bf16 stacked weights
        b = scale * jax.random.normal(kb, (L, 1, dout), jnp.float32)
        return w, b

    wqkv1, bqkv1 = dense(ks[0], D, 3 * D)
    wo1, bo1 = dense(ks[1], D, D)
    wq2, bq2 = dense(ks[2], D, D)
    wkv2, bkv2 = dense(ks[3], D, 2 * D)
    wo2, bo2 = dense(ks[4], D, D)
    w1, b1 = dense(ks[5], D, Hf)
    w2, b2 = dense(ks[6], Hf, D)

    fc_kw, fc_kb = jax.random.split(ks[7])
    ones = jnp.ones((L, 1, D), jnp.float32)
    zeros = jnp.zeros((L, 1, D), jnp.float32)

    return {
        'tok_emb': 0.05 * jax.random.normal(ks[8], (vocab_size, D), jnp.float32),
        'pos_enc': make_pos_encoding(seq_len, D),
        'fc_w': 0.05 * jax.random.normal(fc_kw, (D, vocab_size), jnp.float32),
        'fc_b': 0.05 * jax.random.normal(fc_kb, (1, vocab_size), jnp.float32),
        'layers': dict(
            wqkv1=wqkv1, bqkv1=bqkv1, wo1=wo1, bo1=bo1, g1=ones, be1=zeros,
            wq2=wq2, bq2=bq2, wkv2=wkv2, bkv2=bkv2, wo2=wo2, bo2=bo2,
            g2=ones, be2=zeros,
            w1=w1, b1=b1, w2=w2, b2=b2, g3=ones, be3=zeros,
        ),
    }


# --------------------------------- main --------------------------------------

if __name__ == "__main__":
    vocab_size = 50
    max_seq_len = 16
    d_model = 32
    ffn_hidden = 64
    n_head = 4
    n_layer = 2
    B, S_dec, S_enc = 2, 8, 8

    root = jax.random.PRNGKey(0)
    k_param, k_dec, k_enc = jax.random.split(root, 3)

    params = init_params(k_param, vocab_size, max_seq_len, d_model,
                         ffn_hidden, n_layer)

    dec_ids = jax.random.randint(k_dec, (B, S_dec), 0, vocab_size, dtype=jnp.int32)
    enc = 0.1 * jax.random.normal(k_enc, (B, S_enc, d_model), jnp.float32)

    # self-attention mask: causal, (B, 1, S_dec, S_dec); 1 = keep, 0 = masked
    causal = jnp.tril(jnp.ones((S_dec, S_dec), jnp.float32))
    mask = jnp.broadcast_to(causal, (B, 1, S_dec, S_dec))

    # cross-attention pad mask: (B, 1, S_dec, S_enc); batch 1 has 2 padded enc tokens
    enc_valid = jnp.array([[1.0] * S_enc,
                           [1.0] * (S_enc - 2) + [0.0] * 2], jnp.float32)
    pad_mask = jnp.broadcast_to(enc_valid[:, None, None, :], (B, 1, S_dec, S_enc))

    fwd = jax.jit(decoder_forward, static_argnums=(5,))
    logits = fwd(dec_ids, enc, pad_mask, mask, params, n_head)
    logits = jax.block_until_ready(logits)

    assert logits.shape == (B, S_dec, vocab_size)
    assert bool(jnp.all(jnp.isfinite(logits)))
    # TODO(synk): dropout layers are identity (inference mode); bf16 weights and
    # approx reciprocal mean results match the f32 PyTorch reference to ~1e-2.
    print("KERNEL_OK")
</pallas_src>

<mosaic_0001>
module attributes {stable_mosaic.version = 11 : i64} {
  func.func @proj_kernel(%arg0: i32, %arg1: i32, %arg2: memref<16x32xf32, #tpu.memory_space<vmem>>, %arg3: memref<32x128xf32, #tpu.memory_space<vmem>>, %arg4: memref<1x128xf32, #tpu.memory_space<vmem>>, %arg5: memref<16x128xf32, #tpu.memory_space<vmem>>) attributes {dimension_semantics = [#tpu.dimension_semantics<parallel>, #tpu.dimension_semantics<parallel>], iteration_bounds = array<i64: 1, 1>, scalar_prefetch = 0 : i64, scratch_operands = 0 : i64, tpu.core_type = #tpu.core_type<tc>, window_params = [{transform_indices = @transform_0, window_bounds = array<i64: 16, 32>}, {transform_indices = @transform_1, window_bounds = array<i64: 32, 128>}, {transform_indices = @transform_2, window_bounds = array<i64: 1, 128>}, {transform_indices = @transform_3, window_bounds = array<i64: 16, 128>}]} {
    %c0 = arith.constant 0 : index
    %c0_0 = arith.constant 0 : index
    %0 = vector.load %arg2[%c0, %c0_0] : memref<16x32xf32, #tpu.memory_space<vmem>>, vector<16x32xf32>
    %c0_1 = arith.constant 0 : index
    %c0_2 = arith.constant 0 : index
    %1 = vector.load %arg3[%c0_1, %c0_2] : memref<32x128xf32, #tpu.memory_space<vmem>>, vector<32x128xf32>
    %cst = arith.constant dense<0.000000e+00> : vector<16x128xf32>
    %2 = tpu.matmul %0, %1, %cst {dimension_numbers = #tpu.dot_dimension_numbers<[1], [0], [0], [1], [0, 0, 1, 1], [], []>} : vector<16x32xf32>, vector<32x128xf32>, vector<16x128xf32> -> vector<16x128xf32>
    %c0_3 = arith.constant 0 : index
    %c0_4 = arith.constant 0 : index
    %3 = vector.load %arg4[%c0_3, %c0_4] : memref<1x128xf32, #tpu.memory_space<vmem>>, vector<1x128xf32>
    %4 = vector.broadcast %3 : vector<1x128xf32> to vector<16x128xf32>
    %5 = arith.addf %2, %4 : vector<16x128xf32>
    %c0_5 = arith.constant 0 : index
    %c0_6 = arith.constant 0 : index
    %6 = vector.load %arg5[%c0_5, %c0_6] : memref<16x128xf32, #tpu.memory_space<vmem>>, vector<16x128xf32>
    tpu.vector_store %arg5[%c0_5, %c0_6], %5 {strides = array<i32>} : memref<16x128xf32, #tpu.memory_space<vmem>>, vector<16x128xf32>,
    return
  }
  func.func @transform_0(%arg0: i32, %arg1: i32) -> (i32, i32) {
    %c0_i32 = arith.constant 0 : i32
    %c0_i32_0 = arith.constant 0 : i32
    return %arg0, %c0_i32 : i32, i32
  }
  func.func @transform_1(%arg0: i32, %arg1: i32) -> (i32, i32) {
    %c0_i32 = arith.constant 0 : i32
    %c0_i32_0 = arith.constant 0 : i32
    return %c0_i32, %arg1 : i32, i32
  }
  func.func @transform_2(%arg0: i32, %arg1: i32) -> (i32, i32) {
    %c0_i32 = arith.constant 0 : i32
    %c0_i32_0 = arith.constant 0 : i32
    return %c0_i32, %arg1 : i32, i32
  }
  func.func @transform_3(%arg0: i32, %arg1: i32) -> (i32, i32) {
    %c0_i32 = arith.constant 0 : i32
    return %arg0, %arg1 : i32, i32
  }
}

module attributes {stable_mosaic.version = 11 : i64} {
  func.func @kernel(%arg0: i32, %arg1: i32, %arg2: memref<1x8x32xf32, #tpu.memory_space<vmem>>, %arg3: memref<1x8x8xf32, #tpu.memory_space<vmem>>, %arg4: memref<1x8x32xf32, #tpu.memory_space<vmem>>, %arg5: memref<1x8x8xf32, #tpu.memory_space<vmem>>, %arg6: memref<1x32x96xbf16, #tpu.memory_space<vmem>>, %arg7: memref<1x1x96xf32, #tpu.memory_space<vmem>>, %arg8: memref<1x32x32xbf16, #tpu.memory_space<vmem>>, %arg9: memref<1x1x32xf32, #tpu.memory_space<vmem>>, %arg10: memref<1x1x32xf32, #tpu.memory_space<vmem>>, %arg11: memref<1x1x32xf32, #tpu.memory_space<vmem>>, %arg12: memref<1x32x32xbf16, #tpu.memory_space<vmem>>, %arg13: memref<1x1x32xf32, #tpu.memory_space<vmem>>, %arg14: memref<1x32x64xbf16, #tpu.memory_space<vmem>>, %arg15: memref<1x1x64xf32, #tpu.memory_space<vmem>>, %arg16: memref<1x32x32xbf16, #tpu.memory_space<vmem>>, %arg17: memref<1x1x32xf32, #tpu.memory_space<vmem>>, %arg18: memref<1x1x32xf32, #tpu.memory_space<vmem>>, %arg19: memref<1x1x32xf32, #tpu.memory_space<vmem>>, %arg20: memref<1x32x64xbf16, #tpu.memory_space<vmem>>, %arg21: memref<1x1x64xf32, #tpu.memory_space<vmem>>, %arg22: memref<1x64x32xbf16, #tpu.memory_space<vmem>>, %arg23: memref<1x1x32xf32, #tpu.memory_space<vmem>>, %arg24: memref<1x1x32xf32, #tpu.memory_space<vmem>>, %arg25: memref<1x1x32xf32, #tpu.memory_space<vmem>>, %arg26: memref<1x8x32xf32, #tpu.memory_space<vmem>>) attributes {dimension_semantics = [#tpu.dimension_semantics<parallel>, #tpu.dimension_semantics<arbitrary>], iteration_bounds = array<i64: 2, 2>, scalar_prefetch = 0 : i64, scratch_operands = 0 : i64, tpu.core_type = #tpu.core_type<tc>, window_params = [{transform_indices = @transform_0, window_bounds = array<i64: 1, 8, 32>}, {transform_indices = @transform_1, window_bounds = array<i64: 1, 8, 8>}, {transform_indices = @transform_2, window_bounds = array<i64: 1, 8, 32>}, {transform_indices = @transform_3, window_bounds = array<i64: 1, 8, 8>}, {transform_indices = @transform_4, window_bounds = array<i64: 1, 32, 96>}, {transform_indices = @transform_5, window_bounds = array<i64: 1, 1, 96>}, {transform_indices = @transform_6, window_bounds = array<i64: 1, 32, 32>}, {transform_indices = @transform_7, window_bounds = array<i64: 1, 1, 32>}, {transform_indices = @transform_8, window_bounds = array<i64: 1, 1, 32>}, {transform_indices = @transform_9, window_bounds = array<i64: 1, 1, 32>}, {transform_indices = @transform_10, window_bounds = array<i64: 1, 32, 32>}, {transform_indices = @transform_11, window_bounds = array<i64: 1, 1, 32>}, {transform_indices = @transform_12, window_bounds = array<i64: 1, 32, 64>}, {transform_indices = @transform_13, window_bounds = array<i64: 1, 1, 64>}, {transform_indices = @transform_14, window_bounds = array<i64: 1, 32, 32>}, {transform_indices = @transform_15, window_bounds = array<i64: 1, 1, 32>}, {transform_indices = @transform_16, window_bounds = array<i64: 1, 1, 32>}, {transform_indices = @transform_17, window_bounds = array<i64: 1, 1, 32>}, {transform_indices = @transform_18, window_bounds = array<i64: 1, 32, 64>}, {transform_indices = @transform_19, window_bounds = array<i64: 1, 1, 64>}, {transform_indices = @transform_20, window_bounds = array<i64: 1, 64, 32>}, {transform_indices = @transform_21, window_bounds = array<i64: 1, 1, 32>}, {transform_indices = @transform_22, window_bounds = array<i64: 1, 1, 32>}, {transform_indices = @transform_23, window_bounds = array<i64: 1, 1, 32>}, {transform_indices = @transform_24, window_bounds = array<i64: 1, 8, 32>}]} {
    %c0_i32 = arith.constant 0 : i32
    %0 = arith.cmpi eq, %arg1, %c0_i32 : i32
    %1 = arith.extui %0 : i1 to i32
    %c0_i32_0 = arith.constant 0 : i32
    %2 = arith.cmpi ne, %1, %c0_i32_0 : i32
    scf.if %2 {
      %c0_116 = arith.constant 0 : index
      %c0_117 = arith.constant 0 : index
      %c0_118 = arith.constant 0 : index
      %232 = vector.load %arg2[%c0_116, %c0_117, %c0_118] : memref<1x8x32xf32, #tpu.memory_space<vmem>>, vector<1x8x32xf32>
      %233 = vector.shape_cast %232 : vector<1x8x32xf32> to vector<8x32xf32>
      %c0_119 = arith.constant 0 : index
      %c0_120 = arith.constant 0 : index
      %c0_121 = arith.constant 0 : index
      %234 = vector.load %arg26[%c0_119, %c0_120, %c0_121] : memref<1x8x32xf32, #tpu.memory_space<vmem>>, vector<1x8x32xf32>
      %235 = vector.shape_cast %234 : vector<1x8x32xf32> to vector<8x32xf32>
      %236 = vector.shape_cast %233 : vector<8x32xf32> to vector<1x8x32xf32>
      tpu.vector_store %arg26[%c0_119, %c0_120, %c0_121], %236 {strides = array<i32>} : memref<1x8x32xf32, #tpu.memory_space<vmem>>, vector<1x8x32xf32>,
    } else {
    }
    %c0 = arith.constant 0 : index
    %c0_1 = arith.constant 0 : index
    %c0_2 = arith.constant 0 : index
    %3 = vector.load %arg26[%c0, %c0_1, %c0_2] : memref<1x8x32xf32, #tpu.memory_space<vmem>>, vector<1x8x32xf32>
    %4 = vector.shape_cast %3 : vector<1x8x32xf32> to vector<8x32xf32>
    %5 = arith.truncf %4 : vector<8x32xf32> to vector<8x32xbf16>
    %c0_3 = arith.constant 0 : index
    %c0_4 = arith.constant 0 : index
    %c0_5 = arith.constant 0 : index
    %6 = vector.load %arg6[%c0_3, %c0_4, %c0_5] : memref<1x32x96xbf16, #tpu.memory_space<vmem>>, vector<1x32x96xbf16>
    %7 = vector.shape_cast %6 : vector<1x32x96xbf16> to vector<32x96xbf16>
    %cst = arith.constant dense<0.000000e+00> : vector<8x96xf32>
    %8 = tpu.matmul %5, %7, %cst {dimension_numbers = #tpu.dot_dimension_numbers<[1], [0], [0], [1], [0, 0, 1, 1], [], []>} : vector<8x32xbf16>, vector<32x96xbf16>, vector<8x96xf32> -> vector<8x96xf32>
    %c0_6 = arith.constant 0 : index
    %c0_7 = arith.constant 0 : index
    %c0_8 = arith.constant 0 : index
    %9 = vector.load %arg7[%c0_6, %c0_7, %c0_8] : memref<1x1x96xf32, #tpu.memory_space<vmem>>, vector<1x1x96xf32>
    %10 = vector.shape_cast %9 : vector<1x1x96xf32> to vector<1x96xf32>
    %11 = vector.broadcast %10 : vector<1x96xf32> to vector<8x96xf32>
    %12 = arith.addf %8, %11 : vector<8x96xf32>
    %13 = vector.extract_strided_slice %12 {offsets = [0, 0], sizes = [8, 32], strides = [1, 1]} : vector<8x96xf32> to vector<8x32xf32>
    %14 = vector.extract_strided_slice %12 {offsets = [0, 32], sizes = [8, 32], strides = [1, 1]} : vector<8x96xf32> to vector<8x32xf32>
    %15 = vector.extract_strided_slice %12 {offsets = [0, 64], sizes = [8, 32], strides = [1, 1]} : vector<8x96xf32> to vector<8x32xf32>
    %c0_9 = arith.constant 0 : index
    %c0_10 = arith.constant 0 : index
    %c0_11 = arith.constant 0 : index
    %16 = vector.load %arg3[%c0_9, %c0_10, %c0_11] : memref<1x8x8xf32, #tpu.memory_space<vmem>>, vector<1x8x8xf32>
    %17 = vector.shape_cast %16 : vector<1x8x8xf32> to vector<8x8xf32>
    %18 = vector.shape_cast %13 : vector<8x32xf32> to vector<8x4x8xf32>
    %19 = tpu.transpose %18, [1, 0, 2] : vector<8x4x8xf32> -> vector<4x8x8xf32>
    %20 = arith.truncf %19 : vector<4x8x8xf32> to vector<4x8x8xbf16>
    %21 = vector.shape_cast %14 : vector<8x32xf32> to vector<8x4x8xf32>
    %22 = tpu.transpose %21, [1, 0, 2] : vector<8x4x8xf32> -> vector<4x8x8xf32>
    %23 = arith.truncf %22 : vector<4x8x8xf32> to vector<4x8x8xbf16>
    %24 = vector.shape_cast %15 : vector<8x32xf32> to vector<8x4x8xf32>
    %25 = tpu.transpose %24, [1, 0, 2] : vector<8x4x8xf32> -> vector<4x8x8xf32>
    %26 = arith.truncf %25 : vector<4x8x8xf32> to vector<4x8x8xbf16>
    "tpu.trace_start"() <{level = 10 : i32, message = "hqd,hkd->hqk"}> : () -> ()
    %cst_12 = arith.constant dense<0.000000e+00> : vector<4x8x8xf32>
    %27 = tpu.matmul %20, %23, %cst_12 {dimension_numbers = #tpu.dot_dimension_numbers<[2], [2], [1], [1], [0, 0, 0, 1, 1, 1], [0], [0]>} : vector<4x8x8xbf16>, vector<4x8x8xbf16>, vector<4x8x8xf32> -> vector<4x8x8xf32>
    "tpu.trace_stop"() : () -> ()
    %cst_13 = arith.constant 0.353553385 : f32
    %28 = vector.broadcast %cst_13 : f32 to vector<4x8x8xf32>
    %29 = arith.mulf %27, %28 : vector<4x8x8xf32>
    %cst_14 = arith.constant 0.000000e+00 : f32
    %30 = vector.broadcast %cst_14 : f32 to vector<8x8xf32>
    %31 = arith.cmpf oeq, %17, %30 : vector<8x8xf32>
    %cst_15 = arith.constant -1.000000e+04 : f32
    %cst_16 = arith.constant 0.000000e+00 : f32
    %32 = vector.broadcast %cst_15 : f32 to vector<8x8xf32>
    %33 = vector.broadcast %cst_16 : f32 to vector<8x8xf32>
    %34 = arith.select %31, %32, %33 : vector<8x8xi1>, vector<8x8xf32>
    %35 = vector.shape_cast %34 : vector<8x8xf32> to vector<1x8x8xf32>
    %36 = vector.broadcast %35 : vector<1x8x8xf32> to vector<4x8x8xf32>
    %37 = arith.addf %29, %36 : vector<4x8x8xf32>
    %cst_17 = arith.constant dense<0xFF800000> : vector<4x8xf32>
    %38 = vector.multi_reduction <maximumf>, %37, %cst_17 [2] : vector<4x8x8xf32> to vector<4x8xf32>
    %39 = vector.shape_cast %38 : vector<4x8xf32> to vector<4x8x1xf32>
    %40 = vector.broadcast %39 : vector<4x8x1xf32> to vector<4x8x8xf32>
    %41 = arith.subf %37, %40 : vector<4x8x8xf32>
    %42 = math.exp %41 : vector<4x8x8xf32>
    %cst_18 = arith.constant dense<0.000000e+00> : vector<4x8xf32>
    %43 = vector.multi_reduction <add>, %42, %cst_18 [2] : vector<4x8x8xf32> to vector<4x8xf32>
    %44 = vector.shape_cast %43 : vector<4x8xf32> to vector<4x8x1xf32>
    %45 = tpu.reciprocal %44 {approx = true} : vector<4x8x1xf32> -> vector<4x8x1xf32>
    %46 = vector.broadcast %45 : vector<4x8x1xf32> to vector<4x8x8xf32>
    %47 = arith.mulf %42, %46 : vector<4x8x8xf32>
    %48 = arith.truncf %47 : vector<4x8x8xf32> to vector<4x8x8xbf16>
    "tpu.trace_start"() <{level = 10 : i32, message = "hqk,hkd->hqd"}> : () -> ()
    %cst_19 = arith.constant dense<0.000000e+00> : vector<4x8x8xf32>
    %49 = tpu.matmul %48, %26, %cst_19 {dimension_numbers = #tpu.dot_dimension_numbers<[2], [1], [1], [2], [0, 0, 0, 1, 1, 2], [0], [0]>} : vector<4x8x8xbf16>, vector<4x8x8xbf16>, vector<4x8x8xf32> -> vector<4x8x8xf32>
    "tpu.trace_stop"() : () -> ()
    %50 = tpu.transpose %49, [1, 0, 2] : vector<4x8x8xf32> -> vector<8x4x8xf32>
    %51 = vector.shape_cast %50 : vector<8x4x8xf32> to vector<8x32xf32>
    %52 = arith.truncf %51 : vector<8x32xf32> to vector<8x32xbf16>
    %c0_20 = arith.constant 0 : index
    %c0_21 = arith.constant 0 : index
    %c0_22 = arith.constant 0 : index
    %53 = vector.load %arg8[%c0_20, %c0_21, %c0_22] : memref<1x32x32xbf16, #tpu.memory_space<vmem>>, vector<1x32x32xbf16>
    %54 = vector.shape_cast %53 : vector<1x32x32xbf16> to vector<32x32xbf16>
    %cst_23 = arith.constant dense<0.000000e+00> : vector<8x32xf32>
    %55 = tpu.matmul %52, %54, %cst_23 {dimension_numbers = #tpu.dot_dimension_numbers<[1], [0], [0], [1], [0, 0, 1, 1], [], []>} : vector<8x32xbf16>, vector<32x32xbf16>, vector<8x32xf32> -> vector<8x32xf32>
    %c0_24 = arith.constant 0 : index
    %c0_25 = arith.constant 0 : index
    %c0_26 = arith.constant 0 : index
    %56 = vector.load %arg9[%c0_24, %c0_25, %c0_26] : memref<1x1x32xf32, #tpu.memory_space<vmem>>, vector<1x1x32xf32>
    %57 = vector.shape_cast %56 : vector<1x1x32xf32> to vector<1x32xf32>
    %58 = vector.broadcast %57 : vector<1x32xf32> to vector<8x32xf32>
    %59 = arith.addf %55, %58 : vector<8x32xf32>
    %60 = arith.addf %59, %4 : vector<8x32xf32>
    %c0_27 = arith.constant 0 : index
    %c0_28 = arith.constant 0 : index
    %c0_29 = arith.constant 0 : index
    %61 = vector.load %arg10[%c0_27, %c0_28, %c0_29] : memref<1x1x32xf32, #tpu.memory_space<vmem>>, vector<1x1x32xf32>
    %62 = vector.shape_cast %61 : vector<1x1x32xf32> to vector<1x32xf32>
    %c0_30 = arith.constant 0 : index
    %c0_31 = arith.constant 0 : index
    %c0_32 = arith.constant 0 : index
    %63 = vector.load %arg11[%c0_30, %c0_31, %c0_32] : memref<1x1x32xf32, #tpu.memory_space<vmem>>, vector<1x1x32xf32>
    %64 = vector.shape_cast %63 : vector<1x1x32xf32> to vector<1x32xf32>
    %cst_33 = arith.constant dense<0.000000e+00> : vector<8xf32>
    %65 = vector.multi_reduction <add>, %60, %cst_33 [1] : vector<8x32xf32> to vector<8xf32>
    %66 = vector.shape_cast %65 : vector<8xf32> to vector<8x1xf32>
    %cst_34 = arith.constant 3.200000e+01 : f32
    %67 = vector.broadcast %cst_34 : f32 to vector<8x1xf32>
    %68 = arith.divf %66, %67 : vector<8x1xf32>
    %69 = vector.broadcast %68 : vector<8x1xf32> to vector<8x32xf32>
    %70 = arith.subf %60, %69 : vector<8x32xf32>
    %71 = arith.mulf %70, %70 : vector<8x32xf32>
    %cst_35 = arith.constant dense<0.000000e+00> : vector<8xf32>
    %72 = vector.multi_reduction <add>, %71, %cst_35 [1] : vector<8x32xf32> to vector<8xf32>
    %73 = vector.shape_cast %72 : vector<8xf32> to vector<8x1xf32>
    %cst_36 = arith.constant 3.200000e+01 : f32
    %74 = vector.broadcast %cst_36 : f32 to vector<8x1xf32>
    %75 = arith.divf %73, %74 : vector<8x1xf32>
    %cst_37 = arith.constant 1.000000e-10 : f32
    %76 = vector.broadcast %cst_37 : f32 to vector<8x1xf32>
    %77 = arith.maximumf %75, %76 : vector<8x1xf32>
    %cst_38 = arith.constant 1.000000e-10 : f32
    %78 = vector.broadcast %cst_38 : f32 to vector<8x1xf32>
    %79 = arith.addf %77, %78 : vector<8x1xf32>
    %80 = math.rsqrt %79 : vector<8x1xf32>
    %81 = vector.broadcast %68 : vector<8x1xf32> to vector<8x32xf32>
    %82 = arith.subf %60, %81 : vector<8x32xf32>
    %83 = vector.broadcast %80 : vector<8x1xf32> to vector<8x32xf32>
    %84 = arith.mulf %82, %83 : vector<8x32xf32>
    %85 = vector.broadcast %62 : vector<1x32xf32> to vector<8x32xf32>
    %86 = arith.mulf %85, %84 : vector<8x32xf32>
    %87 = vector.broadcast %64 : vector<1x32xf32> to vector<8x32xf32>
    %88 = arith.addf %86, %87 : vector<8x32xf32>
    %89 = arith.truncf %88 : vector<8x32xf32> to vector<8x32xbf16>
    %c0_39 = arith.constant 0 : index
    %c0_40 = arith.constant 0 : index
    %c0_41 = arith.constant 0 : index
    %90 = vector.load %arg12[%c0_39, %c0_40, %c0_41] : memref<1x32x32xbf16, #tpu.memory_space<vmem>>, vector<1x32x32xbf16>
    %91 = vector.shape_cast %90 : vector<1x32x32xbf16> to vector<32x32xbf16>
    %cst_42 = arith.constant dense<0.000000e+00> : vector<8x32xf32>
    %92 = tpu.matmul %89, %91, %cst_42 {dimension_numbers = #tpu.dot_dimension_numbers<[1], [0], [0], [1], [0, 0, 1, 1], [], []>} : vector<8x32xbf16>, vector<32x32xbf16>, vector<8x32xf32> -> vector<8x32xf32>
    %c0_43 = arith.constant 0 : index
    %c0_44 = arith.constant 0 : index
    %c0_45 = arith.constant 0 : index
    %93 = vector.load %arg13[%c0_43, %c0_44, %c0_45] : memref<1x1x32xf32, #tpu.memory_space<vmem>>, vector<1x1x32xf32>
    %94 = vector.shape_cast %93 : vector<1x1x32xf32> to vector<1x32xf32>
    %95 = vector.broadcast %94 : vector<1x32xf32> to vector<8x32xf32>
    %96 = arith.addf %92, %95 : vector<8x32xf32>
    %c0_46 = arith.constant 0 : index
    %c0_47 = arith.constant 0 : index
    %c0_48 = arith.constant 0 : index
    %97 = vector.load %arg4[%c0_46, %c0_47, %c0_48] : memref<1x8x32xf32, #tpu.memory_space<vmem>>, vector<1x8x32xf32>
    %98 = vector.shape_cast %97 : vector<1x8x32xf32> to vector<8x32xf32>
    %99 = arith.truncf %98 : vector<8x32xf32> to vector<8x32xbf16>
    %c0_49 = arith.constant 0 : index
    %c0_50 = arith.constant 0 : index
    %c0_51 = arith.constant 0 : index
    %100 = vector.load %arg14[%c0_49, %c0_50, %c0_51] : memref<1x32x64xbf16, #tpu.memory_space<vmem>>, vector<1x32x64xbf16>
    %101 = vector.shape_cast %100 : vector<1x32x64xbf16> to vector<32x64xbf16>
    %cst_52 = arith.constant dense<0.000000e+00> : vector<8x64xf32>
    %102 = tpu.matmul %99, %101, %cst_52 {dimension_numbers = #tpu.dot_dimension_numbers<[1], [0], [0], [1], [0, 0, 1, 1], [], []>} : vector<8x32xbf16>, vector<32x64xbf16>, vector<8x64xf32> -> vector<8x64xf32>
    %c0_53 = arith.constant 0 : index
    %c0_54 = arith.constant 0 : index
    %c0_55 = arith.constant 0 : index
    %103 = vector.load %arg15[%c0_53, %c0_54, %c0_55] : memref<1x1x64xf32, #tpu.memory_space<vmem>>, vector<1x1x64xf32>
    %104 = vector.shape_cast %103 : vector<1x1x64xf32> to vector<1x64xf32>
    %105 = vector.broadcast %104 : vector<1x64xf32> to vector<8x64xf32>
    %106 = arith.addf %102, %105 : vector<8x64xf32>
    %107 = vector.extract_strided_slice %106 {offsets = [0, 0], sizes = [8, 32], strides = [1, 1]} : vector<8x64xf32> to vector<8x32xf32>
    %108 = vector.extract_strided_slice %106 {offsets = [0, 32], sizes = [8, 32], strides = [1, 1]} : vector<8x64xf32> to vector<8x32xf32>
    %c0_56 = arith.constant 0 : index
    %c0_57 = arith.constant 0 : index
    %c0_58 = arith.constant 0 : index
    %109 = vector.load %arg5[%c0_56, %c0_57, %c0_58] : memref<1x8x8xf32, #tpu.memory_space<vmem>>, vector<1x8x8xf32>
    %110 = vector.shape_cast %109 : vector<1x8x8xf32> to vector<8x8xf32>
    %111 = vector.shape_cast %96 : vector<8x32xf32> to vector<8x4x8xf32>
    %112 = tpu.transpose %111, [1, 0, 2] : vector<8x4x8xf32> -> vector<4x8x8xf32>
    %113 = arith.truncf %112 : vector<4x8x8xf32> to vector<4x8x8xbf16>
    %114 = vector.shape_cast %107 : vector<8x32xf32> to vector<8x4x8xf32>
    %115 = tpu.transpose %114, [1, 0, 2] : vector<8x4x8xf32> -> vector<4x8x8xf32>
    %116 = arith.truncf %115 : vector<4x8x8xf32> to vector<4x8x8xbf16>
    %117 = vector.shape_cast %108 : vector<8x32xf32> to vector<8x4x8xf32>
    %118 = tpu.transpose %117, [1, 0, 2] : vector<8x4x8xf32> -> vector<4x8x8xf32>
    %119 = arith.truncf %118 : vector<4x8x8xf32> to vector<4x8x8xbf16>
    "tpu.trace_start"() <{level = 10 : i32, message = "hqd,hkd->hqk"}> : () -> ()
    %cst_59 = arith.constant dense<0.000000e+00> : vector<4x8x8xf32>
    %120 = tpu.matmul %113, %116, %cst_59 {dimension_numbers = #tpu.dot_dimension_numbers<[2], [2], [1], [1], [0, 0, 0, 1, 1, 1], [0], [0]>} : vector<4x8x8xbf16>, vector<4x8x8xbf16>, vector<4x8x8xf32> -> vector<4x8x8xf32>
    "tpu.trace_stop"() : () -> ()
    %cst_60 = arith.constant 0.353553385 : f32
    %121 = vector.broadcast %cst_60 : f32 to vector<4x8x8xf32>
    %122 = arith.mulf %120, %121 : vector<4x8x8xf32>
    %cst_61 = arith.constant 0.000000e+00 : f32
    %123 = vector.broadcast %cst_61 : f32 to vector<8x8xf32>
    %124 = arith.cmpf oeq, %110, %123 : vector<8x8xf32>
    %cst_62 = arith.constant -1.000000e+04 : f32
    %cst_63 = arith.constant 0.000000e+00 : f32
    %125 = vector.broadcast %cst_62 : f32 to vector<8x8xf32>
    %126 = vector.broadcast %cst_63 : f32 to vector<8x8xf32>
    %127 = arith.select %124, %125, %126 : vector<8x8xi1>, vector<8x8xf32>
    %128 = vector.shape_cast %127 : vector<8x8xf32> to vector<1x8x8xf32>
    %129 = vector.broadcast %128 : vector<1x8x8xf32> to vector<4x8x8xf32>
    %130 = arith.addf %122, %129 : vector<4x8x8xf32>
    %cst_64 = arith.constant dense<0xFF800000> : vector<4x8xf32>
    %131 = vector.multi_reduction <maximumf>, %130, %cst_64 [2] : vector<4x8x8xf32> to vector<4x8xf32>
    %132 = vector.shape_cast %131 : vector<4x8xf32> to vector<4x8x1xf32>
    %133 = vector.broadcast %132 : vector<4x8x1xf32> to vector<4x8x8xf32>
    %134 = arith.subf %130, %133 : vector<4x8x8xf32>
    %135 = math.exp %134 : vector<4x8x8xf32>
    %cst_65 = arith.constant dense<0.000000e+00> : vector<4x8xf32>
    %136 = vector.multi_reduction <add>, %135, %cst_65 [2] : vector<4x8x8xf32> to vector<4x8xf32>
    %137 = vector.shape_cast %136 : vector<4x8xf32> to vector<4x8x1xf32>
    %138 = tpu.reciprocal %137 {approx = true} : vector<4x8x1xf32> -> vector<4x8x1xf32>
    %139 = vector.broadcast %138 : vector<4x8x1xf32> to vector<4x8x8xf32>
    %140 = arith.mulf %135, %139 : vector<4x8x8xf32>
    %141 = arith.truncf %140 : vector<4x8x8xf32> to vector<4x8x8xbf16>
    "tpu.trace_start"() <{level = 10 : i32, message = "hqk,hkd->hqd"}> : () -> ()
    %cst_66 = arith.constant dense<0.000000e+00> : vector<4x8x8xf32>
    %142 = tpu.matmul %141, %119, %cst_66 {dimension_numbers = #tpu.dot_dimension_numbers<[2], [1], [1], [2], [0, 0, 0, 1, 1, 2], [0], [0]>} : vector<4x8x8xbf16>, vector<4x8x8xbf16>, vector<4x8x8xf32> -> vector<4x8x8xf32>
    "tpu.trace_stop"() : () -> ()
    %143 = tpu.transpose %142, [1, 0, 2] : vector<4x8x8xf32> -> vector<8x4x8xf32>
    %144 = vector.shape_cast %143 : vector<8x4x8xf32> to vector<8x32xf32>
    %145 = arith.truncf %144 : vector<8x32xf32> to vector<8x32xbf16>
    %c0_67 = arith.constant 0 : index
    %c0_68 = arith.constant 0 : index
    %c0_69 = arith.constant 0 : index
    %146 = vector.load %arg16[%c0_67, %c0_68, %c0_69] : memref<1x32x32xbf16, #tpu.memory_space<vmem>>, vector<1x32x32xbf16>
    %147 = vector.shape_cast %146 : vector<1x32x32xbf16> to vector<32x32xbf16>
    %cst_70 = arith.constant dense<0.000000e+00> : vector<8x32xf32>
    %148 = tpu.matmul %145, %147, %cst_70 {dimension_numbers = #tpu.dot_dimension_numbers<[1], [0], [0], [1], [0, 0, 1, 1], [], []>} : vector<8x32xbf16>, vector<32x32xbf16>, vector<8x32xf32> -> vector<8x32xf32>
    %c0_71 = arith.constant 0 : index
    %c0_72 = arith.constant 0 : index
    %c0_73 = arith.constant 0 : index
    %149 = vector.load %arg17[%c0_71, %c0_72, %c0_73] : memref<1x1x32xf32, #tpu.memory_space<vmem>>, vector<1x1x32xf32>
    %150 = vector.shape_cast %149 : vector<1x1x32xf32> to vector<1x32xf32>
    %151 = vector.broadcast %150 : vector<1x32xf32> to vector<8x32xf32>
    %152 = arith.addf %148, %151 : vector<8x32xf32>
    %153 = arith.addf %152, %88 : vector<8x32xf32>
    %c0_74 = arith.constant 0 : index
    %c0_75 = arith.constant 0 : index
    %c0_76 = arith.constant 0 : index
    %154 = vector.load %arg18[%c0_74, %c0_75, %c0_76] : memref<1x1x32xf32, #tpu.memory_space<vmem>>, vector<1x1x32xf32>
    %155 = vector.shape_cast %154 : vector<1x1x32xf32> to vector<1x32xf32>
    %c0_77 = arith.constant 0 : index
    %c0_78 = arith.constant 0 : index
    %c0_79 = arith.constant 0 : index
    %156 = vector.load %arg19[%c0_77, %c0_78, %c0_79] : memref<1x1x32xf32, #tpu.memory_space<vmem>>, vector<1x1x32xf32>
    %157 = vector.shape_cast %156 : vector<1x1x32xf32> to vector<1x32xf32>
    %cst_80 = arith.constant dense<0.000000e+00> : vector<8xf32>
    %158 = vector.multi_reduction <add>, %153, %cst_80 [1] : vector<8x32xf32> to vector<8xf32>
    %159 = vector.shape_cast %158 : vector<8xf32> to vector<8x1xf32>
    %cst_81 = arith.constant 3.200000e+01 : f32
    %160 = vector.broadcast %cst_81 : f32 to vector<8x1xf32>
    %161 = arith.divf %159, %160 : vector<8x1xf32>
    %162 = vector.broadcast %161 : vector<8x1xf32> to vector<8x32xf32>
    %163 = arith.subf %153, %162 : vector<8x32xf32>
    %164 = arith.mulf %163, %163 : vector<8x32xf32>
    %cst_82 = arith.constant dense<0.000000e+00> : vector<8xf32>
    %165 = vector.multi_reduction <add>, %164, %cst_82 [1] : vector<8x32xf32> to vector<8xf32>
    %166 = vector.shape_cast %165 : vector<8xf32> to vector<8x1xf32>
    %cst_83 = arith.constant 3.200000e+01 : f32
    %167 = vector.broadcast %cst_83 : f32 to vector<8x1xf32>
    %168 = arith.divf %166, %167 : vector<8x1xf32>
    %cst_84 = arith.constant 1.000000e-10 : f32
    %169 = vector.broadcast %cst_84 : f32 to vector<8x1xf32>
    %170 = arith.maximumf %168, %169 : vector<8x1xf32>
    %cst_85 = arith.constant 1.000000e-10 : f32
    %171 = vector.broadcast %cst_85 : f32 to vector<8x1xf32>
    %172 = arith.addf %170, %171 : vector<8x1xf32>
    %173 = math.rsqrt %172 : vector<8x1xf32>
    %174 = vector.broadcast %161 : vector<8x1xf32> to vector<8x32xf32>
    %175 = arith.subf %153, %174 : vector<8x32xf32>
    %176 = vector.broadcast %173 : vector<8x1xf32> to vector<8x32xf32>
    %177 = arith.mulf %175, %176 : vector<8x32xf32>
    %178 = vector.broadcast %155 : vector<1x32xf32> to vector<8x32xf32>
    %179 = arith.mulf %178, %177 : vector<8x32xf32>
    %180 = vector.broadcast %157 : vector<1x32xf32> to vector<8x32xf32>
    %181 = arith.addf %179, %180 : vector<8x32xf32>
    %182 = arith.truncf %181 : vector<8x32xf32> to vector<8x32xbf16>
    %c0_86 = arith.constant 0 : index
    %c0_87 = arith.constant 0 : index
    %c0_88 = arith.constant 0 : index
    %183 = vector.load %arg20[%c0_86, %c0_87, %c0_88] : memref<1x32x64xbf16, #tpu.memory_space<vmem>>, vector<1x32x64xbf16>
    %184 = vector.shape_cast %183 : vector<1x32x64xbf16> to vector<32x64xbf16>
    %cst_89 = arith.constant dense<0.000000e+00> : vector<8x64xf32>
    %185 = tpu.matmul %182, %184, %cst_89 {dimension_numbers = #tpu.dot_dimension_numbers<[1], [0], [0], [1], [0, 0, 1, 1], [], []>} : vector<8x32xbf16>, vector<32x64xbf16>, vector<8x64xf32> -> vector<8x64xf32>
    %c0_90 = arith.constant 0 : index
    %c0_91 = arith.constant 0 : index
    %c0_92 = arith.constant 0 : index
    %186 = vector.load %arg21[%c0_90, %c0_91, %c0_92] : memref<1x1x64xf32, #tpu.memory_space<vmem>>, vector<1x1x64xf32>
    %187 = vector.shape_cast %186 : vector<1x1x64xf32> to vector<1x64xf32>
    %188 = vector.broadcast %187 : vector<1x64xf32> to vector<8x64xf32>
    %189 = arith.addf %185, %188 : vector<8x64xf32>
    %cst_93 = arith.constant 0.000000e+00 : f32
    %190 = vector.broadcast %cst_93 : f32 to vector<8x64xf32>
    %191 = arith.maximumf %189, %190 : vector<8x64xf32>
    %192 = arith.truncf %191 : vector<8x64xf32> to vector<8x64xbf16>
    %c0_94 = arith.constant 0 : index
    %c0_95 = arith.constant 0 : index
    %c0_96 = arith.constant 0 : index
    %193 = vector.load %arg22[%c0_94, %c0_95, %c0_96] : memref<1x64x32xbf16, #tpu.memory_space<vmem>>, vector<1x64x32xbf16>
    %194 = vector.shape_cast %193 : vector<1x64x32xbf16> to vector<64x32xbf16>
    %cst_97 = arith.constant dense<0.000000e+00> : vector<8x32xf32>
    %195 = tpu.matmul %192, %194, %cst_97 {dimension_numbers = #tpu.dot_dimension_numbers<[1], [0], [0], [1], [0, 0, 1, 1], [], []>} : vector<8x64xbf16>, vector<64x32xbf16>, vector<8x32xf32> -> vector<8x32xf32>
    %c0_98 = arith.constant 0 : index
    %c0_99 = arith.constant 0 : index
    %c0_100 = arith.constant 0 : index
    %196 = vector.load %arg23[%c0_98, %c0_99, %c0_100] : memref<1x1x32xf32, #tpu.memory_space<vmem>>, vector<1x1x32xf32>
    %197 = vector.shape_cast %196 : vector<1x1x32xf32> to vector<1x32xf32>
    %198 = vector.broadcast %197 : vector<1x32xf32> to vector<8x32xf32>
    %199 = arith.addf %195, %198 : vector<8x32xf32>
    %200 = arith.addf %199, %181 : vector<8x32xf32>
    %c0_101 = arith.constant 0 : index
    %c0_102 = arith.constant 0 : index
    %c0_103 = arith.constant 0 : index
    %201 = vector.load %arg24[%c0_101, %c0_102, %c0_103] : memref<1x1x32xf32, #tpu.memory_space<vmem>>, vector<1x1x32xf32>
    %202 = vector.shape_cast %201 : vector<1x1x32xf32> to vector<1x32xf32>
    %c0_104 = arith.constant 0 : index
    %c0_105 = arith.constant 0 : index
    %c0_106 = arith.constant 0 : index
    %203 = vector.load %arg25[%c0_104, %c0_105, %c0_106] : memref<1x1x32xf32, #tpu.memory_space<vmem>>, vector<1x1x32xf32>
    %204 = vector.shape_cast %203 : vector<1x1x32xf32> to vector<1x32xf32>
    %cst_107 = arith.constant dense<0.000000e+00> : vector<8xf32>
    %205 = vector.multi_reduction <add>, %200, %cst_107 [1] : vector<8x32xf32> to vector<8xf32>
    %206 = vector.shape_cast %205 : vector<8xf32> to vector<8x1xf32>
    %cst_108 = arith.constant 3.200000e+01 : f32
    %207 = vector.broadcast %cst_108 : f32 to vector<8x1xf32>
    %208 = arith.divf %206, %207 : vector<8x1xf32>
    %209 = vector.broadcast %208 : vector<8x1xf32> to vector<8x32xf32>
    %210 = arith.subf %200, %209 : vector<8x32xf32>
    %211 = arith.mulf %210, %210 : vector<8x32xf32>
    %cst_109 = arith.constant dense<0.000000e+00> : vector<8xf32>
    %212 = vector.multi_reduction <add>, %211, %cst_109 [1] : vector<8x32xf32> to vector<8xf32>
    %213 = vector.shape_cast %212 : vector<8xf32> to vector<8x1xf32>
    %cst_110 = arith.constant 3.200000e+01 : f32
    %214 = vector.broadcast %cst_110 : f32 to vector<8x1xf32>
    %215 = arith.divf %213, %214 : vector<8x1xf32>
    %cst_111 = arith.constant 1.000000e-10 : f32
    %216 = vector.broadcast %cst_111 : f32 to vector<8x1xf32>
    %217 = arith.maximumf %215, %216 : vector<8x1xf32>
    %cst_112 = arith.constant 1.000000e-10 : f32
    %218 = vector.broadcast %cst_112 : f32 to vector<8x1xf32>
    %219 = arith.addf %217, %218 : vector<8x1xf32>
    %220 = math.rsqrt %219 : vector<8x1xf32>
    %221 = vector.broadcast %208 : vector<8x1xf32> to vector<8x32xf32>
    %222 = arith.subf %200, %221 : vector<8x32xf32>
    %223 = vector.broadcast %220 : vector<8x1xf32> to vector<8x32xf32>
    %224 = arith.mulf %222, %223 : vector<8x32xf32>
    %225 = vector.broadcast %202 : vector<1x32xf32> to vector<8x32xf32>
    %226 = arith.mulf %225, %224 : vector<8x32xf32>
    %227 = vector.broadcast %204 : vector<1x32xf32> to vector<8x32xf32>
    %228 = arith.addf %226, %227 : vector<8x32xf32>
    %c0_113 = arith.constant 0 : index
    %c0_114 = arith.constant 0 : index
    %c0_115 = arith.constant 0 : index
    %229 = vector.load %arg26[%c0_113, %c0_114, %c0_115] : memref<1x8x32xf32, #tpu.memory_space<vmem>>, vector<1x8x32xf32>
    %230 = vector.shape_cast %229 : vector<1x8x32xf32> to vector<8x32xf32>
    %231 = vector.shape_cast %228 : vector<8x32xf32> to vector<1x8x32xf32>
    tpu.vector_store %arg26[%c0_113, %c0_114, %c0_115], %231 {strides = array<i32>} : memref<1x8x32xf32, #tpu.memory_space<vmem>>, vector<1x8x32xf32>,
    return
  }
  func.func @transform_0(%arg0: i32, %arg1: i32) -> (i32, i32, i32) {
    %c0_i32 = arith.constant 0 : i32
    %c0_i32_0 = arith.constant 0 : i32
    %c0_i32_1 = arith.constant 0 : i32
    return %arg0, %c0_i32, %c0_i32_0 : i32, i32, i32
  }
  func.func @transform_1(%arg0: i32, %arg1: i32) -> (i32, i32, i32) {
    %c0_i32 = arith.constant 0 : i32
    %c0_i32_0 = arith.constant 0 : i32
    %c0_i32_1 = arith.constant 0 : i32
    return %arg0, %c0_i32, %c0_i32_0 : i32, i32, i32
  }
  func.func @transform_2(%arg0: i32, %arg1: i32) -> (i32, i32, i32) {
    %c0_i32 = arith.constant 0 : i32
    %c0_i32_0 = arith.constant 0 : i32
    %c0_i32_1 = arith.constant 0 : i32
    return %arg0, %c0_i32, %c0_i32_0 : i32, i32, i32
  }
  func.func @transform_3(%arg0: i32, %arg1: i32) -> (i32, i32, i32) {
    %c0_i32 = arith.constant 0 : i32
    %c0_i32_0 = arith.constant 0 : i32
    %c0_i32_1 = arith.constant 0 : i32
    return %arg0, %c0_i32, %c0_i32_0 : i32, i32, i32
  }
  func.func @transform_4(%arg0: i32, %arg1: i32) -> (i32, i32, i32) {
    %c0_i32 = arith.constant 0 : i32
    %c0_i32_0 = arith.constant 0 : i32
    %c0_i32_1 = arith.constant 0 : i32
    return %arg1, %c0_i32, %c0_i32_0 : i32, i32, i32
  }
  func.func @transform_5(%arg0: i32, %arg1: i32) -> (i32, i32, i32) {
    %c0_i32 = arith.constant 0 : i32
    %c0_i32_0 = arith.constant 0 : i32
    %c0_i32_1 = arith.constant 0 : i32
    return %arg1, %c0_i32, %c0_i32_0 : i32, i32, i32
  }
  func.func @transform_6(%arg0: i32, %arg1: i32) -> (i32, i32, i32) {
    %c0_i32 = arith.constant 0 : i32
    %c0_i32_0 = arith.constant 0 : i32
    %c0_i32_1 = arith.constant 0 : i32
    return %arg1, %c0_i32, %c0_i32_0 : i32, i32, i32
  }
  func.func @transform_7(%arg0: i32, %arg1: i32) -> (i32, i32, i32) {
    %c0_i32 = arith.constant 0 : i32
    %c0_i32_0 = arith.constant 0 : i32
    %c0_i32_1 = arith.constant 0 : i32
    return %arg1, %c0_i32, %c0_i32_0 : i32, i32, i32
  }
  func.func @transform_8(%arg0: i32, %arg1: i32) -> (i32, i32, i32) {
    %c0_i32 = arith.constant 0 : i32
    %c0_i32_0 = arith.constant 0 : i32
    %c0_i32_1 = arith.constant 0 : i32
    return %arg1, %c0_i32, %c0_i32_0 : i32, i32, i32
  }
  func.func @transform_9(%arg0: i32, %arg1: i32) -> (i32, i32, i32) {
    %c0_i32 = arith.constant 0 : i32
    %c0_i32_0 = arith.constant 0 : i32
    %c0_i32_1 = arith.constant 0 : i32
    return %arg1, %c0_i32, %c0_i32_0 : i32, i32, i32
  }
  func.func @transform_10(%arg0: i32, %arg1: i32) -> (i32, i32, i32) {
    %c0_i32 = arith.constant 0 : i32
    %c0_i32_0 = arith.constant 0 : i32
    %c0_i32_1 = arith.constant 0 : i32
    return %arg1, %c0_i32, %c0_i32_0 : i32, i32, i32
  }
  func.func @transform_11(%arg0: i32, %arg1: i32) -> (i32, i32, i32) {
    %c0_i32 = arith.constant 0 : i32
    %c0_i32_0 = arith.constant 0 : i32
    %c0_i32_1 = arith.constant 0 : i32
    return %arg1, %c0_i32, %c0_i32_0 : i32, i32, i32
  }
  func.func @transform_12(%arg0: i32, %arg1: i32) -> (i32, i32, i32) {
    %c0_i32 = arith.constant 0 : i32
    %c0_i32_0 = arith.constant 0 : i32
    %c0_i32_1 = arith.constant 0 : i32
    return %arg1, %c0_i32, %c0_i32_0 : i32, i32, i32
  }
  func.func @transform_13(%arg0: i32, %arg1: i32) -> (i32, i32, i32) {
    %c0_i32 = arith.constant 0 : i32
    %c0_i32_0 = arith.constant 0 : i32
    %c0_i32_1 = arith.constant 0 : i32
    return %arg1, %c0_i32, %c0_i32_0 : i32, i32, i32
  }
  func.func @transform_14(%arg0: i32, %arg1: i32) -> (i32, i32, i32) {
    %c0_i32 = arith.constant 0 : i32
    %c0_i32_0 = arith.constant 0 : i32
    %c0_i32_1 = arith.constant 0 : i32
    return %arg1, %c0_i32, %c0_i32_0 : i32, i32, i32
  }
  func.func @transform_15(%arg0: i32, %arg1: i32) -> (i32, i32, i32) {
    %c0_i32 = arith.constant 0 : i32
    %c0_i32_0 = arith.constant 0 : i32
    %c0_i32_1 = arith.constant 0 : i32
    return %arg1, %c0_i32, %c0_i32_0 : i32, i32, i32
  }
  func.func @transform_16(%arg0: i32, %arg1: i32) -> (i32, i32, i32) {
    %c0_i32 = arith.constant 0 : i32
    %c0_i32_0 = arith.constant 0 : i32
    %c0_i32_1 = arith.constant 0 : i32
    return %arg1, %c0_i32, %c0_i32_0 : i32, i32, i32
  }
  func.func @transform_17(%arg0: i32, %arg1: i32) -> (i32, i32, i32) {
    %c0_i32 = arith.constant 0 : i32
    %c0_i32_0 = arith.constant 0 : i32
    %c0_i32_1 = arith.constant 0 : i32
    return %arg1, %c0_i32, %c0_i32_0 : i32, i32, i32
  }
  func.func @transform_18(%arg0: i32, %arg1: i32) -> (i32, i32, i32) {
    %c0_i32 = arith.constant 0 : i32
    %c0_i32_0 = arith.constant 0 : i32
    %c0_i32_1 = arith.constant 0 : i32
    return %arg1, %c0_i32, %c0_i32_0 : i32, i32, i32
  }
  func.func @transform_19(%arg0: i32, %arg1: i32) -> (i32, i32, i32) {
    %c0_i32 = arith.constant 0 : i32
    %c0_i32_0 = arith.constant 0 : i32
    %c0_i32_1 = arith.constant 0 : i32
    return %arg1, %c0_i32, %c0_i32_0 : i32, i32, i32
  }
  func.func @transform_20(%arg0: i32, %arg1: i32) -> (i32, i32, i32) {
    %c0_i32 = arith.constant 0 : i32
    %c0_i32_0 = arith.constant 0 : i32
    %c0_i32_1 = arith.constant 0 : i32
    return %arg1, %c0_i32, %c0_i32_0 : i32, i32, i32
  }
  func.func @transform_21(%arg0: i32, %arg1: i32) -> (i32, i32, i32) {
    %c0_i32 = arith.constant 0 : i32
    %c0_i32_0 = arith.constant 0 : i32
    %c0_i32_1 = arith.constant 0 : i32
    return %arg1, %c0_i32, %c0_i32_0 : i32, i32, i32
  }
  func.func @transform_22(%arg0: i32, %arg1: i32) -> (i32, i32, i32) {
    %c0_i32 = arith.constant 0 : i32
    %c0_i32_0 = arith.constant 0 : i32
    %c0_i32_1 = arith.constant 0 : i32
    return %arg1, %c0_i32, %c0_i32_0 : i32, i32, i32
  }
  func.func @transform_23(%arg0: i32, %arg1: i32) -> (i32, i32, i32) {
    %c0_i32 = arith.constant 0 : i32
    %c0_i32_0 = arith.constant 0 : i32
    %c0_i32_1 = arith.constant 0 : i32
    return %arg1, %c0_i32, %c0_i32_0 : i32, i32, i32
  }
  func.func @transform_24(%arg0: i32, %arg1: i32) -> (i32, i32, i32) {
    %c0_i32 = arith.constant 0 : i32
    %c0_i32_0 = arith.constant 0 : i32
    %c0_i32_1 = arith.constant 0 : i32
    return %arg0, %c0_i32, %c0_i32_0 : i32, i32, i32
  }
}

</mosaic_0001>

<llo_original>
// kernel: decoder_forward.3
$region0: #{decoder_forward.3}
  #allocation0 [shape = 'u32[]', space=smem, size = 0x4, offset = 0x4, fixed_abs, tag = 'smem constant byte address 0x4 - core index']
  #allocation1 [shape = 'u32[144,128]{1,0:T(1,128)}', space=vmem, size = 0x12000, scoped, tag = 'internal scratch']
  %s0 = inlined_call_operand.vmem [shape: f32[16,32], index: 0, kind: input, shape index: {}]
  %s1 = inlined_call_operand.vmem [shape: f32[32,128], index: 1, kind: input, shape index: {}]
  %s2 = inlined_call_operand.vmem [shape: f32[1,128], index: 2, kind: input, shape index: {}]
  %s3 = inlined_call_operand.vmem [shape: f32[16,128], index: 3, kind: output, shape index: {}]
  %s4 = sld [smem:[#allocation0]]
  $region22: #{decoder_forward.3} parent=0
    _
  %s6 = ssub.s32 1, %s4
  %s7 = scalar_select 0, %s6, %s4
  // Predicated region
  $region2: #{decoder_forward.3} parent=0 // pred_check
    _
  $region3: #{decoder_forward.3} parent=0 // pred_check_branch
    %9 = sbr.rel (0) target = $region5
  $region4: #{decoder_forward.3} parent=0 // pred_region
    _
  $region5: #{decoder_forward.3} parent=0 // pred_fallthru
    _
  // Predicated region
  $region6: #{decoder_forward.3} parent=0 // pred_check
    _
  $region7: #{decoder_forward.3} parent=0 // pred_check_branch
    %11 = sbr.rel (0) target = $region9
  $region8: #{decoder_forward.3} parent=0 // pred_region
    _
  $region9: #{decoder_forward.3} parent=0 // pred_fallthru
    _
  // Predicated region
  $region10: #{decoder_forward.3} parent=0 // pred_check
    _
  $region11: #{decoder_forward.3} parent=0 // pred_check_branch
    %13 = sbr.rel (0) target = $region13
  $region12: #{decoder_forward.3} parent=0 // pred_region
    _
  $region13: #{decoder_forward.3} parent=0 // pred_fallthru
    _
  %v14 = vld [vmem:[%s0] sm:$0xff]
  %v15 = vld [vmem:[%s0 + $0x8] sm:$0xff]
  %v16 = vld [vmem:[%s1] sm:$0xff]
  %v17 = vld [vmem:[%s1 + $0x8] sm:$0xff]
  %v18 = vld [vmem:[%s1 + $0x10] sm:$0xff]
  %v19 = vld [vmem:[%s1 + $0x18] sm:$0xff]
  %v20 = vld [vmem:[%s2] sm:$0x1]
  %v22 = vlaneseq
  %v23 = vshrl.u32 %v22, 7
  %v24 = vsub.s32 0, %v23
  %v25 = vrot.slane %v20, %v24
  %vm27 = vcmask 261120
  %v29 = vsel %vm27, %v14, 0
  %v32 = vsel %vm27, %v15, 0
  %34 = vmatprep.subr.mxu0 0.0
  %35 = vmatpush1.msra.mxu0 %v16
  %36 = vmatprep.subr.mxu0 0.0
  %37 = vmatpush1.msra.mxu0 %v17
  %38 = vmatprep.subr.mxu0 0.0
  %39 = vmatpush1.msra.mxu0 %v18
  %40 = vmatprep.subr.mxu0 0.0
  %41 = vmatpush1.msra.mxu0 %v19
  %42 = vmatprep.subr.mxu0 0.0
  %43 = vmatpush1.msra.mxu0 0.0
  %44 = vmatprep.subr.mxu0 0.0
  %45 = vmatpush1.msra.mxu0 0.0
  %46 = vmatprep.subr.mxu0 0.0
  %47 = vmatpush1.msra.mxu0 0.0
  %48 = vmatprep.subr.mxu0 0.0
  %49 = vmatpush1.msra.mxu0 0.0
  %50 = vmatprep.subr.mxu0 0.0
  %51 = vmatpush1.msra.mxu0 0.0
  %52 = vmatprep.subr.mxu0 0.0
  %53 = vmatpush1.msra.mxu0 0.0
  %54 = vmatprep.subr.mxu0 0.0
  %55 = vmatpush1.msra.mxu0 0.0
  %56 = vmatprep.subr.mxu0 0.0
  %57 = vmatpush1.msra.mxu0 0.0
  %58 = vmatprep.subr.mxu0 0.0
  %59 = vmatpush1.msra.mxu0 0.0
  %60 = vmatprep.subr.mxu0 0.0
  %61 = vmatpush1.msra.mxu0 0.0
  %62 = vmatprep.subr.mxu0 0.0
  %63 = vmatpush1.msra.mxu0 0.0
  %64 = vmatprep.subr.mxu0 0.0
  %65 = vmatpush1.msra.mxu0 0.0
  %66 = vmatprep.subr.mxu0 0.0
  %67 = vmatpush1.msra.mxu0 0.0
  %68 = vmatprep.subr.mxu0 0.0
  %69 = vmatpush1.msra.mxu0 0.0
  %70 = vmatprep.subr.mxu0 0.0
  %71 = vmatpush1.msra.mxu0 0.0
  %72 = vmatprep.subr.mxu0 0.0
  %73 = vmatpush1.msra.mxu0 0.0
  %74 = vmatprep.subr.mxu0 0.0
  %75 = vmatpush1.msra.mxu0 0.0
  %76 = vmatprep.subr.mxu0 0.0
  %77 = vmatpush1.msra.mxu0 0.0
  %78 = vmatprep.subr.mxu0 0.0
  %79 = vmatpush1.msra.mxu0 0.0
  %80 = vmatprep.subr.mxu0 0.0
  %81 = vmatpush1.msra.mxu0 0.0
  %82 = vmatprep.subr.mxu0 0.0
  %83 = vmatpush1.msra.mxu0 0.0
  %84 = vmatprep.subr.mxu0 0.0
  %85 = vmatpush1.msra.mxu0 0.0
  %86 = vmatprep.subr.mxu0 0.0
  %87 = vmatpush1.msra.mxu0 0.0
  %88 = vmatprep.subr.mxu0 0.0
  %89 = vmatpush1.msra.mxu0 0.0
  %90 = vmatprep.subr.mxu0 0.0
  %91 = vmatpush1.msra.mxu0 0.0
  %92 = vmatprep.subr.mxu0 0.0
  %93 = vmatpush1.msra.mxu0 0.0
  %94 = vmatprep.subr.mxu0 0.0
  %95 = vmatpush1.msra.mxu0 0.0
  %96 = vmatprep.subr.mxu0 0.0
  %97 = vmatpush1.msra.mxu0 0.0
  %98 = vmatprep.mubr.f32.mxu0 0.0
  %99 = vmatmul.mubr.f32.gmra.mrb[0].mxu0 %v29
  %v100 = vpop.f32.mrb[0].mxu0
  %v101 = vadd.f32 %v25, %v100
  %v102 = vpop.f32.mrb[0].mxu0
  %103 = vmatprep.mubr.f32.mxu0 0.0
  %104 = vmatmul.mubr.f32.gmra.mrb[0].mxu0 %v32
  %v105 = vpop.f32.mrb[0].mxu0
  %v106 = vadd.f32 %v25, %v105
  %v107 = vpop.f32.mrb[0].mxu0
  %108 = vdwg.mxu0
  %109 = vst [vmem:[%s3] sm:$0xff] %v101
  %110 = vst [vmem:[%s3 + $0x8] sm:$0xff] %v106
  // Predicated region
  $region14: #{decoder_forward.3} parent=0 // pred_check
    _
  $region15: #{decoder_forward.3} parent=0 // pred_check_branch
    %112 = sbr.rel (0) target = $region17
  $region16: #{decoder_forward.3} parent=0 // pred_region
    _
  $region17: #{decoder_forward.3} parent=0 // pred_fallthru
    _
  // Predicated region
  $region18: #{decoder_forward.3} parent=0 // pred_check
    _
  $region19: #{decoder_forward.3} parent=0 // pred_check_branch
    %114 = sbr.rel (0) target = $region21
  $region20: #{decoder_forward.3} parent=0 // pred_region
    _
  $region21: #{decoder_forward.3} parent=0 // pred_fallthru
    _

// kernel: decoder_forward.2
$region0: #{decoder_forward.2}
  #allocation0 [shape = 'u32[]', space=smem, size = 0x4, offset = 0x4, fixed_abs, tag = 'smem constant byte address 0x4 - core index']
  #allocation1 [shape = 'u32[144,128]{1,0:T(1,128)}', space=vmem, size = 0x12000, scoped, tag = 'internal scratch']
  %s0 = inlined_call_operand.vmem [shape: f32[2,8,32], index: 0, kind: input, shape index: {}]
  %s1 = inlined_call_operand.vmem [shape: f32[2,8,8], index: 1, kind: input, shape index: {}]
  %s2 = inlined_call_operand.vmem [shape: f32[2,8,32], index: 2, kind: input, shape index: {}]
  %s3 = inlined_call_operand.vmem [shape: f32[2,8,8], index: 3, kind: input, shape index: {}]
  %s4 = inlined_call_operand.vmem [shape: bf16[2,32,96], index: 4, kind: input, shape index: {}]
  %s5 = inlined_call_operand.vmem [shape: f32[2,1,96], index: 5, kind: input, shape index: {}]
  %s6 = inlined_call_operand.vmem [shape: bf16[2,32,32], index: 6, kind: input, shape index: {}]
  %s7 = inlined_call_operand.vmem [shape: f32[2,1,32], index: 7, kind: input, shape index: {}]
  %s8 = inlined_call_operand.vmem [shape: f32[2,1,32], index: 8, kind: input, shape index: {}]
  %s9 = inlined_call_operand.vmem [shape: f32[2,1,32], index: 9, kind: input, shape index: {}]
  %s10 = inlined_call_operand.vmem [shape: bf16[2,32,32], index: 10, kind: input, shape index: {}]
  %s11 = inlined_call_operand.vmem [shape: f32[2,1,32], index: 11, kind: input, shape index: {}]
  %s12 = inlined_call_operand.vmem [shape: bf16[2,32,64], index: 12, kind: input, shape index: {}]
  %s13 = inlined_call_operand.vmem [shape: f32[2,1,64], index: 13, kind: input, shape index: {}]
  %s14 = inlined_call_operand.vmem [shape: bf16[2,32,32], index: 14, kind: input, shape index: {}]
  %s15 = inlined_call_operand.vmem [shape: f32[2,1,32], index: 15, kind: input, shape index: {}]
  %s16 = inlined_call_operand.vmem [shape: f32[2,1,32], index: 16, kind: input, shape index: {}]
  %s17 = inlined_call_operand.vmem [shape: f32[2,1,32], index: 17, kind: input, shape index: {}]
  %s18 = inlined_call_operand.vmem [shape: bf16[2,32,64], index: 18, kind: input, shape index: {}]
  %s19 = inlined_call_operand.vmem [shape: f32[2,1,64], index: 19, kind: input, shape index: {}]
  %s20 = inlined_call_operand.vmem [shape: bf16[2,64,32], index: 20, kind: input, shape index: {}]
  %s21 = inlined_call_operand.vmem [shape: f32[2,1,32], index: 21, kind: input, shape index: {}]
  %s22 = inlined_call_operand.vmem [shape: f32[2,1,32], index: 22, kind: input, shape index: {}]
  %s23 = inlined_call_operand.vmem [shape: f32[2,1,32], index: 23, kind: input, shape index: {}]
  %s24 = inlined_call_operand.vmem [shape: f32[2,8,32], index: 24, kind: output, shape index: {}]
  %s25 = sld [smem:[#allocation0]]
  $region133: #{decoder_forward.2} parent=0
    _
  %s27 = ssub.s32 1, %s25
  %s28 = scalar_select 0, %s27, %s25
  loop: start=0, step=1, limit=6
  $region2: #{decoder_forward.2} parent=0 // loop_pre_header
    _
  $region3: #{decoder_forward.2} parent=0 // loop_header
    %s30 = sphi 0, %s34
    %p31 = scmp.ge.s32.totalorder %s30, 6
    %s37 = sphi 0, %s49
    %s38 = sphi 0, %s45
    %s39 = sphi 0, %s37
    %s40 = sphi 0, %s38
    %s41 = sphi 0, %s39
    %s42 = sphi 0, %s40
    %s52 = sphi 0, %s54
    %s55 = sphi 0, %s52
    %s56 = sphi 0, %s55
    %s72 = sphi 0, %s56
    %s78 = sphi 0, %s80
    %s81 = sphi 0, %s78
    %s82 = sphi 0, %s81
    %s98 = sphi 0, %s82
    %s104 = sphi 0, %s106
    %s107 = sphi 0, %s104
    %s108 = sphi 0, %s107
    %s124 = sphi 0, %s108
    %s130 = sphi 0, %s132
    %s133 = sphi 0, %s130
    %s134 = sphi 0, %s133
    %s150 = sphi 0, %s134
    %s156 = sphi 0, %s158
    %s159 = sphi 0, %s156
    %s160 = sphi 0, %s159
    %s176 = sphi 0, %s160
    %s182 = sphi 0, %s184
    %s185 = sphi 0, %s182
    %s186 = sphi 0, %s185
    %s202 = sphi 0, %s186
    %s208 = sphi 0, %s210
    %s211 = sphi 0, %s208
    %s212 = sphi 0, %s211
    %s228 = sphi 0, %s212
    %s234 = sphi 0, %s236
    %s237 = sphi 0, %s234
    %s238 = sphi 0, %s237
    %s254 = sphi 0, %s238
    %s260 = sphi 0, %s262
    %s263 = sphi 0, %s260
    %s264 = sphi 0, %s263
    %s280 = sphi 0, %s264
    %s286 = sphi 0, %s288
    %s289 = sphi 0, %s286
    %s290 = sphi 0, %s289
    %s306 = sphi 0, %s290
    %s312 = sphi 0, %s314
    %s315 = sphi 0, %s312
    %s316 = sphi 0, %s315
    %s332 = sphi 0, %s316
    %s338 = sphi 0, %s340
    %s341 = sphi 0, %s338
    %s342 = sphi 0, %s341
    %s358 = sphi 0, %s342
    %s364 = sphi 0, %s366
    %s367 = sphi 0, %s364
    %s368 = sphi 0, %s367
    %s384 = sphi 0, %s368
    %s390 = sphi 0, %s392
    %s393 = sphi 0, %s390
    %s394 = sphi 0, %s393
    %s410 = sphi 0, %s394
    %s416 = sphi 0, %s418
    %s419 = sphi 0, %s416
    %s420 = sphi 0, %s419
    %s436 = sphi 0, %s420
    %s442 = sphi 0, %s444
    %s445 = sphi 0, %s442
    %s446 = sphi 0, %s445
    %s462 = sphi 0, %s446
    %s468 = sphi 0, %s470
    %s471 = sphi 0, %s468
    %s472 = sphi 0, %s471
    %s488 = sphi 0, %s472
    %s494 = sphi 0, %s496
    %s497 = sphi 0, %s494
    %s498 = sphi 0, %s497
    %s514 = sphi 0, %s498
    %s520 = sphi 0, %s522
    %s523 = sphi 0, %s520
    %s524 = sphi 0, %s523
    %s540 = sphi 0, %s524
    %s546 = sphi 0, %s548
    %s549 = sphi 0, %s546
    %s550 = sphi 0, %s549
    %s566 = sphi 0, %s550
    %s572 = sphi 0, %s574
    %s575 = sphi 0, %s572
    %s576 = sphi 0, %s575
    %s592 = sphi 0, %s576
    %s598 = sphi 0, %s600
    %s601 = sphi 0, %s598
    %s602 = sphi 0, %s601
    %s618 = sphi 0, %s602
    %s624 = sphi 0, %s626
    %s627 = sphi 0, %s624
    %s628 = sphi 0, %s627
    %s644 = sphi 0, %s628
    %s650 = sphi 0, %s652
    %s653 = sphi 0, %s650
    %s654 = sphi 0, %s653
    %s670 = sphi 0, %s654
    %s676 = sphi 0, %s678
    %s679 = sphi 0, %s676
    %s680 = sphi 0, %s679
    %s696 = sphi 0, %s680
  $region4: #{decoder_forward.2} parent=0 // loop_header_branch
    %33 = sbr.rel (%p31) target = $region8
  $region5: #{decoder_forward.2} parent=0 // loop_body
    %s35 = ssub.s32 %s30, 1
    %s36 = ssub.s32 %s30, 2
    %s43 = sadd.s32 1, %s38
    %p44 = scmp.ge.s32.totalorder %s43, 2
    %s45 = scalar_select %p44, 0, %s43
    %s46 = sadd.s32 1, %s37
    %s47 = scalar_select %p44, %s46, %s37
    %p48 = scmp.ge.s32.totalorder %s47, 2
    %s49 = scalar_select %p48, 0, %s47
    %s50 = ssub.s32 %s37, %s49
    %p51 = scmp.eq.s32.totalorder %s50, 0
    %s53 = sadd.s32 %s52, 1
    %s54 = scalar_select %p51, %s52, %s53
    %p57 = pneg %p51
    %p58 = scmp.eq.s32.totalorder %s30, 3
    %p59 = por %p57, %p58
    %p60 = scmp.ne.s32.totalorder %s52, %s55
    %p61 = scmp.eq.s32.totalorder %s30, 0
    %p62 = por %p60, %p61
    %p63 = scmp.ne.s32.totalorder %s52, %s55
    %p64 = scmp.eq.s32.totalorder %s35, 3
    %p65 = por %p63, %p64
    %p66 = scmp.ne.s32.totalorder %s55, %s56
    %p67 = scmp.eq.s32.totalorder %s35, 0
    %p68 = por %p66, %p67
    %p69 = scmp.ne.s32.totalorder %s55, %s56
    %p70 = scmp.eq.s32.totalorder %s36, 3
    %p71 = por %p69, %p70
    %p73 = scmp.ne.s32.totalorder %s56, %s72
    %p74 = scmp.eq.s32.totalorder %s36, 0
    %p75 = por %p73, %p74
    %s76 = ssub.s32 %s37, %s49
    %p77 = scmp.eq.s32.totalorder %s76, 0
    %s79 = sadd.s32 %s78, 1
    %s80 = scalar_select %p77, %s78, %s79
    %p83 = pneg %p77
    %p84 = scmp.eq.s32.totalorder %s30, 3
    %p85 = por %p83, %p84
    %p86 = scmp.ne.s32.totalorder %s78, %s81
    %p87 = scmp.eq.s32.totalorder %s30, 0
    %p88 = por %p86, %p87
    %p89 = scmp.ne.s32.totalorder %s78, %s81
    %p90 = scmp.eq.s32.totalorder %s35, 3
    %p91 = por %p89, %p90
    %p92 = scmp.ne.s32.totalorder %s81, %s82
    %p93 = scmp.eq.s32.totalorder %s35, 0
    %p94 = por %p92, %p93
    %p95 = scmp.ne.s32.totalorder %s81, %s82
    %p96 = scmp.eq.s32.totalorder %s36, 3
    %p97 = por %p95, %p96
    %p99 = scmp.ne.s32.totalorder %s82, %s98
    %p100 = scmp.eq.s32.totalorder %s36, 0
    %p101 = por %p99, %p100
    %s102 = ssub.s32 %s37, %s49
    %p103 = scmp.eq.s32.totalorder %s102, 0
    %s105 = sadd.s32 %s104, 1
    %s106 = scalar_select %p103, %s104, %s105
    %p109 = pneg %p103
    %p110 = scmp.eq.s32.totalorder %s30, 3
    %p111 = por %p109, %p110
    %p112 = scmp.ne.s32.totalorder %s104, %s107
    %p113 = scmp.eq.s32.totalorder %s30, 0
    %p114 = por %p112, %p113
    %p115 = scmp.ne.s32.totalorder %s104, %s107
    %p116 = scmp.eq.s32.totalorder %s35, 3
    %p117 = por %p115, %p116
    %p118 = scmp.ne.s32.totalorder %s107, %s108
    %p119 = scmp.eq.s32.totalorder %s35, 0
    %p120 = por %p118, %p119
    %p121 = scmp.ne.s32.totalorder %s107, %s108
    %p122 = scmp.eq.s32.totalorder %s36, 3
    %p123 = por %p121, %p122
    %p125 = scmp.ne.s32.totalorder %s108, %s124
    %p126 = scmp.eq.s32.totalorder %s36, 0
    %p127 = por %p125, %p126
    %s128 = ssub.s32 %s37, %s49
    %p129 = scmp.eq.s32.totalorder %s128, 0
    %s131 = sadd.s32 %s130, 1
    %s132 = scalar_select %p129, %s130, %s131
    %p135 = pneg %p129
    %p136 = scmp.eq.s32.totalorder %s30, 3
    %p137 = por %p135, %p136
    %p138 = scmp.ne.s32.totalorder %s130, %s133
    %p139 = scmp.eq.s32.totalorder %s30, 0
    %p140 = por %p138, %p139
    %p141 = scmp.ne.s32.totalorder %s130, %s133
    %p142 = scmp.eq.s32.totalorder %s35, 3
    %p143 = por %p141, %p142
    %p144 = scmp.ne.s32.totalorder %s133, %s134
    %p145 = scmp.eq.s32.totalorder %s35, 0
    %p146 = por %p144, %p145
    %p147 = scmp.ne.s32.totalorder %s133, %s134
    %p148 = scmp.eq.s32.totalorder %s36, 3
    %p149 = por %p147, %p148
    %p151 = scmp.ne.s32.totalorder %s134, %s150
    %p152 = scmp.eq.s32.totalorder %s36, 0
    %p153 = por %p151, %p152
    %s154 = ssub.s32 %s38, %s45
    %p155 = scmp.eq.s32.totalorder %s154, 0
    %s157 = sadd.s32 %s156, 1
    %s158 = scalar_select %p155, %s156, %s157
    %p161 = pneg %p155
    %p162 = scmp.eq.s32.totalorder %s30, 3
    %p163 = por %p161, %p162
    %p164 = scmp.ne.s32.totalorder %s156, %s159
    %p165 = scmp.eq.s32.totalorder %s30, 0
    %p166 = por %p164, %p165
    %p167 = scmp.ne.s32.totalorder %s156, %s159
    %p168 = scmp.eq.s32.totalorder %s35, 3
    %p169 = por %p167, %p168
    %p170 = scmp.ne.s32.totalorder %s159, %s160
    %p171 = scmp.eq.s32.totalorder %s35, 0
    %p172 = por %p170, %p171
    %p173 = scmp.ne.s32.totalorder %s159, %s160
    %p174 = scmp.eq.s32.totalorder %s36, 3
    %p175 = por %p173, %p174
    %p177 = scmp.ne.s32.totalorder %s160, %s176
    %p178 = scmp.eq.s32.totalorder %s36, 0
    %p179 = por %p177, %p178
    %s180 = ssub.s32 %s38, %s45
    %p181 = scmp.eq.s32.totalorder %s180, 0
    %s183 = sadd.s32 %s182, 1
    %s184 = scalar_select %p181, %s182, %s183
    %p187 = pneg %p181
    %p188 = scmp.eq.s32.totalorder %s30, 3
    %p189 = por %p187, %p188
    %p190 = scmp.ne.s32.totalorder %s182, %s185
    %p191 = scmp.eq.s32.totalorder %s30, 0
    %p192 = por %p190, %p191
    %p193 = scmp.ne.s32.totalorder %s182, %s185
    %p194 = scmp.eq.s32.totalorder %s35, 3
    %p195 = por %p193, %p194
    %p196 = scmp.ne.s32.totalorder %s185, %s186
    %p197 = scmp.eq.s32.totalorder %s35, 0
    %p198 = por %p196, %p197
    %p199 = scmp.ne.s32.totalorder %s185, %s186
    %p200 = scmp.eq.s32.totalorder %s36, 3
    %p201 = por %p199, %p200
    %p203 = scmp.ne.s32.totalorder %s186, %s202
    %p204 = scmp.eq.s32.totalorder %s36, 0
    %p205 = por %p203, %p204
    %s206 = ssub.s32 %s38, %s45
    %p207 = scmp.eq.s32.totalorder %s206, 0
    %s209 = sadd.s32 %s208, 1
    %s210 = scalar_select %p207, %s208, %s209
    %p213 = pneg %p207
    %p214 = scmp.eq.s32.totalorder %s30, 3
    %p215 = por %p213, %p214
    %p216 = scmp.ne.s32.totalorder %s208, %s211
    %p217 = scmp.eq.s32.totalorder %s30, 0
    %p218 = por %p216, %p217
    %p219 = scmp.ne.s32.totalorder %s208, %s211
    %p220 = scmp.eq.s32.totalorder %s35, 3
    %p221 = por %p219, %p220
    %p222 = scmp.ne.s32.totalorder %s211, %s212
    %p223 = scmp.eq.s32.totalorder %s35, 0
    %p224 = por %p222, %p223
    %p225 = scmp.ne.s32.totalorder %s211, %s212
    %p226 = scmp.eq.s32.totalorder %s36, 3
    %p227 = por %p225, %p226
    %p229 = scmp.ne.s32.totalorder %s212, %s228
    %p230 = scmp.eq.s32.totalorder %s36, 0
    %p231 = por %p229, %p230
    %s232 = ssub.s32 %s38, %s45
    %p233 = scmp.eq.s32.totalorder %s232, 0
    %s235 = sadd.s32 %s234, 1
    %s236 = scalar_select %p233, %s234, %s235
    %p239 = pneg %p233
    %p240 = scmp.eq.s32.totalorder %s30, 3
    %p241 = por %p239, %p240
    %p242 = scmp.ne.s32.totalorder %s234, %s237
    %p243 = scmp.eq.s32.totalorder %s30, 0
    %p244 = por %p242, %p243
    %p245 = scmp.ne.s32.totalorder %s234, %s237
    %p246 = scmp.eq.s32.totalorder %s35, 3
    %p247 = por %p245, %p246
    %p248 = scmp.ne.s32.totalorder %s237, %s238
    %p249 = scmp.eq.s32.totalorder %s35, 0
    %p250 = por %p248, %p249
    %p251 = scmp.ne.s32.totalorder %s237, %s238
    %p252 = scmp.eq.s32.totalorder %s36, 3
    %p253 = por %p251, %p252
    %p255 = scmp.ne.s32.totalorder %s238, %s254
    %p256 = scmp.eq.s32.totalorder %s36, 0
    %p257 = por %p255, %p256
    %s258 = ssub.s32 %s38, %s45
    %p259 = scmp.eq.s32.totalorder %s258, 0
    %s261 = sadd.s32 %s260, 1
    %s262 = scalar_select %p259, %s260, %s261
    %p265 = pneg %p259
    %p266 = scmp.eq.s32.totalorder %s30, 3
    %p267 = por %p265, %p266
    %p268 = scmp.ne.s32.totalorder %s260, %s263
    %p269 = scmp.eq.s32.totalorder %s30, 0
    %p270 = por %p268, %p269
    %p271 = scmp.ne.s32.totalorder %s260, %s263
    %p272 = scmp.eq.s32.totalorder %s35, 3
    %p273 = por %p271, %p272
    %p274 = scmp.ne.s32.totalorder %s263, %s264
    %p275 = scmp.eq.s32.totalorder %s35, 0
    %p276 = por %p274, %p275
    %p277 = scmp.ne.s32.totalorder %s263, %s264
    %p278 = scmp.eq.s32.totalorder %s36, 3
    %p279 = por %p277, %p278
    %p281 = scmp.ne.s32.totalorder %s264, %s280
    %p282 = scmp.eq.s32.totalorder %s36, 0
    %p283 = por %p281, %p282
    %s284 = ssub.s32 %s38, %s45
    %p285 = scmp.eq.s32.totalorder %s284, 0
    %s287 = sadd.s32 %s286, 1
    %s288 = scalar_select %p285, %s286, %s287
    %p291 = pneg %p285
    %p292 = scmp.eq.s32.totalorder %s30, 3
    %p293 = por %p291, %p292
    %p294 = scmp.ne.s32.totalorder %s286, %s289
    %p295 = scmp.eq.s32.totalorder %s30, 0
    %p296 = por %p294, %p295
    %p297 = scmp.ne.s32.totalorder %s286, %s289
    %p298 = scmp.eq.s32.totalorder %s35, 3
    %p299 = por %p297, %p298
    %p300 = scmp.ne.s32.totalorder %s289, %s290
    %p301 = scmp.eq.s32.totalorder %s35, 0
    %p302 = por %p300, %p301
    %p303 = scmp.ne.s32.totalorder %s289, %s290
    %p304 = scmp.eq.s32.totalorder %s36, 3
    %p305 = por %p303, %p304
    %p307 = scmp.ne.s32.totalorder %s290, %s306
    %p308 = scmp.eq.s32.totalorder %s36, 0
    %p309 = por %p307, %p308
    %s310 = ssub.s32 %s38, %s45
    %p311 = scmp.eq.s32.totalorder %s310, 0
    %s313 = sadd.s32 %s312, 1
    %s314 = scalar_select %p311, %s312, %s313
    %p317 = pneg %p311
    %p318 = scmp.eq.s32.totalorder %s30, 3
    %p319 = por %p317, %p318
    %p320 = scmp.ne.s32.totalorder %s312, %s315
    %p321 = scmp.eq.s32.totalorder %s30, 0
    %p322 = por %p320, %p321
    %p323 = scmp.ne.s32.totalorder %s312, %s315
    %p324 = scmp.eq.s32.totalorder %s35, 3
    %p325 = por %p323, %p324
    %p326 = scmp.ne.s32.totalorder %s315, %s316
    %p327 = scmp.eq.s32.totalorder %s35, 0
    %p328 = por %p326, %p327
    %p329 = scmp.ne.s32.totalorder %s315, %s316
    %p330 = scmp.eq.s32.totalorder %s36, 3
    %p331 = por %p329, %p330
    %p333 = scmp.ne.s32.totalorder %s316, %s332
    %p334 = scmp.eq.s32.totalorder %s36, 0
    %p335 = por %p333, %p334
    %s336 = ssub.s32 %s38, %s45
    %p337 = scmp.eq.s32.totalorder %s336, 0
    %s339 = sadd.s32 %s338, 1
    %s340 = scalar_select %p337, %s338, %s339
    %p343 = pneg %p337
    %p344 = scmp.eq.s32.totalorder %s30, 3
    %p345 = por %p343, %p344
    %p346 = scmp.ne.s32.totalorder %s338, %s341
    %p347 = scmp.eq.s32.totalorder %s30, 0
    %p348 = por %p346, %p347
    %p349 = scmp.ne.s32.totalorder %s338, %s341
    %p350 = scmp.eq.s32.totalorder %s35, 3
    %p351 = por %p349, %p350
    %p352 = scmp.ne.s32.totalorder %s341, %s342
    %p353 = scmp.eq.s32.totalorder %s35, 0
    %p354 = por %p352, %p353
    %p355 = scmp.ne.s32.totalorder %s341, %s342
    %p356 = scmp.eq.s32.totalorder %s36, 3
    %p357 = por %p355, %p356
    %p359 = scmp.ne.s32.totalorder %s342, %s358
    %p360 = scmp.eq.s32.totalorder %s36, 0
    %p361 = por %p359, %p360
    %s362 = ssub.s32 %s38, %s45
    %p363 = scmp.eq.s32.totalorder %s362, 0
    %s365 = sadd.s32 %s364, 1
    %s366 = scalar_select %p363, %s364, %s365
    %p369 = pneg %p363
    %p370 = scmp.eq.s32.totalorder %s30, 3
    %p371 = por %p369, %p370
    %p372 = scmp.ne.s32.totalorder %s364, %s367
    %p373 = scmp.eq.s32.totalorder %s30, 0
    %p374 = por %p372, %p373
    %p375 = scmp.ne.s32.totalorder %s364, %s367
    %p376 = scmp.eq.s32.totalorder %s35, 3
    %p377 = por %p375, %p376
    %p378 = scmp.ne.s32.totalorder %s367, %s368
    %p379 = scmp.eq.s32.totalorder %s35, 0
    %p380 = por %p378, %p379
    %p381 = scmp.ne.s32.totalorder %s367, %s368
    %p382 = scmp.eq.s32.totalorder %s36, 3
    %p383 = por %p381, %p382
    %p385 = scmp.ne.s32.totalorder %s368, %s384
    %p386 = scmp.eq.s32.totalorder %s36, 0
    %p387 = por %p385, %p386
    %s388 = ssub.s32 %s38, %s45
    %p389 = scmp.eq.s32.totalorder %s388, 0
    %s391 = sadd.s32 %s390, 1
    %s392 = scalar_select %p389, %s390, %s391
    %p395 = pneg %p389
    %p396 = scmp.eq.s32.totalorder %s30, 3
    %p397 = por %p395, %p396
    %p398 = scmp.ne.s32.totalorder %s390, %s393
    %p399 = scmp.eq.s32.totalorder %s30, 0
    %p400 = por %p398, %p399
    %p401 = scmp.ne.s32.totalorder %s390, %s393
    %p402 = scmp.eq.s32.totalorder %s35, 3
    %p403 = por %p401, %p402
    %p404 = scmp.ne.s32.totalorder %s393, %s394
    %p405 = scmp.eq.s32.totalorder %s35, 0
    %p406 = por %p404, %p405
    %p407 = scmp.ne.s32.totalorder %s393, %s394
    %p408 = scmp.eq.s32.totalorder %s36, 3
    %p409 = por %p407, %p408
    %p411 = scmp.ne.s32.totalorder %s394, %s410
    %p412 = scmp.eq.s32.totalorder %s36, 0
    %p413 = por %p411, %p412
    %s414 = ssub.s32 %s38, %s45
    %p415 = scmp.eq.s32.totalorder %s414, 0
    %s417 = sadd.s32 %s416, 1
    %s418 = scalar_select %p415, %s416, %s417
    %p421 = pneg %p415
    %p422 = scmp.eq.s32.totalorder %s30, 3
    %p423 = por %p421, %p422
    %p424 = scmp.ne.s32.totalorder %s416, %s419
    %p425 = scmp.eq.s32.totalorder %s30, 0
    %p426 = por %p424, %p425
    %p427 = scmp.ne.s32.totalorder %s416, %s419
    %p428 = scmp.eq.s32.totalorder %s35, 3
    %p429 = por %p427, %p428
    %p430 = scmp.ne.s32.totalorder %s419, %s420
    %p431 = scmp.eq.s32.totalorder %s35, 0
    %p432 = por %p430, %p431
    %p433 = scmp.ne.s32.totalorder %s419, %s420
    %p434 = scmp.eq.s32.totalorder %s36, 3
    %p435 = por %p433, %p434
    %p437 = scmp.ne.s32.totalorder %s420, %s436
    %p438 = scmp.eq.s32.totalorder %s36, 0
    %p439 = por %p437, %p438
    %s440 = ssub.s32 %s38, %s45
    %p441 = scmp.eq.s32.totalorder %s440, 0
    %s443 = sadd.s32 %s442, 1
    %s444 = scalar_select %p441, %s442, %s443
    %p447 = pneg %p441
    %p448 = scmp.eq.s32.totalorder %s30, 3
    %p449 = por %p447, %p448
    %p450 = scmp.ne.s32.totalorder %s442, %s445
    %p451 = scmp.eq.s32.totalorder %s30, 0
    %p452 = por %p450, %p451
    %p453 = scmp.ne.s32.totalorder %s442, %s445
    %p454 = scmp.eq.s32.totalorder %s35, 3
    %p455 = por %p453, %p454
    %p456 = scmp.ne.s32.totalorder %s445, %s446
    %p457 = scmp.eq.s32.totalorder %s35, 0
    %p458 = por %p456, %p457
    %p459 = scmp.ne.s32.totalorder %s445, %s446
    %p460 = scmp.eq.s32.totalorder %s36, 3
    %p461 = por %p459, %p460
    %p463 = scmp.ne.s32.totalorder %s446, %s462
    %p464 = scmp.eq.s32.totalorder %s36, 0
    %p465 = por %p463, %p464
    %s466 = ssub.s32 %s38, %s45
    %p467 = scmp.eq.s32.totalorder %s466, 0
    %s469 = sadd.s32 %s468, 1
    %s470 = scalar_select %p467, %s468, %s469
    %p473 = pneg %p467
    %p474 = scmp.eq.s32.totalorder %s30, 3
    %p475 = por %p473, %p474
    %p476 = scmp.ne.s32.totalorder %s468, %s471
    %p477 = scmp.eq.s32.totalorder %s30, 0
    %p478 = por %p476, %p477
    %p479 = scmp.ne.s32.totalorder %s468, %s471
    %p480 = scmp.eq.s32.totalorder %s35, 3
    %p481 = por %p479, %p480
    %p482 = scmp.ne.s32.totalorder %s471, %s472
    %p483 = scmp.eq.s32.totalorder %s35, 0
    %p484 = por %p482, %p483
    %p485 = scmp.ne.s32.totalorder %s471, %s472
    %p486 = scmp.eq.s32.totalorder %s36, 3
    %p487 = por %p485, %p486
    %p489 = scmp.ne.s32.totalorder %s472, %s488
    %p490 = scmp.eq.s32.totalorder %s36, 0
    %p491 = por %p489, %p490
    %s492 = ssub.s32 %s38, %s45
    %p493 = scmp.eq.s32.totalorder %s492, 0
    %s495 = sadd.s32 %s494, 1
    %s496 = scalar_select %p493, %s494, %s495
    %p499 = pneg %p493
    %p500 = scmp.eq.s32.totalorder %s30, 3
    %p501 = por %p499, %p500
    %p502 = scmp.ne.s32.totalorder %s494, %s497
    %p503 = scmp.eq.s32.totalorder %s30, 0
    %p504 = por %p502, %p503
    %p505 = scmp.ne.s32.totalorder %s494, %s497
    %p506 = scmp.eq.s32.totalorder %s35, 3
    %p507 = por %p505, %p506
    %p508 = scmp.ne.s32.totalorder %s497, %s498
    %p509 = scmp.eq.s32.totalorder %s35, 0
    %p510 = por %p508, %p509
    %p511 = scmp.ne.s32.totalorder %s497, %s498
    %p512 = scmp.eq.s32.totalorder %s36, 3
    %p513 = por %p511, %p512
    %p515 = scmp.ne.s32.totalorder %s498, %s514
    %p516 = scmp.eq.s32.totalorder %s36, 0
    %p517 = por %p515, %p516
    %s518 = ssub.s32 %s38, %s45
    %p519 = scmp.eq.s32.totalorder %s518, 0
    %s521 = sadd.s32 %s520, 1
    %s522 = scalar_select %p519, %s520, %s521
    %p525 = pneg %p519
    %p526 = scmp.eq.s32.totalorder %s30, 3
    %p527 = por %p525, %p526
    %p528 = scmp.ne.s32.totalorder %s520, %s523
    %p529 = scmp.eq.s32.totalorder %s30, 0
    %p530 = por %p528, %p529
    %p531 = scmp.ne.s32.totalorder %s520, %s523
    %p532 = scmp.eq.s32.totalorder %s35, 3
    %p533 = por %p531, %p532
    %p534 = scmp.ne.s32.totalorder %s523, %s524
    %p535 = scmp.eq.s32.totalorder %s35, 0
    %p536 = por %p534, %p535
    %p537 = scmp.ne.s32.totalorder %s523, %s524
    %p538 = scmp.eq.s32.totalorder %s36, 3
    %p539 = por %p537, %p538
    %p541 = scmp.ne.s32.totalorder %s524, %s540
    %p542 = scmp.eq.s32.totalorder %s36, 0
    %p543 = por %p541, %p542
    %s544 = ssub.s32 %s38, %s45
    %p545 = scmp.eq.s32.totalorder %s544, 0
    %s547 = sadd.s32 %s546, 1
    %s548 = scalar_select %p545, %s546, %s547
    %p551 = pneg %p545
    %p552 = scmp.eq.s32.totalorder %s30, 3
    %p553 = por %p551, %p552
    %p554 = scmp.ne.s32.totalorder %s546, %s549
    %p555 = scmp.eq.s32.totalorder %s30, 0
    %p556 = por %p554, %p555
    %p557 = scmp.ne.s32.totalorder %s546, %s549
    %p558 = scmp.eq.s32.totalorder %s35, 3
    %p559 = por %p557, %p558
    %p560 = scmp.ne.s32.totalorder %s549, %s550
    %p561 = scmp.eq.s32.totalorder %s35, 0
    %p562 = por %p560, %p561
    %p563 = scmp.ne.s32.totalorder %s549, %s550
    %p564 = scmp.eq.s32.totalorder %s36, 3
    %p565 = por %p563, %p564
    %p567 = scmp.ne.s32.totalorder %s550, %s566
    %p568 = scmp.eq.s32.totalorder %s36, 0
    %p569 = por %p567, %p568
    %s570 = ssub.s32 %s38, %s45
    %p571 = scmp.eq.s32.totalorder %s570, 0
    %s573 = sadd.s32 %s572, 1
    %s574 = scalar_select %p571, %s572, %s573
    %p577 = pneg %p571
    %p578 = scmp.eq.s32.totalorder %s30, 3
    %p579 = por %p577, %p578
    %p580 = scmp.ne.s32.totalorder %s572, %s575
    %p581 = scmp.eq.s32.totalorder %s30, 0
    %p582 = por %p580, %p581
    %p583 = scmp.ne.s32.totalorder %s572, %s575
    %p584 = scmp.eq.s32.totalorder %s35, 3
    %p585 = por %p583, %p584
    %p586 = scmp.ne.s32.totalorder %s575, %s576
    %p587 = scmp.eq.s32.totalorder %s35, 0
    %p588 = por %p586, %p587
    %p589 = scmp.ne.s32.totalorder %s575, %s576
    %p590 = scmp.eq.s32.totalorder %s36, 3
    %p591 = por %p589, %p590
    %p593 = scmp.ne.s32.totalorder %s576, %s592
    %p594 = scmp.eq.s32.totalorder %s36, 0
    %p595 = por %p593, %p594
    %s596 = ssub.s32 %s38, %s45
    %p597 = scmp.eq.s32.totalorder %s596, 0
    %s599 = sadd.s32 %s598, 1
    %s600 = scalar_select %p597, %s598, %s599
    %p603 = pneg %p597
    %p604 = scmp.eq.s32.totalorder %s30, 3
    %p605 = por %p603, %p604
    %p606 = scmp.ne.s32.totalorder %s598, %s601
    %p607 = scmp.eq.s32.totalorder %s30, 0
    %p608 = por %p606, %p607
    %p609 = scmp.ne.s32.totalorder %s598, %s601
    %p610 = scmp.eq.s32.totalorder %s35, 3
    %p611 = por %p609, %p610
    %p612 = scmp.ne.s32.totalorder %s601, %s602
    %p613 = scmp.eq.s32.totalorder %s35, 0
    %p614 = por %p612, %p613
    %p615 = scmp.ne.s32.totalorder %s601, %s602
    %p616 = scmp.eq.s32.totalorder %s36, 3
    %p617 = por %p615, %p616
    %p619 = scmp.ne.s32.totalorder %s602, %s618
    %p620 = scmp.eq.s32.totalorder %s36, 0
    %p621 = por %p619, %p620
    %s622 = ssub.s32 %s38, %s45
    %p623 = scmp.eq.s32.totalorder %s622, 0
    %s625 = sadd.s32 %s624, 1
    %s626 = scalar_select %p623, %s624, %s625
    %p629 = pneg %p623
    %p630 = scmp.eq.s32.totalorder %s30, 3
    %p631 = por %p629, %p630
    %p632 = scmp.ne.s32.totalorder %s624, %s627
    %p633 = scmp.eq.s32.totalorder %s30, 0
    %p634 = por %p632, %p633
    %p635 = scmp.ne.s32.totalorder %s624, %s627
    %p636 = scmp.eq.s32.totalorder %s35, 3
    %p637 = por %p635, %p636
    %p638 = scmp.ne.s32.totalorder %s627, %s628
    %p639 = scmp.eq.s32.totalorder %s35, 0
    %p640 = por %p638, %p639
    %p641 = scmp.ne.s32.totalorder %s627, %s628
    %p642 = scmp.eq.s32.totalorder %s36, 3
    %p643 = por %p641, %p642
    %p645 = scmp.ne.s32.totalorder %s628, %s644
    %p646 = scmp.eq.s32.totalorder %s36, 0
    %p647 = por %p645, %p646
    %s648 = ssub.s32 %s38, %s45
    %p649 = scmp.eq.s32.totalorder %s648, 0
    %s651 = sadd.s32 %s650, 1
    %s652 = scalar_select %p649, %s650, %s651
    %p655 = pneg %p649
    %p656 = scmp.eq.s32.totalorder %s30, 3
    %p657 = por %p655, %p656
    %p658 = scmp.ne.s32.totalorder %s650, %s653
    %p659 = scmp.eq.s32.totalorder %s30, 0
    %p660 = por %p658, %p659
    %p661 = scmp.ne.s32.totalorder %s650, %s653
    %p662 = scmp.eq.s32.totalorder %s35, 3
    %p663 = por %p661, %p662
    %p664 = scmp.ne.s32.totalorder %s653, %s654
    %p665 = scmp.eq.s32.totalorder %s35, 0
    %p666 = por %p664, %p665
    %p667 = scmp.ne.s32.totalorder %s653, %s654
    %p668 = scmp.eq.s32.totalorder %s36, 3
    %p669 = por %p667, %p668
    %p671 = scmp.ne.s32.totalorder %s654, %s670
    %p672 = scmp.eq.s32.totalorder %s36, 0
    %p673 = por %p671, %p672
    %s674 = ssub.s32 %s37, %s49
    %p675 = scmp.eq.s32.totalorder %s674, 0
    %s677 = sadd.s32 %s676, 1
    %s678 = scalar_select %p675, %s676, %s677
    %p681 = pneg %p675
    %p682 = scmp.eq.s32.totalorder %s30, 3
    %p683 = por %p681, %p682
    %p684 = scmp.ne.s32.totalorder %s676, %s679
    %p685 = scmp.eq.s32.totalorder %s30, 0
    %p686 = por %p684, %p685
    %p687 = scmp.ne.s32.totalorder %s676, %s679
    %p688 = scmp.eq.s32.totalorder %s35, 3
    %p689 = por %p687, %p688
    %p690 = scmp.ne.s32.totalorder %s679, %s680
    %p691 = scmp.eq.s32.totalorder %s35, 0
    %p692 = por %p690, %p691
    %p693 = scmp.ne.s32.totalorder %s679, %s680
    %p694 = scmp.eq.s32.totalorder %s36, 3
    %p695 = por %p693, %p694
    %p697 = scmp.ne.s32.totalorder %s680, %s696
    %p698 = scmp.eq.s32.totalorder %s36, 0
    %p699 = por %p697, %p698
    %p700 = scmp.le.s32.totalorder 1, %s30
    %p701 = scmp.lt.s32.totalorder %s30, 5
    %p702 = pnand %p700, %p701
    %p703 = pneg %p702
    // Predicated region
    $region9: #{decoder_forward.2} parent=5 // pred_check
      _
    $region10: #{decoder_forward.2} parent=5 // pred_check_branch
      %705 = sbr.rel (%p702) target = $region12
    $region11: #{decoder_forward.2} parent=5 // pred_region
      %s706 = ssub.s32 %s30, 1
    $region12: #{decoder_forward.2} parent=5 // pred_fallthru
      _
    %p707 = scmp.lt.s32.totalorder %s30, 4
    // Predicated region
    $region13: #{decoder_forward.2} parent=5 // pred_check
      %p708 = pneg %p707
    $region14: #{decoder_forward.2} parent=5 // pred_check_branch
      %710 = sbr.rel (%p708) target = $region16
    $region15: #{decoder_forward.2} parent=5 // pred_region
      // Predicated region
      $region17: #{decoder_forward.2} parent=15 // pred_check
        %p711 = pneg %p62
      $region18: #{decoder_forward.2} parent=15 // pred_check_branch
        %713 = sbr.rel (%p711) target = $region20
      $region19: #{decoder_forward.2} parent=15 // pred_region
        %p714 = scmp.lt.s32.totalorder %s37, 1
        %s715 = scalar_select %p714, %s37, 1
        %s716 = smul.addr %s715, 8
        %s717 = scalar_lea.vmem %s0, %s716
      $region20: #{decoder_forward.2} parent=15 // pred_fallthru
        _
      // Predicated region
      $region21: #{decoder_forward.2} parent=15 // pred_check
        %p718 = pneg %p88
      $region22: #{decoder_forward.2} parent=15 // pred_check_branch
        %720 = sbr.rel (%p718) target = $region24
      $region23: #{decoder_forward.2} parent=15 // pred_region
        %p721 = scmp.lt.s32.totalorder %s37, 1
        %s722 = scalar_select %p721, %s37, 1
        %s723 = smul.addr %s722, 8
        %s724 = scalar_lea.vmem %s1, %s723
      $region24: #{decoder_forward.2} parent=15 // pred_fallthru
        _
      // Predicated region
      $region25: #{decoder_forward.2} parent=15 // pred_check
        %p725 = pneg %p114
      $region26: #{decoder_forward.2} parent=15 // pred_check_branch
        %727 = sbr.rel (%p725) target = $region28
      $region27: #{decoder_forward.2} parent=15 // pred_region
        %p728 = scmp.lt.s32.totalorder %s37, 1
        %s729 = scalar_select %p728, %s37, 1
        %s730 = smul.addr %s729, 8
        %s731 = scalar_lea.vmem %s2, %s730
      $region28: #{decoder_forward.2} parent=15 // pred_fallthru
        _
      // Predicated region
      $region29: #{decoder_forward.2} parent=15 // pred_check
        %p732 = pneg %p140
      $region30: #{decoder_forward.2} parent=15 // pred_check_branch
        %734 = sbr.rel (%p732) target = $region32
      $region31: #{decoder_forward.2} parent=15 // pred_region
        %p735 = scmp.lt.s32.totalorder %s37, 1
        %s736 = scalar_select %p735, %s37, 1
        %s737 = smul.addr %s736, 8
        %s738 = scalar_lea.vmem %s3, %s737
      $region32: #{decoder_forward.2} parent=15 // pred_fallthru
        _
      // Predicated region
      $region33: #{decoder_forward.2} parent=15 // pred_check
        %p739 = pneg %p166
      $region34: #{decoder_forward.2} parent=15 // pred_check_branch
        %741 = sbr.rel (%p739) target = $region36
      $region35: #{decoder_forward.2} parent=15 // pred_region
        %p742 = scmp.lt.s32.totalorder %s38, 1
        %s743 = scalar_select %p742, %s38, 1
        %s744 = smul.addr %s743, 4
        %s745 = smul.addr %s744, 4
        %s746 = scalar_lea.vmem %s4, %s745
      $region36: #{decoder_forward.2} parent=15 // pred_fallthru
        _
      // Predicated region
      $region37: #{decoder_forward.2} parent=15 // pred_check
        %p747 = pneg %p192
      $region38: #{decoder_forward.2} parent=15 // pred_check_branch
        %749 = sbr.rel (%p747) target = $region40
      $region39: #{decoder_forward.2} parent=15 // pred_region
        %p750 = scmp.lt.s32.totalorder %s38, 1
        %s751 = scalar_select %p750, %s38, 1
        %s752 = scalar_lea.vmem %s5, %s751
      $region40: #{decoder_forward.2} parent=15 // pred_fallthru
        _
      // Predicated region
      $region41: #{decoder_forward.2} parent=15 // pred_check
        %p753 = pneg %p218
      $region42: #{decoder_forward.2} parent=15 // pred_check_branch
        %755 = sbr.rel (%p753) target = $region44
      $region43: #{decoder_forward.2} parent=15 // pred_region
        %p756 = scmp.lt.s32.totalorder %s38, 1
        %s757 = scalar_select %p756, %s38, 1
        %s758 = smul.addr %s757, 4
        %s759 = smul.addr %s758, 4
        %s760 = scalar_lea.vmem %s6, %s759
      $region44: #{decoder_forward.2} parent=15 // pred_fallthru
        _
      // Predicated region
      $region45: #{decoder_forward.2} parent=15 // pred_check
        %p761 = pneg %p244
      $region46: #{decoder_forward.2} parent=15 // pred_check_branch
        %763 = sbr.rel (%p761) target = $region48
      $region47: #{decoder_forward.2} parent=15 // pred_region
        %p764 = scmp.lt.s32.totalorder %s38, 1
        %s765 = scalar_select %p764, %s38, 1
        %s766 = scalar_lea.vmem %s7, %s765
      $region48: #{decoder_forward.2} parent=15 // pred_fallthru
        _
      // Predicated region
      $region49: #{decoder_forward.2} parent=15 // pred_check
        %p767 = pneg %p270
      $region50: #{decoder_forward.2} parent=15 // pred_check_branch
        %769 = sbr.rel (%p767) target = $region52
      $region51: #{decoder_forward.2} parent=15 // pred_region
        %p770 = scmp.lt.s32.totalorder %s38, 1
        %s771 = scalar_select %p770, %s38, 1
        %s772 = scalar_lea.vmem %s8, %s771
      $region52: #{decoder_forward.2} parent=15 // pred_fallthru
        _
      // Predicated region
      $region53: #{decoder_forward.2} parent=15 // pred_check
        %p773 = pneg %p296
      $region54: #{decoder_forward.2} parent=15 // pred_check_branch
        %775 = sbr.rel (%p773) target = $region56
      $region55: #{decoder_forward.2} parent=15 // pred_region
        %p776 = scmp.lt.s32.totalorder %s38, 1
        %s777 = scalar_select %p776, %s38, 1
        %s778 = scalar_lea.vmem %s9, %s777
      $region56: #{decoder_forward.2} parent=15 // pred_fallthru
        _
      // Predicated region
      $region57: #{decoder_forward.2} parent=15 // pred_check
        %p779 = pneg %p322
      $region58: #{decoder_forward.2} parent=15 // pred_check_branch
        %781 = sbr.rel (%p779) target = $region60
      $region59: #{decoder_forward.2} parent=15 // pred_region
        %p782 = scmp.lt.s32.totalorder %s38, 1
        %s783 = scalar_select %p782, %s38, 1
        %s784 = smul.addr %s783, 4
        %s785 = smul.addr %s784, 4
        %s786 = scalar_lea.vmem %s10, %s785
      $region60: #{decoder_forward.2} parent=15 // pred_fallthru
        _
      // Predicated region
      $region61: #{decoder_forward.2} parent=15 // pred_check
        %p787 = pneg %p348
      $region62: #{decoder_forward.2} parent=15 // pred_check_branch
        %789 = sbr.rel (%p787) target = $region64
      $region63: #{decoder_forward.2} parent=15 // pred_region
        %p790 = scmp.lt.s32.totalorder %s38, 1
        %s791 = scalar_select %p790, %s38, 1
        %s792 = scalar_lea.vmem %s11, %s791
      $region64: #{decoder_forward.2} parent=15 // pred_fallthru
        _
      // Predicated region
      $region65: #{decoder_forward.2} parent=15 // pred_check
        %p793 = pneg %p374
      $region66: #{decoder_forward.2} parent=15 // pred_check_branch
        %795 = sbr.rel (%p793) target = $region68
      $region67: #{decoder_forward.2} parent=15 // pred_region
        %p796 = scmp.lt.s32.totalorder %s38, 1
        %s797 = scalar_select %p796, %s38, 1
        %s798 = smul.addr %s797, 4
        %s799 = smul.addr %s798, 4
        %s800 = scalar_lea.vmem %s12, %s799
      $region68: #{decoder_forward.2} parent=15 // pred_fallthru
        _
      // Predicated region
      $region69: #{decoder_forward.2} parent=15 // pred_check
        %p801 = pneg %p400
      $region70: #{decoder_forward.2} parent=15 // pred_check_branch
        %803 = sbr.rel (%p801) target = $region72
      $region71: #{decoder_forward.2} parent=15 // pred_region
        %p804 = scmp.lt.s32.totalorder %s38, 1
        %s805 = scalar_select %p804, %s38, 1
        %s806 = scalar_lea.vmem %s13, %s805
      $region72: #{decoder_forward.2} parent=15 // pred_fallthru
        _
      // Predicated region
      $region73: #{decoder_forward.2} parent=15 // pred_check
        %p807 = pneg %p426
      $region74: #{decoder_forward.2} parent=15 // pred_check_branch
        %809 = sbr.rel (%p807) target = $region76
      $region75: #{decoder_forward.2} parent=15 // pred_region
        %p810 = scmp.lt.s32.totalorder %s38, 1
        %s811 = scalar_select %p810, %s38, 1
        %s812 = smul.addr %s811, 4
        %s813 = smul.addr %s812, 4
        %s814 = scalar_lea.vmem %s14, %s813
      $region76: #{decoder_forward.2} parent=15 // pred_fallthru
        _
      // Predicated region
      $region77: #{decoder_forward.2} parent=15 // pred_check
        %p815 = pneg %p452
      $region78: #{decoder_forward.2} parent=15 // pred_check_branch
        %817 = sbr.rel (%p815) target = $region80
      $region79: #{decoder_forward.2} parent=15 // pred_region
        %p818 = scmp.lt.s32.totalorder %s38, 1
        %s819 = scalar_select %p818, %s38, 1
        %s820 = scalar_lea.vmem %s15, %s819
      $region80: #{decoder_forward.2} parent=15 // pred_fallthru
        _
      // Predicated region
      $region81: #{decoder_forward.2} parent=15 // pred_check
        %p821 = pneg %p478
      $region82: #{decoder_forward.2} parent=15 // pred_check_branch
        %823 = sbr.rel (%p821) target = $region84
      $region83: #{decoder_forward.2} parent=15 // pred_region
        %p824 = scmp.lt.s32.totalorder %s38, 1
        %s825 = scalar_select %p824, %s38, 1
        %s826 = scalar_lea.vmem %s16, %s825
      $region84: #{decoder_forward.2} parent=15 // pred_fallthru
        _
      // Predicated region
      $region85: #{decoder_forward.2} parent=15 // pred_check
        %p827 = pneg %p504
      $region86: #{decoder_forward.2} parent=15 // pred_check_branch
        %829 = sbr.rel (%p827) target = $region88
      $region87: #{decoder_forward.2} parent=15 // pred_region
        %p830 = scmp.lt.s32.totalorder %s38, 1
        %s831 = scalar_select %p830, %s38, 1
        %s832 = scalar_lea.vmem %s17, %s831
      $region88: #{decoder_forward.2} parent=15 // pred_fallthru
        _
      // Predicated region
      $region89: #{decoder_forward.2} parent=15 // pred_check
        %p833 = pneg %p530
      $region90: #{decoder_forward.2} parent=15 // pred_check_branch
        %835 = sbr.rel (%p833) target = $region92
      $region91: #{decoder_forward.2} parent=15 // pred_region
        %p836 = scmp.lt.s32.totalorder %s38, 1
        %s837 = scalar_select %p836, %s38, 1
        %s838 = smul.addr %s837, 4
        %s839 = smul.addr %s838, 4
        %s840 = scalar_lea.vmem %s18, %s839
      $region92: #{decoder_forward.2} parent=15 // pred_fallthru
        _
      // Predicated region
      $region93: #{decoder_forward.2} parent=15 // pred_check
        %p841 = pneg %p556
      $region94: #{decoder_forward.2} parent=15 // pred_check_branch
        %843 = sbr.rel (%p841) target = $region96
      $region95: #{decoder_forward.2} parent=15 // pred_region
        %p844 = scmp.lt.s32.totalorder %s38, 1
        %s845 = scalar_select %p844, %s38, 1
        %s846 = scalar_lea.vmem %s19, %s845
      $region96: #{decoder_forward.2} parent=15 // pred_fallthru
        _
      // Predicated region
      $region97: #{decoder_forward.2} parent=15 // pred_check
        %p847 = pneg %p582
      $region98: #{decoder_forward.2} parent=15 // pred_check_branch
        %849 = sbr.rel (%p847) target = $region100
      $region99: #{decoder_forward.2} parent=15 // pred_region
        %p850 = scmp.lt.s32.totalorder %s38, 1
        %s851 = scalar_select %p850, %s38, 1
        %s852 = smul.addr %s851, 8
        %s853 = smul.addr %s852, 4
        %s854 = scalar_lea.vmem %s20, %s853
      $region100: #{decoder_forward.2} parent=15 // pred_fallthru
        _
      // Predicated region
      $region101: #{decoder_forward.2} parent=15 // pred_check
        %p855 = pneg %p608
      $region102: #{decoder_forward.2} parent=15 // pred_check_branch
        %857 = sbr.rel (%p855) target = $region104
      $region103: #{decoder_forward.2} parent=15 // pred_region
        %p858 = scmp.lt.s32.totalorder %s38, 1
        %s859 = scalar_select %p858, %s38, 1
        %s860 = scalar_lea.vmem %s21, %s859
      $region104: #{decoder_forward.2} parent=15 // pred_fallthru
        _
      // Predicated region
      $region105: #{decoder_forward.2} parent=15 // pred_check
        %p861 = pneg %p634
      $region106: #{decoder_forward.2} parent=15 // pred_check_branch
        %863 = sbr.rel (%p861) target = $region108
      $region107: #{decoder_forward.2} parent=15 // pred_region
        %p864 = scmp.lt.s32.totalorder %s38, 1
        %s865 = scalar_select %p864, %s38, 1
        %s866 = scalar_lea.vmem %s22, %s865
      $region108: #{decoder_forward.2} parent=15 // pred_fallthru
        _
      // Predicated region
      $region109: #{decoder_forward.2} parent=15 // pred_check
        %p867 = pneg %p660
      $region110: #{decoder_forward.2} parent=15 // pred_check_branch
        %869 = sbr.rel (%p867) target = $region112
      $region111: #{decoder_forward.2} parent=15 // pred_region
        %p870 = scmp.lt.s32.totalorder %s38, 1
        %s871 = scalar_select %p870, %s38, 1
        %s872 = scalar_lea.vmem %s23, %s871
      $region112: #{decoder_forward.2} parent=15 // pred_fallthru
        _
    $region16: #{decoder_forward.2} parent=5 // pred_fallthru
      _
    %p873 = scmp.le.s32.totalorder 1, %s30
    %p874 = scmp.lt.s32.totalorder %s30, 5
    %p875 = pnand %p873, %p874
    %p876 = pneg %p875
    // Predicated region
    $region113: #{decoder_forward.2} parent=5 // pred_check
      _
    $region114: #{decoder_forward.2} parent=5 // pred_check_branch
      %878 = sbr.rel (%p875) target = $region116
    $region115: #{decoder_forward.2} parent=5 // pred_region
      %s879 = ssub.s32 %s30, 1
      %p880 = scmp.lt.s32.totalorder %s39, 1
      %s881 = scalar_select %p880, %s39, 1
      %s882 = smul.addr %s881, 8
      %s883 = scalar_lea.vmem %s0, %s882
      %p884 = pneg %p68
      %p885 = pneg %p65
      %p886 = scmp.lt.s32.totalorder %s39, 1
      %s887 = scalar_select %p886, %s39, 1
      %s888 = smul.addr %s887, 8
      %s889 = scalar_lea.vmem %s1, %s888
      %p890 = pneg %p94
      %p891 = pneg %p91
      %p892 = scmp.lt.s32.totalorder %s39, 1
      %s893 = scalar_select %p892, %s39, 1
      %s894 = smul.addr %s893, 8
      %s895 = scalar_lea.vmem %s2, %s894
      %p896 = pneg %p120
      %p897 = pneg %p117
      %p898 = scmp.lt.s32.totalorder %s39, 1
      %s899 = scalar_select %p898, %s39, 1
      %s900 = smul.addr %s899, 8
      %s901 = scalar_lea.vmem %s3, %s900
      %p902 = pneg %p146
      %p903 = pneg %p143
      %p904 = scmp.lt.s32.totalorder %s40, 1
      %s905 = scalar_select %p904, %s40, 1
      %s906 = smul.addr %s905, 4
      %s907 = smul.addr %s906, 4
      %s908 = scalar_lea.vmem %s4, %s907
      %p909 = pneg %p172
      %p910 = pneg %p169
      %p911 = scmp.lt.s32.totalorder %s40, 1
      %s912 = scalar_select %p911, %s40, 1
      %s913 = scalar_lea.vmem %s5, %s912
      %p914 = pneg %p198
      %p915 = pneg %p195
      %p916 = scmp.lt.s32.totalorder %s40, 1
      %s917 = scalar_select %p916, %s40, 1
      %s918 = smul.addr %s917, 4
      %s919 = smul.addr %s918, 4
      %s920 = scalar_lea.vmem %s6, %s919
      %p921 = pneg %p224
      %p922 = pneg %p221
      %p923 = scmp.lt.s32.totalorder %s40, 1
      %s924 = scalar_select %p923, %s40, 1
      %s925 = scalar_lea.vmem %s7, %s924
      %p926 = pneg %p250
      %p927 = pneg %p247
      %p928 = scmp.lt.s32.totalorder %s40, 1
      %s929 = scalar_select %p928, %s40, 1
      %s930 = scalar_lea.vmem %s8, %s929
      %p931 = pneg %p276
      %p932 = pneg %p273
      %p933 = scmp.lt.s32.totalorder %s40, 1
      %s934 = scalar_select %p933, %s40, 1
      %s935 = scalar_lea.vmem %s9, %s934
      %p936 = pneg %p302
      %p937 = pneg %p299
      %p938 = scmp.lt.s32.totalorder %s40, 1
      %s939 = scalar_select %p938, %s40, 1
      %s940 = smul.addr %s939, 4
      %s941 = smul.addr %s940, 4
      %s942 = scalar_lea.vmem %s10, %s941
      %p943 = pneg %p328
      %p944 = pneg %p325
      %p945 = scmp.lt.s32.totalorder %s40, 1
      %s946 = scalar_select %p945, %s40, 1
      %s947 = scalar_lea.vmem %s11, %s946
      %p948 = pneg %p354
      %p949 = pneg %p351
      %p950 = scmp.lt.s32.totalorder %s40, 1
      %s951 = scalar_select %p950, %s40, 1
      %s952 = smul.addr %s951, 4
      %s953 = smul.addr %s952, 4
      %s954 = scalar_lea.vmem %s12, %s953
      %p955 = pneg %p380
      %p956 = pneg %p377
      %p957 = scmp.lt.s32.totalorder %s40, 1
      %s958 = scalar_select %p957, %s40, 1
      %s959 = scalar_lea.vmem %s13, %s958
      %p960 = pneg %p406
      %p961 = pneg %p403
      %p962 = scmp.lt.s32.totalorder %s40, 1
      %s963 = scalar_select %p962, %s40, 1
      %s964 = smul.addr %s963, 4
      %s965 = smul.addr %s964, 4
      %s966 = scalar_lea.vmem %s14, %s965
      %p967 = pneg %p432
      %p968 = pneg %p429
      %p969 = scmp.lt.s32.totalorder %s40, 1
      %s970 = scalar_select %p969, %s40, 1
      %s971 = scalar_lea.vmem %s15, %s970
      %p972 = pneg %p458
      %p973 = pneg %p455
      %p974 = scmp.lt.s32.totalorder %s40, 1
      %s975 = scalar_select %p974, %s40, 1
      %s976 = scalar_lea.vmem %s16, %s975
      %p977 = pneg %p484
      %p978 = pneg %p481
      %p979 = scmp.lt.s32.totalorder %s40, 1
      %s980 = scalar_select %p979, %s40, 1
      %s981 = scalar_lea.vmem %s17, %s980
      %p982 = pneg %p510
      %p983 = pneg %p507
      %p984 = scmp.lt.s32.totalorder %s40, 1
      %s985 = scalar_select %p984, %s40, 1
      %s986 = smul.addr %s985, 4
      %s987 = smul.addr %s986, 4
      %s988 = scalar_lea.vmem %s18, %s987
      %p989 = pneg %p536
      %p990 = pneg %p533
      %p991 = scmp.lt.s32.totalorder %s40, 1
      %s992 = scalar_select %p991, %s40, 1
      %s993 = scalar_lea.vmem %s19, %s992
      %p994 = pneg %p562
      %p995 = pneg %p559
      %p996 = scmp.lt.s32.totalorder %s40, 1
      %s997 = scalar_select %p996, %s40, 1
      %s998 = smul.addr %s997, 8
      %s999 = smul.addr %s998, 4
      %s1000 = scalar_lea.vmem %s20, %s999
      %p1001 = pneg %p588
      %p1002 = pneg %p585
      %p1003 = scmp.lt.s32.totalorder %s40, 1
      %s1004 = scalar_select %p1003, %s40, 1
      %s1005 = scalar_lea.vmem %s21, %s1004
      %p1006 = pneg %p614
      %p1007 = pneg %p611
      %p1008 = scmp.lt.s32.totalorder %s40, 1
      %s1009 = scalar_select %p1008, %s40, 1
      %s1010 = scalar_lea.vmem %s22, %s1009
      %p1011 = pneg %p640
      %p1012 = pneg %p637
      %p1013 = scmp.lt.s32.totalorder %s40, 1
      %s1014 = scalar_select %p1013, %s40, 1
      %s1015 = scalar_lea.vmem %s23, %s1014
      %p1016 = pneg %p666
      %p1017 = pneg %p663
      %p1018 = pneg %p692
      %p1019 = pneg %p689
      %p1020 = scmp.lt.s32.totalorder %s39, 1
      %s1021 = scalar_select %p1020, %s39, 1
      %s1022 = smul.addr %s1021, 8
      %s1023 = scalar_lea.vmem %s24, %s1022
      %p1024 = scmp.lt.s32.totalorder %s39, 1
      %s1025 = scalar_select %p1024, %s39, 1
      %s1026 = smul.addr %s1025, 8
      %s1027 = scalar_lea.vmem %s0, %s1026
      %p1028 = scmp.lt.s32.totalorder %s39, 1
      %s1029 = scalar_select %p1028, %s39, 1
      %s1030 = smul.addr %s1029, 8
      %s1031 = scalar_lea.vmem %s1, %s1030
      %p1032 = scmp.lt.s32.totalorder %s39, 1
      %s1033 = scalar_select %p1032, %s39, 1
      %s1034 = smul.addr %s1033, 8
      %s1035 = scalar_lea.vmem %s2, %s1034
      %p1036 = scmp.lt.s32.totalorder %s39, 1
      %s1037 = scalar_select %p1036, %s39, 1
      %s1038 = smul.addr %s1037, 8
      %s1039 = scalar_lea.vmem %s3, %s1038
      %p1040 = scmp.lt.s32.totalorder %s40, 1
      %s1041 = scalar_select %p1040, %s40, 1
      %s1042 = smul.addr %s1041, 4
      %s1043 = smul.addr %s1042, 4
      %s1044 = scalar_lea.vmem %s4, %s1043
      %p1045 = scmp.lt.s32.totalorder %s40, 1
      %s1046 = scalar_select %p1045, %s40, 1
      %s1047 = scalar_lea.vmem %s5, %s1046
      %p1048 = scmp.lt.s32.totalorder %s40, 1
      %s1049 = scalar_select %p1048, %s40, 1
      %s1050 = smul.addr %s1049, 4
      %s1051 = smul.addr %s1050, 4
      %s1052 = scalar_lea.vmem %s6, %s1051
      %p1053 = scmp.lt.s32.totalorder %s40, 1
      %s1054 = scalar_select %p1053, %s40, 1
      %s1055 = scalar_lea.vmem %s7, %s1054
      %p1056 = scmp.lt.s32.totalorder %s40, 1
      %s1057 = scalar_select %p1056, %s40, 1
      %s1058 = scalar_lea.vmem %s8, %s1057
      %p1059 = scmp.lt.s32.totalorder %s40, 1
      %s1060 = scalar_select %p1059, %s40, 1
      %s1061 = scalar_lea.vmem %s9, %s1060
      %p1062 = scmp.lt.s32.totalorder %s40, 1
      %s1063 = scalar_select %p1062, %s40, 1
      %s1064 = smul.addr %s1063, 4
      %s1065 = smul.addr %s1064, 4
      %s1066 = scalar_lea.vmem %s10, %s1065
      %p1067 = scmp.lt.s32.totalorder %s40, 1
      %s1068 = scalar_select %p1067, %s40, 1
      %s1069 = scalar_lea.vmem %s11, %s1068
      %p1070 = scmp.lt.s32.totalorder %s40, 1
      %s1071 = scalar_select %p1070, %s40, 1
      %s1072 = smul.addr %s1071, 4
      %s1073 = smul.addr %s1072, 4
      %s1074 = scalar_lea.vmem %s12, %s1073
      %p1075 = scmp.lt.s32.totalorder %s40, 1
      %s1076 = scalar_select %p1075, %s40, 1
      %s1077 = scalar_lea.vmem %s13, %s1076
      %p1078 = scmp.lt.s32.totalorder %s40, 1
      %s1079 = scalar_select %p1078, %s40, 1
      %s1080 = smul.addr %s1079, 4
      %s1081 = smul.addr %s1080, 4
      %s1082 = scalar_lea.vmem %s14, %s1081
      %p1083 = scmp.lt.s32.totalorder %s40, 1
      %s1084 = scalar_select %p1083, %s40, 1
      %s1085 = scalar_lea.vmem %s15, %s1084
      %p1086 = scmp.lt.s32.totalorder %s40, 1
      %s1087 = scalar_select %p1086, %s40, 1
      %s1088 = scalar_lea.vmem %s16, %s1087
      %p1089 = scmp.lt.s32.totalorder %s40, 1
      %s1090 = scalar_select %p1089, %s40, 1
      %s1091 = scalar_lea.vmem %s17, %s1090
      %p1092 = scmp.lt.s32.totalorder %s40, 1
      %s1093 = scalar_select %p1092, %s40, 1
      %s1094 = smul.addr %s1093, 4
      %s1095 = smul.addr %s1094, 4
      %s1096 = scalar_lea.vmem %s18, %s1095
      %p1097 = scmp.lt.s32.totalorder %s40, 1
      %s1098 = scalar_select %p1097, %s40, 1
      %s1099 = scalar_lea.vmem %s19, %s1098
      %p1100 = scmp.lt.s32.totalorder %s40, 1
      %s1101 = scalar_select %p1100, %s40, 1
      %s1102 = smul.addr %s1101, 8
      %s1103 = smul.addr %s1102, 4
      %s1104 = scalar_lea.vmem %s20, %s1103
      %p1105 = scmp.lt.s32.totalorder %s40, 1
      %s1106 = scalar_select %p1105, %s40, 1
      %s1107 = scalar_lea.vmem %s21, %s1106
      %p1108 = scmp.lt.s32.totalorder %s40, 1
      %s1109 = scalar_select %p1108, %s40, 1
      %s1110 = scalar_lea.vmem %s22, %s1109
      %p1111 = scmp.lt.s32.totalorder %s40, 1
      %s1112 = scalar_select %p1111, %s40, 1
      %s1113 = scalar_lea.vmem %s23, %s1112
      %p1114 = scmp.lt.s32.totalorder %s39, 1
      %s1115 = scalar_select %p1114, %s39, 1
      %s1116 = smul.addr %s1115, 8
      %s1117 = scalar_lea.vmem %s24, %s1116
      %p1119 = scmp.eq.s32.totalorder %s40, 0
      // Predicated region
      $region117: #{decoder_forward.2} parent=115 // pred_check
        %p1120 = pneg %p1119
      $region118: #{decoder_forward.2} parent=115 // pred_check_branch
        %1122 = sbr.rel (%p1120) target = $region120
      $region119: #{decoder_forward.2} parent=115 // pred_region
        %v1123 = vld [vmem:[%s1027] sm:$0xff]
        %vm1124 = vcmask 261120
        %1125 = vst.msk [vmem:[%s1117] sm:$0xff] %vm1124, %v1123
      $region120: #{decoder_forward.2} parent=115 // pred_fallthru
        _
      %v1126 = vld [vmem:[%s1117] sm:$0xff]
      %v1127 = vpack.c.bf16 %v1126, %v1126
      %v1128 = vld [vmem:[%s1044] sm:$0xf]
      %v1129 = vld [vmem:[%s1044 + $0x4] sm:$0xf]
      %v1130 = vld [vmem:[%s1044 + $0x8] sm:$0xf]
      %v1131 = vld [vmem:[%s1044 + $0xc] sm:$0xf]
      %v1132 = vld [vmem:[%s1047] sm:$0x1]
      %v1134 = vlaneseq
      %v1135 = vshrl.u32 %v1134, 7
      %v1136 = vsub.s32 0, %v1135
      %v1137 = vrot.slane %v1132, %v1136
      %v1143 = vunpack.c.l.b16 %v1128
      %v1144 = vunpack.c.l.b16 %v1129
      %v1145 = vunpack.c.l.b16 %v1130
      %v1146 = vunpack.c.l.b16 %v1131
      %v1147 = vpack.c.b16 %v1144, %v1143
      %v1148 = vpack.c.b16 %v1146, %v1145
      %vm1151 = vcmask 261120
      %v1153 = vsel %vm1151, %v1127, 0
      %1155 = vmatprep.subr.bf16.mxu0 0
      %1156 = vmatpush1.bf16.msra.mxu0 %v1147
      %1157 = vmatprep.subr.bf16.mxu0 0
      %1158 = vmatpush1.bf16.msra.mxu0 %v1148
      %1159 = vmatprep.subr.bf16.mxu0 0
      %1160 = vmatpush1.bf16.msra.mxu0 0
      %1161 = vmatprep.subr.bf16.mxu0 0
      %1162 = vmatpush1.bf16.msra.mxu0 0
      %1163 = vmatprep.subr.bf16.mxu0 0
      %1164 = vmatpush1.bf16.msra.mxu0 0
      %1165 = vmatprep.subr.bf16.mxu0 0
      %1166 = vmatpush1.bf16.msra.mxu0 0
      %1167 = vmatprep.subr.bf16.mxu0 0
      %1168 = vmatpush1.bf16.msra.mxu0 0
      %1169 = vmatprep.subr.bf16.mxu0 0
      %1170 = vmatpush1.bf16.msra.mxu0 0
      %1171 = vmatprep.subr.bf16.mxu0 0
      %1172 = vmatpush1.bf16.msra.mxu0 0
      %1173 = vmatprep.subr.bf16.mxu0 0
      %1174 = vmatpush1.bf16.msra.mxu0 0
      %1175 = vmatprep.subr.bf16.mxu0 0
      %1176 = vmatpush1.bf16.msra.mxu0 0
      %1177 = vmatprep.subr.bf16.mxu0 0
      %1178 = vmatpush1.bf16.msra.mxu0 0
      %1179 = vmatprep.subr.bf16.mxu0 0
      %1180 = vmatpush1.bf16.msra.mxu0 0
      %1181 = vmatprep.subr.bf16.mxu0 0
      %1182 = vmatpush1.bf16.msra.mxu0 0
      %1183 = vmatprep.subr.bf16.mxu0 0
      %1184 = vmatpush1.bf16.msra.mxu0 0
      %1185 = vmatprep.subr.bf16.mxu0 0
      %1186 = vmatpush1.bf16.msra.mxu0 0
      %1187 = vmatprep.mubr.bf16.mxu0 0
      %1188 = vmatmul.mubr.bf16.gmra.mrb[0].mxu0 %v1153
      %v1189 = vpop.f32.mrb[0].mxu0
      %v1190 = vadd.f32 %v1137, %v1189
      %v1191 = vpop.f32.mrb[0].mxu0
      %v1192 = vpop.f32.mrb[0].mxu0
      %v1193 = vpop.f32.mrb[0].mxu0
      %1194 = vdwg.mxu0
      %v1195 = vld [vmem:[%s1031] sm:$0xff]
      %1197 = vrot.lane.b32.xlu0 %v1190, 120
      %v1198 = vpop.permute.xlu0 %1197
      %1200 = vrot.lane.b32.xlu0 %v1190, 112
      %v1201 = vpop.permute.xlu0 %1200
      %1203 = vrot.lane.b32.xlu0 %v1190, 104
      %v1204 = vpop.permute.xlu0 %1203
      %v1206 = vcombine.low %v1190, %v1201
      %v1207 = vcombine.high %v1190, %v1201
      %v1209 = vunpack.c.l.s4 1983009808
      %v1210 = vunpack.c.0.s8 %v1209
      %v1211 = vlaneseq
      %v1212 = vshrl.u32 %v1211, 7
      %v1213 = vsub.s32 %v1210, %v1212
      %v1214 = vrot.slane %v1206, %v1213
      %v1216 = vunpack.c.l.s4 1983009808
      %v1217 = vunpack.c.0.s8 %v1216
      %v1218 = vlaneseq
      %v1219 = vshrl.u32 %v1218, 7
      %v1220 = vsub.s32 %v1217, %v1219
      %v1221 = vrot.slane %v1207, %v1220
      %v1222 = vcombine.low %v1198, %v1204
      %v1223 = vcombine.high %v1198, %v1204
      %v1225 = vunpack.c.l.s4 1983009808
      %v1226 = vunpack.c.0.s8 %v1225
      %v1227 = vlaneseq
      %v1228 = vshrl.u32 %v1227, 7
      %v1229 = vsub.s32 %v1226, %v1228
      %v1230 = vrot.slane %v1222, %v1229
      %v1232 = vunpack.c.l.s4 1983009808
      %v1233 = vunpack.c.0.s8 %v1232
      %v1234 = vlaneseq
      %v1235 = vshrl.u32 %v1234, 7
      %v1236 = vsub.s32 %v1233, %v1235
      %v1237 = vrot.slane %v1223, %v1236
      %v1238 = vcombine.low %v1214, %v1230
      %v1239 = vcombine.high %v1214, %v1230
      %v1241 = vunpack.c.l.s4 1934713408
      %v1242 = vunpack.c.0.s8 %v1241
      %v1243 = vlaneseq
      %v1244 = vshrl.u32 %v1243, 7
      %v1245 = vsub.s32 %v1242, %v1244
      %v1246 = vrot.slane %v1238, %v1245
      %v1248 = vunpack.c.l.s4 1934713408
      %v1249 = vunpack.c.0.s8 %v1248
      %v1250 = vlaneseq
      %v1251 = vshrl.u32 %v1250, 7
      %v1252 = vsub.s32 %v1249, %v1251
      %v1253 = vrot.slane %v1239, %v1252
      %v1254 = vcombine.low %v1221, %v1237
      %v1255 = vcombine.high %v1221, %v1237
      %v1257 = vunpack.c.l.s4 1934713408
      %v1258 = vunpack.c.0.s8 %v1257
      %v1259 = vlaneseq
      %v1260 = vshrl.u32 %v1259, 7
      %v1261 = vsub.s32 %v1258, %v1260
      %v1262 = vrot.slane %v1254, %v1261
      %v1264 = vunpack.c.l.s4 1934713408
      %v1265 = vunpack.c.0.s8 %v1264
      %v1266 = vlaneseq
      %v1267 = vshrl.u32 %v1266, 7
      %v1268 = vsub.s32 %v1265, %v1267
      %v1269 = vrot.slane %v1255, %v1268
      %v1270 = vcombine.high %v1246, 0.0
      %v1271 = vcombine.high %v1253, 0.0
      %v1272 = vcombine.high %v1262, 0.0
      %v1273 = vcombine.high %v1269, 0.0
      %v1274 = vcombine.low %v1246, %v1253
      %v1276 = vunpack.c.l.s4 1983009808
      %v1277 = vunpack.c.0.s8 %v1276
      %v1278 = vlaneseq
      %v1279 = vshrl.u32 %v1278, 7
      %v1280 = vsub.s32 %v1277, %v1279
      %v1281 = vrot.slane %v1274, %v1280
      %v1282 = vcombine.low %v1270, %v1271
      %v1284 = vunpack.c.l.s4 1983009808
      %v1285 = vunpack.c.0.s8 %v1284
      %v1286 = vlaneseq
      %v1287 = vshrl.u32 %v1286, 7
      %v1288 = vsub.s32 %v1285, %v1287
      %v1289 = vrot.slane %v1282, %v1288
      %v1290 = vcombine.low %v1262, %v1269
      %v1292 = vunpack.c.l.s4 1983009808
      %v1293 = vunpack.c.0.s8 %v1292
      %v1294 = vlaneseq
      %v1295 = vshrl.u32 %v1294, 7
      %v1296 = vsub.s32 %v1293, %v1295
      %v1297 = vrot.slane %v1290, %v1296
      %v1298 = vcombine.low %v1272, %v1273
      %v1300 = vunpack.c.l.s4 1983009808
      %v1301 = vunpack.c.0.s8 %v1300
      %v1302 = vlaneseq
      %v1303 = vshrl.u32 %v1302, 7
      %v1304 = vsub.s32 %v1301, %v1303
      %v1305 = vrot.slane %v1298, %v1304
      %v1306 = vcombine.low %v1281, %v1289
      %v1307 = vcombine.high %v1281, %v1289
      %v1309 = vunpack.c.l.s4 1934713408
      %v1310 = vunpack.c.0.s8 %v1309
      %v1311 = vlaneseq
      %v1312 = vshrl.u32 %v1311, 7
      %v1313 = vsub.s32 %v1310, %v1312
      %v1314 = vrot.slane %v1306, %v1313
      %v1316 = vunpack.c.l.s4 1934713408
      %v1317 = vunpack.c.0.s8 %v1316
      %v1318 = vlaneseq
      %v1319 = vshrl.u32 %v1318, 7
      %v1320 = vsub.s32 %v1317, %v1319
      %v1321 = vrot.slane %v1307, %v1320
      %v1322 = vcombine.low %v1297, %v1305
      %v1323 = vcombine.high %v1297, %v1305
      %v1325 = vunpack.c.l.s4 1934713408
      %v1326 = vunpack.c.0.s8 %v1325
      %v1327 = vlaneseq
      %v1328 = vshrl.u32 %v1327, 7
      %v1329 = vsub.s32 %v1326, %v1328
      %v1330 = vrot.slane %v1322, %v1329
      %v1332 = vunpack.c.l.s4 1934713408
      %v1333 = vunpack.c.0.s8 %v1332
      %v1334 = vlaneseq
      %v1335 = vshrl.u32 %v1334, 7
      %v1336 = vsub.s32 %v1333, %v1335
      %v1337 = vrot.slane %v1323, %v1336
      %v1338 = vcombine.low %v1314, %v1330
      %v1339 = vcombine.high %v1314, %v1330
      %v1340 = vcombine.low %v1321, %v1337
      %v1341 = vcombine.high %v1321, %v1337
      %v1342 = vpack.c.bf16 %v1338, %v1338
      %v1343 = vpack.c.bf16 %v1339, %v1339
      %v1344 = vpack.c.bf16 %v1340, %v1340
      %v1345 = vpack.c.bf16 %v1341, %v1341
      %1346 = vrot.lane.b32.xlu0 %v1190, 96
      %v1347 = vpop.permute.xlu0 %1346
      %1348 = vrot.lane.b32.xlu0 %v1198, 96
      %v1349 = vpop.permute.xlu0 %1348
      %1350 = vrot.lane.b32.xlu0 %v1201, 96
      %v1351 = vpop.permute.xlu0 %1350
      %1352 = vrot.lane.b32.xlu0 %v1204, 96
      %v1353 = vpop.permute.xlu0 %1352
      %v1358 = vcombine.low %v1347, %v1351
      %v1359 = vcombine.high %v1347, %v1351
      %v1361 = vunpack.c.l.s4 1983009808
      %v1362 = vunpack.c.0.s8 %v1361
      %v1363 = vlaneseq
      %v1364 = vshrl.u32 %v1363, 7
      %v1365 = vsub.s32 %v1362, %v1364
      %v1366 = vrot.slane %v1358, %v1365
      %v1368 = vunpack.c.l.s4 1983009808
      %v1369 = vunpack.c.0.s8 %v1368
      %v1370 = vlaneseq
      %v1371 = vshrl.u32 %v1370, 7
      %v1372 = vsub.s32 %v1369, %v1371
      %v1373 = vrot.slane %v1359, %v1372
      %v1374 = vcombine.low %v1349, %v1353
      %v1375 = vcombine.high %v1349, %v1353
      %v1377 = vunpack.c.l.s4 1983009808
      %v1378 = vunpack.c.0.s8 %v1377
      %v1379 = vlaneseq
      %v1380 = vshrl.u32 %v1379, 7
      %v1381 = vsub.s32 %v1378, %v1380
      %v1382 = vrot.slane %v1374, %v1381
      %v1384 = vunpack.c.l.s4 1983009808
      %v1385 = vunpack.c.0.s8 %v1384
      %v1386 = vlaneseq
      %v1387 = vshrl.u32 %v1386, 7
      %v1388 = vsub.s32 %v1385, %v1387
      %v1389 = vrot.slane %v1375, %v1388
      %v1390 = vcombine.low %v1366, %v1382
      %v1391 = vcombine.high %v1366, %v1382
      %v1393 = vunpack.c.l.s4 1934713408
      %v1394 = vunpack.c.0.s8 %v1393
      %v1395 = vlaneseq
      %v1396 = vshrl.u32 %v1395, 7
      %v1397 = vsub.s32 %v1394, %v1396
      %v1398 = vrot.slane %v1390, %v1397
      %v1400 = vunpack.c.l.s4 1934713408
      %v1401 = vunpack.c.0.s8 %v1400
      %v1402 = vlaneseq
      %v1403 = vshrl.u32 %v1402, 7
      %v1404 = vsub.s32 %v1401, %v1403
      %v1405 = vrot.slane %v1391, %v1404
      %v1406 = vcombine.low %v1373, %v1389
      %v1407 = vcombine.high %v1373, %v1389
      %v1409 = vunpack.c.l.s4 1934713408
      %v1410 = vunpack.c.0.s8 %v1409
      %v1411 = vlaneseq
      %v1412 = vshrl.u32 %v1411, 7
      %v1413 = vsub.s32 %v1410, %v1412
      %v1414 = vrot.slane %v1406, %v1413
      %v1416 = vunpack.c.l.s4 1934713408
      %v1417 = vunpack.c.0.s8 %v1416
      %v1418 = vlaneseq
      %v1419 = vshrl.u32 %v1418, 7
      %v1420 = vsub.s32 %v1417, %v1419
      %v1421 = vrot.slane %v1407, %v1420
      %v1422 = vcombine.high %v1398, 0.0
      %v1423 = vcombine.high %v1405, 0.0
      %v1424 = vcombine.high %v1414, 0.0
      %v1425 = vcombine.high %v1421, 0.0
      %v1426 = vcombine.low %v1398, %v1405
      %v1428 = vunpack.c.l.s4 1983009808
      %v1429 = vunpack.c.0.s8 %v1428
      %v1430 = vlaneseq
      %v1431 = vshrl.u32 %v1430, 7
      %v1432 = vsub.s32 %v1429, %v1431
      %v1433 = vrot.slane %v1426, %v1432
      %v1434 = vcombine.low %v1422, %v1423
      %v1436 = vunpack.c.l.s4 1983009808
      %v1437 = vunpack.c.0.s8 %v1436
      %v1438 = vlaneseq
      %v1439 = vshrl.u32 %v1438, 7
      %v1440 = vsub.s32 %v1437, %v1439
      %v1441 = vrot.slane %v1434, %v1440
      %v1442 = vcombine.low %v1414, %v1421
      %v1444 = vunpack.c.l.s4 1983009808
      %v1445 = vunpack.c.0.s8 %v1444
      %v1446 = vlaneseq
      %v1447 = vshrl.u32 %v1446, 7
      %v1448 = vsub.s32 %v1445, %v1447
      %v1449 = vrot.slane %v1442, %v1448
      %v1450 = vcombine.low %v1424, %v1425
      %v1452 = vunpack.c.l.s4 1983009808
      %v1453 = vunpack.c.0.s8 %v1452
      %v1454 = vlaneseq
      %v1455 = vshrl.u32 %v1454, 7
      %v1456 = vsub.s32 %v1453, %v1455
      %v1457 = vrot.slane %v1450, %v1456
      %v1458 = vcombine.low %v1433, %v1441
      %v1459 = vcombine.high %v1433, %v1441
      %v1461 = vunpack.c.l.s4 1934713408
      %v1462 = vunpack.c.0.s8 %v1461
      %v1463 = vlaneseq
      %v1464 = vshrl.u32 %v1463, 7
      %v1465 = vsub.s32 %v1462, %v1464
      %v1466 = vrot.slane %v1458, %v1465
      %v1468 = vunpack.c.l.s4 1934713408
      %v1469 = vunpack.c.0.s8 %v1468
      %v1470 = vlaneseq
      %v1471 = vshrl.u32 %v1470, 7
      %v1472 = vsub.s32 %v1469, %v1471
      %v1473 = vrot.slane %v1459, %v1472
      %v1474 = vcombine.low %v1449, %v1457
      %v1475 = vcombine.high %v1449, %v1457
      %v1477 = vunpack.c.l.s4 1934713408
      %v1478 = vunpack.c.0.s8 %v1477
      %v1479 = vlaneseq
      %v1480 = vshrl.u32 %v1479, 7
      %v1481 = vsub.s32 %v1478, %v1480
      %v1482 = vrot.slane %v1474, %v1481
      %v1484 = vunpack.c.l.s4 1934713408
      %v1485 = vunpack.c.0.s8 %v1484
      %v1486 = vlaneseq
      %v1487 = vshrl.u32 %v1486, 7
      %v1488 = vsub.s32 %v1485, %v1487
      %v1489 = vrot.slane %v1475, %v1488
      %v1490 = vcombine.low %v1466, %v1482
      %v1491 = vcombine.high %v1466, %v1482
      %v1492 = vcombine.low %v1473, %v1489
      %v1493 = vcombine.high %v1473, %v1489
      %v1494 = vpack.c.bf16 %v1490, %v1490
      %v1495 = vpack.c.bf16 %v1491, %v1491
      %v1496 = vpack.c.bf16 %v1492, %v1492
      %v1497 = vpack.c.bf16 %v1493, %v1493
      %1498 = vrot.lane.b32.xlu0 %v1190, 64
      %v1499 = vpop.permute.xlu0 %1498
      %1500 = vrot.lane.b32.xlu0 %v1198, 64
      %v1501 = vpop.permute.xlu0 %1500
      %1502 = vrot.lane.b32.xlu0 %v1201, 64
      %v1503 = vpop.permute.xlu0 %1502
      %1504 = vrot.lane.b32.xlu0 %v1204, 64
      %v1505 = vpop.permute.xlu0 %1504
      %v1510 = vcombine.low %v1499, %v1503
      %v1511 = vcombine.high %v1499, %v1503
      %v1513 = vunpack.c.l.s4 1983009808
      %v1514 = vunpack.c.0.s8 %v1513
      %v1515 = vlaneseq
      %v1516 = vshrl.u32 %v1515, 7
      %v1517 = vsub.s32 %v1514, %v1516
      %v1518 = vrot.slane %v1510, %v1517
      %v1520 = vunpack.c.l.s4 1983009808
      %v1521 = vunpack.c.0.s8 %v1520
      %v1522 = vlaneseq
      %v1523 = vshrl.u32 %v1522, 7
      %v1524 = vsub.s32 %v1521, %v1523
      %v1525 = vrot.slane %v1511, %v1524
      %v1526 = vcombine.low %v1501, %v1505
      %v1527 = vcombine.high %v1501, %v1505
      %v1529 = vunpack.c.l.s4 1983009808
      %v1530 = vunpack.c.0.s8 %v1529
      %v1531 = vlaneseq
      %v1532 = vshrl.u32 %v1531, 7
      %v1533 = vsub.s32 %v1530, %v1532
      %v1534 = vrot.slane %v1526, %v1533
      %v1536 = vunpack.c.l.s4 1983009808
      %v1537 = vunpack.c.0.s8 %v1536
      %v1538 = vlaneseq
      %v1539 = vshrl.u32 %v1538, 7
      %v1540 = vsub.s32 %v1537, %v1539
      %v1541 = vrot.slane %v1527, %v1540
      %v1542 = vcombine.low %v1518, %v1534
      %v1543 = vcombine.high %v1518, %v1534
      %v1545 = vunpack.c.l.s4 1934713408
      %v1546 = vunpack.c.0.s8 %v1545
      %v1547 = vlaneseq
      %v1548 = vshrl.u32 %v1547, 7
      %v1549 = vsub.s32 %v1546, %v1548
      %v1550 = vrot.slane %v1542, %v1549
      %v1552 = vunpack.c.l.s4 1934713408
      %v1553 = vunpack.c.0.s8 %v1552
      %v1554 = vlaneseq
      %v1555 = vshrl.u32 %v1554, 7
      %v1556 = vsub.s32 %v1553, %v1555
      %v1557 = vrot.slane %v1543, %v1556
      %v1558 = vcombine.low %v1525, %v1541
      %v1559 = vcombine.high %v1525, %v1541
      %v1561 = vunpack.c.l.s4 1934713408
      %v1562 = vunpack.c.0.s8 %v1561
      %v1563 = vlaneseq
      %v1564 = vshrl.u32 %v1563, 7
      %v1565 = vsub.s32 %v1562, %v1564
      %v1566 = vrot.slane %v1558, %v1565
      %v1568 = vunpack.c.l.s4 1934713408
      %v1569 = vunpack.c.0.s8 %v1568
      %v1570 = vlaneseq
      %v1571 = vshrl.u32 %v1570, 7
      %v1572 = vsub.s32 %v1569, %v1571
      %v1573 = vrot.slane %v1559, %v1572
      %v1574 = vcombine.high %v1550, 0.0
      %v1575 = vcombine.high %v1557, 0.0
      %v1576 = vcombine.high %v1566, 0.0
      %v1577 = vcombine.high %v1573, 0.0
      %v1578 = vcombine.low %v1550, %v1557
      %v1580 = vunpack.c.l.s4 1983009808
      %v1581 = vunpack.c.0.s8 %v1580
      %v1582 = vlaneseq
      %v1583 = vshrl.u32 %v1582, 7
      %v1584 = vsub.s32 %v1581, %v1583
      %v1585 = vrot.slane %v1578, %v1584
      %v1586 = vcombine.low %v1574, %v1575
      %v1588 = vunpack.c.l.s4 1983009808
      %v1589 = vunpack.c.0.s8 %v1588
      %v1590 = vlaneseq
      %v1591 = vshrl.u32 %v1590, 7
      %v1592 = vsub.s32 %v1589, %v1591
      %v1593 = vrot.slane %v1586, %v1592
      %v1594 = vcombine.low %v1566, %v1573
      %v1596 = vunpack.c.l.s4 1983009808
      %v1597 = vunpack.c.0.s8 %v1596
      %v1598 = vlaneseq
      %v1599 = vshrl.u32 %v1598, 7
      %v1600 = vsub.s32 %v1597, %v1599
      %v1601 = vrot.slane %v1594, %v1600
      %v1602 = vcombine.low %v1576, %v1577
      %v1604 = vunpack.c.l.s4 1983009808
      %v1605 = vunpack.c.0.s8 %v1604
      %v1606 = vlaneseq
      %v1607 = vshrl.u32 %v1606, 7
      %v1608 = vsub.s32 %v1605, %v1607
      %v1609 = vrot.slane %v1602, %v1608
      %v1610 = vcombine.low %v1585, %v1593
      %v1611 = vcombine.high %v1585, %v1593
      %v1613 = vunpack.c.l.s4 1934713408
      %v1614 = vunpack.c.0.s8 %v1613
      %v1615 = vlaneseq
      %v1616 = vshrl.u32 %v1615, 7
      %v1617 = vsub.s32 %v1614, %v1616
      %v1618 = vrot.slane %v1610, %v1617
      %v1620 = vunpack.c.l.s4 1934713408
      %v1621 = vunpack.c.0.s8 %v1620
      %v1622 = vlaneseq
      %v1623 = vshrl.u32 %v1622, 7
      %v1624 = vsub.s32 %v1621, %v1623
      %v1625 = vrot.slane %v1611, %v1624
      %v1626 = vcombine.low %v1601, %v1609
      %v1627 = vcombine.high %v1601, %v1609
      %v1629 = vunpack.c.l.s4 1934713408
      %v1630 = vunpack.c.0.s8 %v1629
      %v1631 = vlaneseq
      %v1632 = vshrl.u32 %v1631, 7
      %v1633 = vsub.s32 %v1630, %v1632
      %v1634 = vrot.slane %v1626, %v1633
      %v1636 = vunpack.c.l.s4 1934713408
      %v1637 = vunpack.c.0.s8 %v1636
      %v1638 = vlaneseq
      %v1639 = vshrl.u32 %v1638, 7
      %v1640 = vsub.s32 %v1637, %v1639
      %v1641 = vrot.slane %v1627, %v1640
      %v1642 = vcombine.low %v1618, %v1634
      %v1643 = vcombine.high %v1618, %v1634
      %v1644 = vcombine.low %v1625, %v1641
      %v1645 = vcombine.high %v1625, %v1641
      %v1646 = vpack.c.bf16 %v1642, %v1642
      %v1647 = vpack.c.bf16 %v1643, %v1643
      %v1648 = vpack.c.bf16 %v1644, %v1644
      %v1649 = vpack.c.bf16 %v1645, %v1645
      %vm1650 = vcmask 64512
      %v1652 = vsel %vm1650, %v1342, 0
      %v1655 = vsel %vm1650, %v1494, 0
      %1657 = vmatprep.subr.bf16.mxu0 0
      %1658 = vmatpush1.bf16.xpose.msra.mxu0 %v1655
      %1659 = vmatprep.subr.bf16.mxu0 0
      %1660 = vmatpush1.bf16.xpose.msra.mxu0 0
      %1661 = vmatprep.subr.bf16.mxu0 0
      %1662 = vmatpush1.bf16.xpose.msra.mxu0 0
      %1663 = vmatprep.subr.bf16.mxu0 0
      %1664 = vmatpush1.bf16.xpose.msra.mxu0 0
      %1665 = vmatprep.subr.bf16.mxu0 0
      %1666 = vmatpush1.bf16.xpose.msra.mxu0 0
      %1667 = vmatprep.subr.bf16.mxu0 0
      %1668 = vmatpush1.bf16.xpose.msra.mxu0 0
      %1669 = vmatprep.subr.bf16.mxu0 0
      %1670 = vmatpush1.bf16.xpose.msra.mxu0 0
      %1671 = vmatprep.subr.bf16.mxu0 0
      %1672 = vmatpush1.bf16.xpose.msra.mxu0 0
      %1673 = vmatprep.subr.bf16.mxu0 0
      %1674 = vmatpush1.bf16.xpose.msra.mxu0 0
      %1675 = vmatprep.subr.bf16.mxu0 0
      %1676 = vmatpush1.bf16.xpose.msra.mxu0 0
      %1677 = vmatprep.subr.bf16.mxu0 0
      %1678 = vmatpush1.bf16.xpose.msra.mxu0 0
      %1679 = vmatprep.subr.bf16.mxu0 0
      %1680 = vmatpush1.bf16.xpose.msra.mxu0 0
      %1681 = vmatprep.subr.bf16.mxu0 0
      %1682 = vmatpush1.bf16.xpose.msra.mxu0 0
      %1683 = vmatprep.subr.bf16.mxu0 0
      %1684 = vmatpush1.bf16.xpose.msra.mxu0 0
      %1685 = vmatprep.subr.bf16.mxu0 0
      %1686 = vmatpush1.bf16.xpose.msra.mxu0 0
      %1687 = vmatprep.subr.bf16.mxu0 0
      %1688 = vmatpush1.bf16.xpose.msra.mxu0 0
      %1689 = vmatprep.mubr.bf16.mxu0 0
      %1690 = vmatmul.mubr.bf16.gmra.mrb[0].mxu0 %v1652
      %v1691 = vpop.f32.mrb[0].mxu0
      %v1692 = vadd.f32 0.0, %v1691
      %v1693 = vpop.f32.mrb[0].mxu0
      %v1694 = vpop.f32.mrb[0].mxu0
      %v1695 = vpop.f32.mrb[0].mxu0
      %1696 = vdwg.mxu0
      %v1698 = vsel %vm1650, %v1343, 0
      %v1701 = vsel %vm1650, %v1495, 0
      %1703 = vmatprep.subr.bf16.mxu0 0
      %1704 = vmatpush1.bf16.xpose.msra.mxu0 %v1701
      %1705 = vmatprep.subr.bf16.mxu0 0
      %1706 = vmatpush1.bf16.xpose.msra.mxu0 0
      %1707 = vmatprep.subr.bf16.mxu0 0
      %1708 = vmatpush1.bf16.xpose.msra.mxu0 0
      %1709 = vmatprep.subr.bf16.mxu0 0
      %1710 = vmatpush1.bf16.xpose.msra.mxu0 0
      %1711 = vmatprep.subr.bf16.mxu0 0
      %1712 = vmatpush1.bf16.xpose.msra.mxu0 0
      %1713 = vmatprep.subr.bf16.mxu0 0
      %1714 = vmatpush1.bf16.xpose.msra.mxu0 0
      %1715 = vmatprep.subr.bf16.mxu0 0
      %1716 = vmatpush1.bf16.xpose.msra.mxu0 0
      %1717 = vmatprep.subr.bf16.mxu0 0
      %1718 = vmatpush1.bf16.xpose.msra.mxu0 0
      %1719 = vmatprep.subr.bf16.mxu0 0
      %1720 = vmatpush1.bf16.xpose.msra.mxu0 0
      %1721 = vmatprep.subr.bf16.mxu0 0
      %1722 = vmatpush1.bf16.xpose.msra.mxu0 0
      %1723 = vmatprep.subr.bf16.mxu0 0
      %1724 = vmatpush1.bf16.xpose.msra.mxu0 0
      %1725 = vmatprep.subr.bf16.mxu0 0
      %1726 = vmatpush1.bf16.xpose.msra.mxu0 0
      %1727 = vmatprep.subr.bf16.mxu0 0
      %1728 = vmatpush1.bf16.xpose.msra.mxu0 0
      %1729 = vmatprep.subr.bf16.mxu0 0
      %1730 = vmatpush1.bf16.xpose.msra.mxu0 0
      %1731 = vmatprep.subr.bf16.mxu0 0
      %1732 = vmatpush1.bf16.xpose.msra.mxu0 0
      %1733 = vmatprep.subr.bf16.mxu0 0
      %1734 = vmatpush1.bf16.xpose.msra.mxu0 0
      %1735 = vmatprep.mubr.bf16.mxu0 0
      %1736 = vmatmul.mubr.bf16.gmra.mrb[0].mxu0 %v1698
      %v1737 = vpop.f32.mrb[0].mxu0
      %v1738 = vadd.f32 0.0, %v1737
      %v1739 = vpop.f32.mrb[0].mxu0
      %v1740 = vpop.f32.mrb[0].mxu0
      %v1741 = vpop.f32.mrb[0].mxu0
      %1742 = vdwg.mxu0
      %v1744 = vsel %vm1650, %v1344, 0
      %v1747 = vsel %vm1650, %v1496, 0
      %1749 = vmatprep.subr.bf16.mxu0 0
      %1750 = vmatpush1.bf16.xpose.msra.mxu0 %v1747
      %1751 = vmatprep.subr.bf16.mxu0 0
      %1752 = vmatpush1.bf16.xpose.msra.mxu0 0
      %1753 = vmatprep.subr.bf16.mxu0 0
      %1754 = vmatpush1.bf16.xpose.msra.mxu0 0
      %1755 = vmatprep.subr.bf16.mxu0 0
      %1756 = vmatpush1.bf16.xpose.msra.mxu0 0
      %1757 = vmatprep.subr.bf16.mxu0 0
      %1758 = vmatpush1.bf16.xpose.msra.mxu0 0
      %1759 = vmatprep.subr.bf16.mxu0 0
      %1760 = vmatpush1.bf16.xpose.msra.mxu0 0
      %1761 = vmatprep.subr.bf16.mxu0 0
      %1762 = vmatpush1.bf16.xpose.msra.mxu0 0
      %1763 = vmatprep.subr.bf16.mxu0 0
      %1764 = vmatpush1.bf16.xpose.msra.mxu0 0
      %1765 = vmatprep.subr.bf16.mxu0 0
      %1766 = vmatpush1.bf16.xpose.msra.mxu0 0
      %1767 = vmatprep.subr.bf16.mxu0 0
      %1768 = vmatpush1.bf16.xpose.msra.mxu0 0
      %1769 = vmatprep.subr.bf16.mxu0 0
      %1770 = vmatpush1.bf16.xpose.msra.mxu0 0
      %1771 = vmatprep.subr.bf16.mxu0 0
      %1772 = vmatpush1.bf16.xpose.msra.mxu0 0
      %1773 = vmatprep.subr.bf16.mxu0 0
      %1774 = vmatpush1.bf16.xpose.msra.mxu0 0
      %1775 = vmatprep.subr.bf16.mxu0 0
      %1776 = vmatpush1.bf16.xpose.msra.mxu0 0
      %1777 = vmatprep.subr.bf16.mxu0 0
      %1778 = vmatpush1.bf16.xpose.msra.mxu0 0
      %1779 = vmatprep.subr.bf16.mxu0 0
      %1780 = vmatpush1.bf16.xpose.msra.mxu0 0
      %1781 = vmatprep.mubr.bf16.mxu0 0
      %1782 = vmatmul.mubr.bf16.gmra.mrb[0].mxu0 %v1744
      %v1783 = vpop.f32.mrb[0].mxu0
      %v1784 = vadd.f32 0.0, %v1783
      %v1785 = vpop.f32.mrb[0].mxu0
      %v1786 = vpop.f32.mrb[0].mxu0
      %v1787 = vpop.f32.mrb[0].mxu0
      %1788 = vdwg.mxu0
      %v1790 = vsel %vm1650, %v1345, 0
      %v1793 = vsel %vm1650, %v1497, 0
      %1795 = vmatprep.subr.bf16.mxu0 0
      %1796 = vmatpush1.bf16.xpose.msra.mxu0 %v1793
      %1797 = vmatprep.subr.bf16.mxu0 0
      %1798 = vmatpush1.bf16.xpose.msra.mxu0 0
      %1799 = vmatprep.subr.bf16.mxu0 0
      %1800 = vmatpush1.bf16.xpose.msra.mxu0 0
      %1801 = vmatprep.subr.bf16.mxu0 0
      %1802 = vmatpush1.bf16.xpose.msra.mxu0 0
      %1803 = vmatprep.subr.bf16.mxu0 0
      %1804 = vmatpush1.bf16.xpose.msra.mxu0 0
      %1805 = vmatprep.subr.bf16.mxu0 0
      %1806 = vmatpush1.bf16.xpose.msra.mxu0 0
      %1807 = vmatprep.subr.bf16.mxu0 0
      %1808 = vmatpush1.bf16.xpose.msra.mxu0 0
      %1809 = vmatprep.subr.bf16.mxu0 0
      %1810 = vmatpush1.bf16.xpose.msra.mxu0 0
      %1811 = vmatprep.subr.bf16.mxu0 0
      %1812 = vmatpush1.bf16.xpose.msra.mxu0 0
      %1813 = vmatprep.subr.bf16.mxu0 0
      %1814 = vmatpush1.bf16.xpose.msra.mxu0 0
      %1815 = vmatprep.subr.bf16.mxu0 0
      %1816 = vmatpush1.bf16.xpose.msra.mxu0 0
      %1817 = vmatprep.subr.bf16.mxu0 0
      %1818 = vmatpush1.bf16.xpose.msra.mxu0 0
      %1819 = vmatprep.subr.bf16.mxu0 0
      %1820 = vmatpush1.bf16.xpose.msra.mxu0 0
      %1821 = vmatprep.subr.bf16.mxu0 0
      %1822 = vmatpush1.bf16.xpose.msra.mxu0 0
      %1823 = vmatprep.subr.bf16.mxu0 0
      %1824 = vmatpush1.bf16.xpose.msra.mxu0 0
      %1825 = vmatprep.subr.bf16.mxu0 0
      %1826 = vmatpush1.bf16.xpose.msra.mxu0 0
      %1827 = vmatprep.mubr.bf16.mxu0 0
      %1828 = vmatmul.mubr.bf16.gmra.mrb[0].mxu0 %v1790
      %v1829 = vpop.f32.mrb[0].mxu0
      %v1830 = vadd.f32 0.0, %v1829
      %v1831 = vpop.f32.mrb[0].mxu0
      %v1832 = vpop.f32.mrb[0].mxu0
      %v1833 = vpop.f32.mrb[0].mxu0
      %1834 = vdwg.mxu0
      %v1835 = vmul.f32 %v1692, 0.35355338
      %v1836 = vmul.f32 %v1738, 0.35355338
      %v1837 = vmul.f32 %v1784, 0.35355338
      %v1838 = vmul.f32 %v1830, 0.35355338
      %vm1839 = vcmp.eq.f32.partialorder %v1195, 0.0
      %v1840 = vsel %vm1839, -10000.0, 0.0
      %v1841 = vadd.f32 %v1835, %v1840
      %v1842 = vadd.f32 %v1836, %v1840
      %v1843 = vadd.f32 %v1837, %v1840
      %v1844 = vadd.f32 %v1838, %v1840
      %v1845 = vsel %vm1650, %v1841, -inf
      %1846 = vmax.xlane.f32.xlu0 %v1845
      %v1847 = vpop.xlane.xlu0 %1846
      %v1848 = vsel %vm1650, %v1842, -inf
      %1849 = vmax.xlane.f32.xlu0 %v1848
      %v1850 = vpop.xlane.xlu0 %1849
      %v1851 = vsel %vm1650, %v1843, -inf
      %1852 = vmax.xlane.f32.xlu0 %v1851
      %v1853 = vpop.xlane.xlu0 %1852
      %v1854 = vsel %vm1650, %v1844, -inf
      %1855 = vmax.xlane.f32.xlu0 %v1854
      %v1856 = vpop.xlane.xlu0 %1855
      %v1857 = vsub.f32 %v1841, %v1847
      %v1858 = vsub.f32 %v1842, %v1850
      %v1859 = vsub.f32 %v1843, %v1853
      %v1860 = vsub.f32 %v1844, %v1856
      %v1861 = vmul.f32 %v1857, 1.442695
      %v1862 = vpow.pop %v1861
      %v1863 = vmul.f32 %v1858, 1.442695
      %v1864 = vpow.pop %v1863
      %v1865 = vmul.f32 %v1859, 1.442695
      %v1866 = vpow.pop %v1865
      %v1867 = vmul.f32 %v1860, 1.442695
      %v1868 = vpow.pop %v1867
      %v1869 = vsel %vm1650, %v1862, 0.0
      %1870 = vadd.xlane.f32.xlu0 %v1869
      %v1871 = vpop.xlane.xlu0 %1870
      %v1872 = vsel %vm1650, %v1864, 0.0
      %1873 = vadd.xlane.f32.xlu0 %v1872
      %v1874 = vpop.xlane.xlu0 %1873
      %v1875 = vsel %vm1650, %v1866, 0.0
      %1876 = vadd.xlane.f32.xlu0 %v1875
      %v1877 = vpop.xlane.xlu0 %1876
      %v1878 = vsel %vm1650, %v1868, 0.0
      %1879 = vadd.xlane.f32.xlu0 %v1878
      %v1880 = vpop.xlane.xlu0 %1879
      %v1881 = vrcp.pop %v1871
      %v1882 = vrcp.pop %v1874
      %v1883 = vrcp.pop %v1877
      %v1884 = vrcp.pop %v1880
      %v1885 = vmul.f32 %v1862, %v1881
      %v1886 = vmul.f32 %v1864, %v1882
      %v1887 = vmul.f32 %v1866, %v1883
      %v1888 = vmul.f32 %v1868, %v1884
      %v1889 = vpack.c.bf16 %v1885, %v1885
      %v1890 = vpack.c.bf16 %v1886, %v1886
      %v1891 = vpack.c.bf16 %v1887, %v1887
      %v1892 = vpack.c.bf16 %v1888, %v1888
      %v1894 = vsel %vm1650, %v1889, 0
      %vm1896 = vcmask 1043456
      %v1898 = vsel %vm1896, %v1646, 0
      %1900 = vmatprep.subr.bf16.mxu0 0
      %1901 = vmatpush1.bf16.msra.mxu0 %v1898
      %1902 = vmatprep.subr.bf16.mxu0 0
      %1903 = vmatpush1.bf16.msra.mxu0 0
      %1904 = vmatprep.subr.bf16.mxu0 0
      %1905 = vmatpush1.bf16.msra.mxu0 0
      %1906 = vmatprep.subr.bf16.mxu0 0
      %1907 = vmatpush1.bf16.msra.mxu0 0
      %1908 = vmatprep.subr.bf16.mxu0 0
      %1909 = vmatpush1.bf16.msra.mxu0 0
      %1910 = vmatprep.subr.bf16.mxu0 0
      %1911 = vmatpush1.bf16.msra.mxu0 0
      %1912 = vmatprep.subr.bf16.mxu0 0
      %1913 = vmatpush1.bf16.msra.mxu0 0
      %1914 = vmatprep.subr.bf16.mxu0 0
      %1915 = vmatpush1.bf16.msra.mxu0 0
      %1916 = vmatprep.subr.bf16.mxu0 0
      %1917 = vmatpush1.bf16.msra.mxu0 0
      %1918 = vmatprep.subr.bf16.mxu0 0
      %1919 = vmatpush1.bf16.msra.mxu0 0
      %1920 = vmatprep.subr.bf16.mxu0 0
      %1921 = vmatpush1.bf16.msra.mxu0 0
      %1922 = vmatprep.subr.bf16.mxu0 0
      %1923 = vmatpush1.bf16.msra.mxu0 0
      %1924 = vmatprep.subr.bf16.mxu0 0
      %1925 = vmatpush1.bf16.msra.mxu0 0
      %1926 = vmatprep.subr.bf16.mxu0 0
      %1927 = vmatpush1.bf16.msra.mxu0 0
      %1928 = vmatprep.subr.bf16.mxu0 0
      %1929 = vmatpush1.bf16.msra.mxu0 0
      %1930 = vmatprep.subr.bf16.mxu0 0
      %1931 = vmatpush1.bf16.msra.mxu0 0
      %1932 = vmatprep.mubr.bf16.mxu0 0
      %1933 = vmatmul.mubr.bf16.gmra.mrb[0].mxu0 %v1894
      %v1934 = vpop.f32.mrb[0].mxu0
      %v1935 = vadd.f32 0.0, %v1934
      %v1936 = vpop.f32.mrb[0].mxu0
      %v1937 = vpop.f32.mrb[0].mxu0
      %v1938 = vpop.f32.mrb[0].mxu0
      %1939 = vdwg.mxu0
      %v1941 = vsel %vm1650, %v1890, 0
      %v1944 = vsel %vm1896, %v1647, 0
      %1946 = vmatprep.subr.bf16.mxu0 0
      %1947 = vmatpush1.bf16.msra.mxu0 %v1944
      %1948 = vmatprep.subr.bf16.mxu0 0
      %1949 = vmatpush1.bf16.msra.mxu0 0
      %1950 = vmatprep.subr.bf16.mxu0 0
      %1951 = vmatpush1.bf16.msra.mxu0 0
      %1952 = vmatprep.subr.bf16.mxu0 0
      %1953 = vmatpush1.bf16.msra.mxu0 0
      %1954 = vmatprep.subr.bf16.mxu0 0
      %1955 = vmatpush1.bf16.msra.mxu0 0
      %1956 = vmatprep.subr.bf16.mxu0 0
      %1957 = vmatpush1.bf16.msra.mxu0 0
      %1958 = vmatprep.subr.bf16.mxu0 0
      %1959 = vmatpush1.bf16.msra.mxu0 0
      %1960 = vmatprep.subr.bf16.mxu0 0
      %1961 = vmatpush1.bf16.msra.mxu0 0
      %1962 = vmatprep.subr.bf16.mxu0 0
      %1963 = vmatpush1.bf16.msra.mxu0 0
      %1964 = vmatprep.subr.bf16.mxu0 0
      %1965 = vmatpush1.bf16.msra.mxu0 0
      %1966 = vmatprep.subr.bf16.mxu0 0
      %1967 = vmatpush1.bf16.msra.mxu0 0
      %1968 = vmatprep.subr.bf16.mxu0 0
      %1969 = vmatpush1.bf16.msra.mxu0 0
      %1970 = vmatprep.subr.bf16.mxu0 0
      %1971 = vmatpush1.bf16.msra.mxu0 0
      %1972 = vmatprep.subr.bf16.mxu0 0
      %1973 = vmatpush1.bf16.msra.mxu0 0
      %1974 = vmatprep.subr.bf16.mxu0 0
      %1975 = vmatpush1.bf16.msra.mxu0 0
      %1976 = vmatprep.subr.bf16.mxu0 0
      %1977 = vmatpush1.bf16.msra.mxu0 0
      %1978 = vmatprep.mubr.bf16.mxu0 0
      %1979 = vmatmul.mubr.bf16.gmra.mrb[0].mxu0 %v1941
      %v1980 = vpop.f32.mrb[0].mxu0
      %v1981 = vadd.f32 0.0, %v1980
      %v1982 = vpop.f32.mrb[0].mxu0
      %v1983 = vpop.f32.mrb[0].mxu0
      %v1984 = vpop.f32.mrb[0].mxu0
      %1985 = vdwg.mxu0
      %v1987 = vsel %vm1650, %v1891, 0
      %v1990 = vsel %vm1896, %v1648, 0
      %1992 = vmatprep.subr.bf16.mxu0 0
      %1993 = vmatpush1.bf16.msra.mxu0 %v1990
      %1994 = vmatprep.subr.bf16.mxu0 0
      %1995 = vmatpush1.bf16.msra.mxu0 0
      %1996 = vmatprep.subr.bf16.mxu0 0
      %1997 = vmatpush1.bf16.msra.mxu0 0
      %1998 = vmatprep.subr.bf16.mxu0 0
      %1999 = vmatpush1.bf16.msra.mxu0 0
      %2000 = vmatprep.subr.bf16.mxu0 0
      %2001 = vmatpush1.bf16.msra.mxu0 0
      %2002 = vmatprep.subr.bf16.mxu0 0
      %2003 = vmatpush1.bf16.msra.mxu0 0
      %2004 = vmatprep.subr.bf16.mxu0 0
      %2005 = vmatpush1.bf16.msra.mxu0 0
      %2006 = vmatprep.subr.bf16.mxu0 0
      %2007 = vmatpush1.bf16.msra.mxu0 0
      %2008 = vmatprep.subr.bf16.mxu0 0
      %2009 = vmatpush1.bf16.msra.mxu0 0
      %2010 = vmatprep.subr.bf16.mxu0 0
      %2011 = vmatpush1.bf16.msra.mxu0 0
      %2012 = vmatprep.subr.bf16.mxu0 0
      %2013 = vmatpush1.bf16.msra.mxu0 0
      %2014 = vmatprep.subr.bf16.mxu0 0
      %2015 = vmatpush1.bf16.msra.mxu0 0
      %2016 = vmatprep.subr.bf16.mxu0 0
      %2017 = vmatpush1.bf16.msra.mxu0 0
      %2018 = vmatprep.subr.bf16.mxu0 0
      %2019 = vmatpush1.bf16.msra.mxu0 0
      %2020 = vmatprep.subr.bf16.mxu0 0
      %2021 = vmatpush1.bf16.msra.mxu0 0
      %2022 = vmatprep.subr.bf16.mxu0 0
      %2023 = vmatpush1.bf16.msra.mxu0 0
      %2024 = vmatprep.mubr.bf16.mxu0 0
      %2025 = vmatmul.mubr.bf16.gmra.mrb[0].mxu0 %v1987
      %v2026 = vpop.f32.mrb[0].mxu0
      %v2027 = vadd.f32 0.0, %v2026
      %v2028 = vpop.f32.mrb[0].mxu0
      %v2029 = vpop.f32.mrb[0].mxu0
      %v2030 = vpop.f32.mrb[0].mxu0
      %2031 = vdwg.mxu0
      %v2033 = vsel %vm1650, %v1892, 0
      %v2036 = vsel %vm1896, %v1649, 0
      %2038 = vmatprep.subr.bf16.mxu0 0
      %2039 = vmatpush1.bf16.msra.mxu0 %v2036
      %2040 = vmatprep.subr.bf16.mxu0 0
      %2041 = vmatpush1.bf16.msra.mxu0 0
      %2042 = vmatprep.subr.bf16.mxu0 0
      %2043 = vmatpush1.bf16.msra.mxu0 0
      %2044 = vmatprep.subr.bf16.mxu0 0
      %2045 = vmatpush1.bf16.msra.mxu0 0
      %2046 = vmatprep.subr.bf16.mxu0 0
      %2047 = vmatpush1.bf16.msra.mxu0 0
      %2048 = vmatprep.subr.bf16.mxu0 0
      %2049 = vmatpush1.bf16.msra.mxu0 0
      %2050 = vmatprep.subr.bf16.mxu0 0
      %2051 = vmatpush1.bf16.msra.mxu0 0
      %2052 = vmatprep.subr.bf16.mxu0 0
      %2053 = vmatpush1.bf16.msra.mxu0 0
      %2054 = vmatprep.subr.bf16.mxu0 0
      %2055 = vmatpush1.bf16.msra.mxu0 0
      %2056 = vmatprep.subr.bf16.mxu0 0
      %2057 = vmatpush1.bf16.msra.mxu0 0
      %2058 = vmatprep.subr.bf16.mxu0 0
      %2059 = vmatpush1.bf16.msra.mxu0 0
      %2060 = vmatprep.subr.bf16.mxu0 0
      %2061 = vmatpush1.bf16.msra.mxu0 0
      %2062 = vmatprep.subr.bf16.mxu0 0
      %2063 = vmatpush1.bf16.msra.mxu0 0
      %2064 = vmatprep.subr.bf16.mxu0 0
      %2065 = vmatpush1.bf16.msra.mxu0 0
      %2066 = vmatprep.subr.bf16.mxu0 0
      %2067 = vmatpush1.bf16.msra.mxu0 0
      %2068 = vmatprep.subr.bf16.mxu0 0
      %2069 = vmatpush1.bf16.msra.mxu0 0
      %2070 = vmatprep.mubr.bf16.mxu0 0
      %2071 = vmatmul.mubr.bf16.gmra.mrb[0].mxu0 %v2033
      %v2072 = vpop.f32.mrb[0].mxu0
      %v2073 = vadd.f32 0.0, %v2072
      %v2074 = vpop.f32.mrb[0].mxu0
      %v2075 = vpop.f32.mrb[0].mxu0
      %v2076 = vpop.f32.mrb[0].mxu0
      %2077 = vdwg.mxu0
      %v2078 = vcombine.low %v1935, %v2027
      %v2079 = vcombine.high %v1935, %v2027
      %v2081 = vunpack.c.l.s4 1983009808
      %v2082 = vunpack.c.0.s8 %v2081
      %v2083 = vlaneseq
      %v2084 = vshrl.u32 %v2083, 7
      %v2085 = vsub.s32 %v2082, %v2084
      %v2086 = vrot.slane %v2078, %v2085
      %v2088 = vunpack.c.l.s4 1983009808
      %v2089 = vunpack.c.0.s8 %v2088
      %v2090 = vlaneseq
      %v2091 = vshrl.u32 %v2090, 7
      %v2092 = vsub.s32 %v2089, %v2091
      %v2093 = vrot.slane %v2079, %v2092
      %v2094 = vcombine.low %v1981, %v2073
      %v2095 = vcombine.high %v1981, %v2073
      %v2097 = vunpack.c.l.s4 1983009808
      %v2098 = vunpack.c.0.s8 %v2097
      %v2099 = vlaneseq
      %v2100 = vshrl.u32 %v2099, 7
      %v2101 = vsub.s32 %v2098, %v2100
      %v2102 = vrot.slane %v2094, %v2101
      %v2104 = vunpack.c.l.s4 1983009808
      %v2105 = vunpack.c.0.s8 %v2104
      %v2106 = vlaneseq
      %v2107 = vshrl.u32 %v2106, 7
      %v2108 = vsub.s32 %v2105, %v2107
      %v2109 = vrot.slane %v2095, %v2108
      %v2110 = vcombine.low %v2086, %v2102
      %v2111 = vcombine.high %v2086, %v2102
      %v2113 = vunpack.c.l.s4 1934713408
      %v2114 = vunpack.c.0.s8 %v2113
      %v2115 = vlaneseq
      %v2116 = vshrl.u32 %v2115, 7
      %v2117 = vsub.s32 %v2114, %v2116
      %v2118 = vrot.slane %v2110, %v2117
      %v2120 = vunpack.c.l.s4 1934713408
      %v2121 = vunpack.c.0.s8 %v2120
      %v2122 = vlaneseq
      %v2123 = vshrl.u32 %v2122, 7
      %v2124 = vsub.s32 %v2121, %v2123
      %v2125 = vrot.slane %v2111, %v2124
      %v2126 = vcombine.low %v2093, %v2109
      %v2127 = vcombine.high %v2093, %v2109
      %v2129 = vunpack.c.l.s4 1934713408
      %v2130 = vunpack.c.0.s8 %v2129
      %v2131 = vlaneseq
      %v2132 = vshrl.u32 %v2131, 7
      %v2133 = vsub.s32 %v2130, %v2132
      %v2134 = vrot.slane %v2126, %v2133
      %v2136 = vunpack.c.l.s4 1934713408
      %v2137 = vunpack.c.0.s8 %v2136
      %v2138 = vlaneseq
      %v2139 = vshrl.u32 %v2138, 7
      %v2140 = vsub.s32 %v2137, %v2139
      %v2141 = vrot.slane %v2127, %v2140
      %v2142 = vcombine.high %v2118, 0.0
      %v2143 = vcombine.high %v2125, 0.0
      %v2144 = vcombine.high %v2134, 0.0
      %v2145 = vcombine.high %v2141, 0.0
      %v2146 = vcombine.low %v2118, %v2125
      %v2148 = vunpack.c.l.s4 1983009808
      %v2149 = vunpack.c.0.s8 %v2148
      %v2150 = vlaneseq
      %v2151 = vshrl.u32 %v2150, 7
      %v2152 = vsub.s32 %v2149, %v2151
      %v2153 = vrot.slane %v2146, %v2152
      %v2154 = vcombine.low %v2142, %v2143
      %v2156 = vunpack.c.l.s4 1983009808
      %v2157 = vunpack.c.0.s8 %v2156
      %v2158 = vlaneseq
      %v2159 = vshrl.u32 %v2158, 7
      %v2160 = vsub.s32 %v2157, %v2159
      %v2161 = vrot.slane %v2154, %v2160
      %v2162 = vcombine.low %v2134, %v2141
      %v2164 = vunpack.c.l.s4 1983009808
      %v2165 = vunpack.c.0.s8 %v2164
      %v2166 = vlaneseq
      %v2167 = vshrl.u32 %v2166, 7
      %v2168 = vsub.s32 %v2165, %v2167
      %v2169 = vrot.slane %v2162, %v2168
      %v2170 = vcombine.low %v2144, %v2145
      %v2172 = vunpack.c.l.s4 1983009808
      %v2173 = vunpack.c.0.s8 %v2172
      %v2174 = vlaneseq
      %v2175 = vshrl.u32 %v2174, 7
      %v2176 = vsub.s32 %v2173, %v2175
      %v2177 = vrot.slane %v2170, %v2176
      %v2178 = vcombine.low %v2153, %v2161
      %v2179 = vcombine.high %v2153, %v2161
      %v2181 = vunpack.c.l.s4 1934713408
      %v2182 = vunpack.c.0.s8 %v2181
      %v2183 = vlaneseq
      %v2184 = vshrl.u32 %v2183, 7
      %v2185 = vsub.s32 %v2182, %v2184
      %v2186 = vrot.slane %v2178, %v2185
      %v2188 = vunpack.c.l.s4 1934713408
      %v2189 = vunpack.c.0.s8 %v2188
      %v2190 = vlaneseq
      %v2191 = vshrl.u32 %v2190, 7
      %v2192 = vsub.s32 %v2189, %v2191
      %v2193 = vrot.slane %v2179, %v2192
      %v2194 = vcombine.low %v2169, %v2177
      %v2195 = vcombine.high %v2169, %v2177
      %v2197 = vunpack.c.l.s4 1934713408
      %v2198 = vunpack.c.0.s8 %v2197
      %v2199 = vlaneseq
      %v2200 = vshrl.u32 %v2199, 7
      %v2201 = vsub.s32 %v2198, %v2200
      %v2202 = vrot.slane %v2194, %v2201
      %v2204 = vunpack.c.l.s4 1934713408
      %v2205 = vunpack.c.0.s8 %v2204
      %v2206 = vlaneseq
      %v2207 = vshrl.u32 %v2206, 7
      %v2208 = vsub.s32 %v2205, %v2207
      %v2209 = vrot.slane %v2195, %v2208
      %v2210 = vcombine.low %v2186, %v2202
      %v2211 = vcombine.high %v2186, %v2202
      %v2212 = vcombine.low %v2193, %v2209
      %v2213 = vcombine.high %v2193, %v2209
      %2215 = vrot.lane.b32.xlu0 %v2211, 8
      %v2216 = vpop.permute.xlu0 %2215
      %2219 = vrot.lane.b32.xlu0 %v2212, 16
      %v2220 = vpop.permute.xlu0 %2219
      %2223 = vrot.lane.b32.xlu0 %v2213, 24
      %v2224 = vpop.permute.xlu0 %2223
      %v2226 = vsel %vm1650, %v2210, %v2216
      %vm2227 = vcmask 130048
      %v2228 = vsel %vm2227, %v2226, %v2220
      %vm2229 = vcmask 195584
      %v2230 = vsel %vm2229, %v2228, %v2224
      %v2231 = vpack.c.bf16 %v2230, %v2230
      %v2232 = vld [vmem:[%s1052] sm:$0xf]
      %v2233 = vld [vmem:[%s1052 + $0x4] sm:$0xf]
      %v2234 = vld [vmem:[%s1052 + $0x8] sm:$0xf]
      %v2235 = vld [vmem:[%s1052 + $0xc] sm:$0xf]
      %v2236 = vld [vmem:[%s1055] sm:$0x1]
      %v2238 = vlaneseq
      %v2239 = vshrl.u32 %v2238, 7
      %v2240 = vsub.s32 0, %v2239
      %v2241 = vrot.slane %v2236, %v2240
      %v2247 = vunpack.c.l.b16 %v2232
      %v2248 = vunpack.c.l.b16 %v2233
      %v2249 = vunpack.c.l.b16 %v2234
      %v2250 = vunpack.c.l.b16 %v2235
      %v2251 = vpack.c.b16 %v2248, %v2247
      %v2252 = vpack.c.b16 %v2250, %v2249
      %v2256 = vsel %vm1151, %v2231, 0
      %2258 = vmatprep.subr.bf16.mxu0 0
      %2259 = vmatpush1.bf16.msra.mxu0 %v2251
      %2260 = vmatprep.subr.bf16.mxu0 0
      %2261 = vmatpush1.bf16.msra.mxu0 %v2252
      %2262 = vmatprep.subr.bf16.mxu0 0
      %2263 = vmatpush1.bf16.msra.mxu0 0
      %2264 = vmatprep.subr.bf16.mxu0 0
      %2265 = vmatpush1.bf16.msra.mxu0 0
      %2266 = vmatprep.subr.bf16.mxu0 0
      %2267 = vmatpush1.bf16.msra.mxu0 0
      %2268 = vmatprep.subr.bf16.mxu0 0
      %2269 = vmatpush1.bf16.msra.mxu0 0
      %2270 = vmatprep.subr.bf16.mxu0 0
      %2271 = vmatpush1.bf16.msra.mxu0 0
      %2272 = vmatprep.subr.bf16.mxu0 0
      %2273 = vmatpush1.bf16.msra.mxu0 0
      %2274 = vmatprep.subr.bf16.mxu0 0
      %2275 = vmatpush1.bf16.msra.mxu0 0
      %2276 = vmatprep.subr.bf16.mxu0 0
      %2277 = vmatpush1.bf16.msra.mxu0 0
      %2278 = vmatprep.subr.bf16.mxu0 0
      %2279 = vmatpush1.bf16.msra.mxu0 0
      %2280 = vmatprep.subr.bf16.mxu0 0
      %2281 = vmatpush1.bf16.msra.mxu0 0
      %2282 = vmatprep.subr.bf16.mxu0 0
      %2283 = vmatpush1.bf16.msra.mxu0 0
      %2284 = vmatprep.subr.bf16.mxu0 0
      %2285 = vmatpush1.bf16.msra.mxu0 0
      %2286 = vmatprep.subr.bf16.mxu0 0
      %2287 = vmatpush1.bf16.msra.mxu0 0
      %2288 = vmatprep.subr.bf16.mxu0 0
      %2289 = vmatpush1.bf16.msra.mxu0 0
      %2290 = vmatprep.mubr.bf16.mxu0 0
      %2291 = vmatmul.mubr.bf16.gmra.mrb[0].mxu0 %v2256
      %v2292 = vpop.f32.mrb[0].mxu0
      %v2293 = vadd.f32 %v2241, %v2292
      %v2294 = vpop.f32.mrb[0].mxu0
      %v2295 = vpop.f32.mrb[0].mxu0
      %v2296 = vpop.f32.mrb[0].mxu0
      %2297 = vdwg.mxu0
      %v2298 = vadd.f32 %v2293, %v1126
      %v2299 = vld [vmem:[%s1058] sm:$0x1]
      %v2300 = vld [vmem:[%s1061] sm:$0x1]
      %v2301 = vsel %vm1151, %v2298, 0.0
      %2302 = vadd.xlane.f32.xlu0 %v2301
      %v2303 = vpop.xlane.xlu0 %2302
      %v2304 = vrcp.pop 32.0
      %v2305 = vmul.f32 %v2303, %v2304
      %v2306 = vsub.f32 %v2298, %v2305
      %v2307 = vmul.f32 %v2306, %v2306
      %v2308 = vsel %vm1151, %v2307, 0.0
      %2309 = vadd.xlane.f32.xlu0 %v2308
      %v2310 = vpop.xlane.xlu0 %2309
      %v2311 = vmul.f32 %v2310, %v2304
      %v2312 = vmax.f32 %v2311, 1e-10
      %v2313 = vadd.f32 %v2312, 1e-10
      %v2314 = vrsqrt.pop %v2313
      %v2315 = vmul.f32 %v2306, %v2314
      %v2317 = vlaneseq
      %v2318 = vshrl.u32 %v2317, 7
      %v2319 = vsub.s32 0, %v2318
      %v2320 = vrot.slane %v2299, %v2319
      %v2322 = vmul.f32 %v2320, %v2315
      %v2324 = vlaneseq
      %v2325 = vshrl.u32 %v2324, 7
      %v2326 = vsub.s32 0, %v2325
      %v2327 = vrot.slane %v2300, %v2326
      %v2329 = vadd.f32 %v2322, %v2327
      %v2330 = vpack.c.bf16 %v2329, %v2329
      %v2331 = vld [vmem:[%s1066] sm:$0xf]
      %v2332 = vld [vmem:[%s1066 + $0x4] sm:$0xf]
      %v2333 = vld [vmem:[%s1066 + $0x8] sm:$0xf]
      %v2334 = vld [vmem:[%s1066 + $0xc] sm:$0xf]
      %v2335 = vld [vmem:[%s1069] sm:$0x1]
      %v2337 = vlaneseq
      %v2338 = vshrl.u32 %v2337, 7
      %v2339 = vsub.s32 0, %v2338
      %v2340 = vrot.slane %v2335, %v2339
      %v2346 = vunpack.c.l.b16 %v2331
      %v2347 = vunpack.c.l.b16 %v2332
      %v2348 = vunpack.c.l.b16 %v2333
      %v2349 = vunpack.c.l.b16 %v2334
      %v2350 = vpack.c.b16 %v2347, %v2346
      %v2351 = vpack.c.b16 %v2349, %v2348
      %v2355 = vsel %vm1151, %v2330, 0
      %2357 = vmatprep.subr.bf16.mxu0 0
      %2358 = vmatpush1.bf16.msra.mxu0 %v2350
      %2359 = vmatprep.subr.bf16.mxu0 0
      %2360 = vmatpush1.bf16.msra.mxu0 %v2351
      %2361 = vmatprep.subr.bf16.mxu0 0
      %2362 = vmatpush1.bf16.msra.mxu0 0
      %2363 = vmatprep.subr.bf16.mxu0 0
      %2364 = vmatpush1.bf16.msra.mxu0 0
      %2365 = vmatprep.subr.bf16.mxu0 0
      %2366 = vmatpush1.bf16.msra.mxu0 0
      %2367 = vmatprep.subr.bf16.mxu0 0
      %2368 = vmatpush1.bf16.msra.mxu0 0
      %2369 = vmatprep.subr.bf16.mxu0 0
      %2370 = vmatpush1.bf16.msra.mxu0 0
      %2371 = vmatprep.subr.bf16.mxu0 0
      %2372 = vmatpush1.bf16.msra.mxu0 0
      %2373 = vmatprep.subr.bf16.mxu0 0
      %2374 = vmatpush1.bf16.msra.mxu0 0
      %2375 = vmatprep.subr.bf16.mxu0 0
      %2376 = vmatpush1.bf16.msra.mxu0 0
      %2377 = vmatprep.subr.bf16.mxu0 0
      %2378 = vmatpush1.bf16.msra.mxu0 0
      %2379 = vmatprep.subr.bf16.mxu0 0
      %2380 = vmatpush1.bf16.msra.mxu0 0
      %2381 = vmatprep.subr.bf16.mxu0 0
      %2382 = vmatpush1.bf16.msra.mxu0 0
      %2383 = vmatprep.subr.bf16.mxu0 0
      %2384 = vmatpush1.bf16.msra.mxu0 0
      %2385 = vmatprep.subr.bf16.mxu0 0
      %2386 = vmatpush1.bf16.msra.mxu0 0
      %2387 = vmatprep.subr.bf16.mxu0 0
      %2388 = vmatpush1.bf16.msra.mxu0 0
      %2389 = vmatprep.mubr.bf16.mxu0 0
      %2390 = vmatmul.mubr.bf16.gmra.mrb[0].mxu0 %v2355
      %v2391 = vpop.f32.mrb[0].mxu0
      %v2392 = vadd.f32 %v2340, %v2391
      %v2393 = vpop.f32.mrb[0].mxu0
      %v2394 = vpop.f32.mrb[0].mxu0
      %v2395 = vpop.f32.mrb[0].mxu0
      %2396 = vdwg.mxu0
      %v2397 = vld [vmem:[%s1035] sm:$0xff]
      %v2398 = vpack.c.bf16 %v2397, %v2397
      %v2399 = vld [vmem:[%s1074] sm:$0xf]
      %v2400 = vld [vmem:[%s1074 + $0x4] sm:$0xf]
      %v2401 = vld [vmem:[%s1074 + $0x8] sm:$0xf]
      %v2402 = vld [vmem:[%s1074 + $0xc] sm:$0xf]
      %v2403 = vld [vmem:[%s1077] sm:$0x1]
      %v2405 = vlaneseq
      %v2406 = vshrl.u32 %v2405, 7
      %v2407 = vsub.s32 0, %v2406
      %v2408 = vrot.slane %v2403, %v2407
      %v2414 = vunpack.c.l.b16 %v2399
      %v2415 = vunpack.c.l.b16 %v2400
      %v2416 = vunpack.c.l.b16 %v2401
      %v2417 = vunpack.c.l.b16 %v2402
      %v2418 = vpack.c.b16 %v2415, %v2414
      %v2419 = vpack.c.b16 %v2417, %v2416
      %v2423 = vsel %vm1151, %v2398, 0
      %2425 = vmatprep.subr.bf16.mxu0 0
      %2426 = vmatpush1.bf16.msra.mxu0 %v2418
      %2427 = vmatprep.subr.bf16.mxu0 0
      %2428 = vmatpush1.bf16.msra.mxu0 %v2419
      %2429 = vmatprep.subr.bf16.mxu0 0
      %2430 = vmatpush1.bf16.msra.mxu0 0
      %2431 = vmatprep.subr.bf16.mxu0 0
      %2432 = vmatpush1.bf16.msra.mxu0 0
      %2433 = vmatprep.subr.bf16.mxu0 0
      %2434 = vmatpush1.bf16.msra.mxu0 0
      %2435 = vmatprep.subr.bf16.mxu0 0
      %2436 = vmatpush1.bf16.msra.mxu0 0
      %2437 = vmatprep.subr.bf16.mxu0 0
      %2438 = vmatpush1.bf16.msra.mxu0 0
      %2439 = vmatprep.subr.bf16.mxu0 0
      %2440 = vmatpush1.bf16.msra.mxu0 0
      %2441 = vmatprep.subr.bf16.mxu0 0
      %2442 = vmatpush1.bf16.msra.mxu0 0
      %2443 = vmatprep.subr.bf16.mxu0 0
      %2444 = vmatpush1.bf16.msra.mxu0 0
      %2445 = vmatprep.subr.bf16.mxu0 0
      %2446 = vmatpush1.bf16.msra.mxu0 0
      %2447 = vmatprep.subr.bf16.mxu0 0
      %2448 = vmatpush1.bf16.msra.mxu0 0
      %2449 = vmatprep.subr.bf16.mxu0 0
      %2450 = vmatpush1.bf16.msra.mxu0 0
      %2451 = vmatprep.subr.bf16.mxu0 0
      %2452 = vmatpush1.bf16.msra.mxu0 0
      %2453 = vmatprep.subr.bf16.mxu0 0
      %2454 = vmatpush1.bf16.msra.mxu0 0
      %2455 = vmatprep.subr.bf16.mxu0 0
      %2456 = vmatpush1.bf16.msra.mxu0 0
      %2457 = vmatprep.mubr.bf16.mxu0 0
      %2458 = vmatmul.mubr.bf16.gmra.mrb[0].mxu0 %v2423
      %v2459 = vpop.f32.mrb[0].mxu0
      %v2460 = vadd.f32 %v2408, %v2459
      %v2461 = vpop.f32.mrb[0].mxu0
      %v2462 = vpop.f32.mrb[0].mxu0
      %v2463 = vpop.f32.mrb[0].mxu0
      %2464 = vdwg.mxu0
      %v2465 = vld [vmem:[%s1039] sm:$0xff]
      %2467 = vrot.lane.b32.xlu0 %v2392, 120
      %v2468 = vpop.permute.xlu0 %2467
      %2470 = vrot.lane.b32.xlu0 %v2392, 112
      %v2471 = vpop.permute.xlu0 %2470
      %2473 = vrot.lane.b32.xlu0 %v2392, 104
      %v2474 = vpop.permute.xlu0 %2473
      %v2476 = vcombine.low %v2392, %v2471
      %v2477 = vcombine.high %v2392, %v2471
      %v2479 = vunpack.c.l.s4 1983009808
      %v2480 = vunpack.c.0.s8 %v2479
      %v2481 = vlaneseq
      %v2482 = vshrl.u32 %v2481, 7
      %v2483 = vsub.s32 %v2480, %v2482
      %v2484 = vrot.slane %v2476, %v2483
      %v2486 = vunpack.c.l.s4 1983009808
      %v2487 = vunpack.c.0.s8 %v2486
      %v2488 = vlaneseq
      %v2489 = vshrl.u32 %v2488, 7
      %v2490 = vsub.s32 %v2487, %v2489
      %v2491 = vrot.slane %v2477, %v2490
      %v2492 = vcombine.low %v2468, %v2474
      %v2493 = vcombine.high %v2468, %v2474
      %v2495 = vunpack.c.l.s4 1983009808
      %v2496 = vunpack.c.0.s8 %v2495
      %v2497 = vlaneseq
      %v2498 = vshrl.u32 %v2497, 7
      %v2499 = vsub.s32 %v2496, %v2498
      %v2500 = vrot.slane %v2492, %v2499
      %v2502 = vunpack.c.l.s4 1983009808
      %v2503 = vunpack.c.0.s8 %v2502
      %v2504 = vlaneseq
      %v2505 = vshrl.u32 %v2504, 7
      %v2506 = vsub.s32 %v2503, %v2505
      %v2507 = vrot.slane %v2493, %v2506
      %v2508 = vcombine.low %v2484, %v2500
      %v2509 = vcombine.high %v2484, %v2500
      %v2511 = vunpack.c.l.s4 1934713408
      %v2512 = vunpack.c.0.s8 %v2511
      %v2513 = vlaneseq
      %v2514 = vshrl.u32 %v2513, 7
      %v2515 = vsub.s32 %v2512, %v2514
      %v2516 = vrot.slane %v2508, %v2515
      %v2518 = vunpack.c.l.s4 1934713408
      %v2519 = vunpack.c.0.s8 %v2518
      %v2520 = vlaneseq
      %v2521 = vshrl.u32 %v2520, 7
      %v2522 = vsub.s32 %v2519, %v2521
      %v2523 = vrot.slane %v2509, %v2522
      %v2524 = vcombine.low %v2491, %v2507
      %v2525 = vcombine.high %v2491, %v2507
      %v2527 = vunpack.c.l.s4 1934713408
      %v2528 = vunpack.c.0.s8 %v2527
      %v2529 = vlaneseq
      %v2530 = vshrl.u32 %v2529, 7
      %v2531 = vsub.s32 %v2528, %v2530
      %v2532 = vrot.slane %v2524, %v2531
      %v2534 = vunpack.c.l.s4 1934713408
      %v2535 = vunpack.c.0.s8 %v2534
      %v2536 = vlaneseq
      %v2537 = vshrl.u32 %v2536, 7
      %v2538 = vsub.s32 %v2535, %v2537
      %v2539 = vrot.slane %v2525, %v2538
      %v2540 = vcombine.high %v2516, 0.0
      %v2541 = vcombine.high %v2523, 0.0
      %v2542 = vcombine.high %v2532, 0.0
      %v2543 = vcombine.high %v2539, 0.0
      %v2544 = vcombine.low %v2516, %v2523
      %v2546 = vunpack.c.l.s4 1983009808
      %v2547 = vunpack.c.0.s8 %v2546
      %v2548 = vlaneseq
      %v2549 = vshrl.u32 %v2548, 7
      %v2550 = vsub.s32 %v2547, %v2549
      %v2551 = vrot.slane %v2544, %v2550
      %v2552 = vcombine.low %v2540, %v2541
      %v2554 = vunpack.c.l.s4 1983009808
      %v2555 = vunpack.c.0.s8 %v2554
      %v2556 = vlaneseq
      %v2557 = vshrl.u32 %v2556, 7
      %v2558 = vsub.s32 %v2555, %v2557
      %v2559 = vrot.slane %v2552, %v2558
      %v2560 = vcombine.low %v2532, %v2539
      %v2562 = vunpack.c.l.s4 1983009808
      %v2563 = vunpack.c.0.s8 %v2562
      %v2564 = vlaneseq
      %v2565 = vshrl.u32 %v2564, 7
      %v2566 = vsub.s32 %v2563, %v2565
      %v2567 = vrot.slane %v2560, %v2566
      %v2568 = vcombine.low %v2542, %v2543
      %v2570 = vunpack.c.l.s4 1983009808
      %v2571 = vunpack.c.0.s8 %v2570
      %v2572 = vlaneseq
      %v2573 = vshrl.u32 %v2572, 7
      %v2574 = vsub.s32 %v2571, %v2573
      %v2575 = vrot.slane %v2568, %v2574
      %v2576 = vcombine.low %v2551, %v2559
      %v2577 = vcombine.high %v2551, %v2559
      %v2579 = vunpack.c.l.s4 1934713408
      %v2580 = vunpack.c.0.s8 %v2579
      %v2581 = vlaneseq
      %v2582 = vshrl.u32 %v2581, 7
      %v2583 = vsub.s32 %v2580, %v2582
      %v2584 = vrot.slane %v2576, %v2583
      %v2586 = vunpack.c.l.s4 1934713408
      %v2587 = vunpack.c.0.s8 %v2586
      %v2588 = vlaneseq
      %v2589 = vshrl.u32 %v2588, 7
      %v2590 = vsub.s32 %v2587, %v2589
      %v2591 = vrot.slane %v2577, %v2590
      %v2592 = vcombine.low %v2567, %v2575
      %v2593 = vcombine.high %v2567, %v2575
      %v2595 = vunpack.c.l.s4 1934713408
      %v2596 = vunpack.c.0.s8 %v2595
      %v2597 = vlaneseq
      %v2598 = vshrl.u32 %v2597, 7
      %v2599 = vsub.s32 %v2596, %v2598
      %v2600 = vrot.slane %v2592, %v2599
      %v2602 = vunpack.c.l.s4 1934713408
      %v2603 = vunpack.c.0.s8 %v2602
      %v2604 = vlaneseq
      %v2605 = vshrl.u32 %v2604, 7
      %v2606 = vsub.s32 %v2603, %v2605
      %v2607 = vrot.slane %v2593, %v2606
      %v2608 = vcombine.low %v2584, %v2600
      %v2609 = vcombine.high %v2584, %v2600
      %v2610 = vcombine.low %v2591, %v2607
      %v2611 = vcombine.high %v2591, %v2607
      %v2612 = vpack.c.bf16 %v2608, %v2608
      %v2613 = vpack.c.bf16 %v2609, %v2609
      %v2614 = vpack.c.bf16 %v2610, %v2610
      %v2615 = vpack.c.bf16 %v2611, %v2611
      %2617 = vrot.lane.b32.xlu0 %v2460, 120
      %v2618 = vpop.permute.xlu0 %2617
      %2620 = vrot.lane.b32.xlu0 %v2460, 112
      %v2621 = vpop.permute.xlu0 %2620
      %2623 = vrot.lane.b32.xlu0 %v2460, 104
      %v2624 = vpop.permute.xlu0 %2623
      %v2626 = vcombine.low %v2460, %v2621
      %v2627 = vcombine.high %v2460, %v2621
      %v2629 = vunpack.c.l.s4 1983009808
      %v2630 = vunpack.c.0.s8 %v2629
      %v2631 = vlaneseq
      %v2632 = vshrl.u32 %v2631, 7
      %v2633 = vsub.s32 %v2630, %v2632
      %v2634 = vrot.slane %v2626, %v2633
      %v2636 = vunpack.c.l.s4 1983009808
      %v2637 = vunpack.c.0.s8 %v2636
      %v2638 = vlaneseq
      %v2639 = vshrl.u32 %v2638, 7
      %v2640 = vsub.s32 %v2637, %v2639
      %v2641 = vrot.slane %v2627, %v2640
      %v2642 = vcombine.low %v2618, %v2624
      %v2643 = vcombine.high %v2618, %v2624
      %v2645 = vunpack.c.l.s4 1983009808
      %v2646 = vunpack.c.0.s8 %v2645
      %v2647 = vlaneseq
      %v2648 = vshrl.u32 %v2647, 7
      %v2649 = vsub.s32 %v2646, %v2648
      %v2650 = vrot.slane %v2642, %v2649
      %v2652 = vunpack.c.l.s4 1983009808
      %v2653 = vunpack.c.0.s8 %v2652
      %v2654 = vlaneseq
      %v2655 = vshrl.u32 %v2654, 7
      %v2656 = vsub.s32 %v2653, %v2655
      %v2657 = vrot.slane %v2643, %v2656
      %v2658 = vcombine.low %v2634, %v2650
      %v2659 = vcombine.high %v2634, %v2650
      %v2661 = vunpack.c.l.s4 1934713408
      %v2662 = vunpack.c.0.s8 %v2661
      %v2663 = vlaneseq
      %v2664 = vshrl.u32 %v2663, 7
      %v2665 = vsub.s32 %v2662, %v2664
      %v2666 = vrot.slane %v2658, %v2665
      %v2668 = vunpack.c.l.s4 1934713408
      %v2669 = vunpack.c.0.s8 %v2668
      %v2670 = vlaneseq
      %v2671 = vshrl.u32 %v2670, 7
      %v2672 = vsub.s32 %v2669, %v2671
      %v2673 = vrot.slane %v2659, %v2672
      %v2674 = vcombine.low %v2641, %v2657
      %v2675 = vcombine.high %v2641, %v2657
      %v2677 = vunpack.c.l.s4 1934713408
      %v2678 = vunpack.c.0.s8 %v2677
      %v2679 = vlaneseq
      %v2680 = vshrl.u32 %v2679, 7
      %v2681 = vsub.s32 %v2678, %v2680
      %v2682 = vrot.slane %v2674, %v2681
      %v2684 = vunpack.c.l.s4 1934713408
      %v2685 = vunpack.c.0.s8 %v2684
      %v2686 = vlaneseq
      %v2687 = vshrl.u32 %v2686, 7
      %v2688 = vsub.s32 %v2685, %v2687
      %v2689 = vrot.slane %v2675, %v2688
      %v2690 = vcombine.high %v2666, 0.0
      %v2691 = vcombine.high %v2673, 0.0
      %v2692 = vcombine.high %v2682, 0.0
      %v2693 = vcombine.high %v2689, 0.0
      %v2694 = vcombine.low %v2666, %v2673
      %v2696 = vunpack.c.l.s4 1983009808
      %v2697 = vunpack.c.0.s8 %v2696
      %v2698 = vlaneseq
      %v2699 = vshrl.u32 %v2698, 7
      %v2700 = vsub.s32 %v2697, %v2699
      %v2701 = vrot.slane %v2694, %v2700
      %v2702 = vcombine.low %v2690, %v2691
      %v2704 = vunpack.c.l.s4 1983009808
      %v2705 = vunpack.c.0.s8 %v2704
      %v2706 = vlaneseq
      %v2707 = vshrl.u32 %v2706, 7
      %v2708 = vsub.s32 %v2705, %v2707
      %v2709 = vrot.slane %v2702, %v2708
      %v2710 = vcombine.low %v2682, %v2689
      %v2712 = vunpack.c.l.s4 1983009808
      %v2713 = vunpack.c.0.s8 %v2712
      %v2714 = vlaneseq
      %v2715 = vshrl.u32 %v2714, 7
      %v2716 = vsub.s32 %v2713, %v2715
      %v2717 = vrot.slane %v2710, %v2716
      %v2718 = vcombine.low %v2692, %v2693
      %v2720 = vunpack.c.l.s4 1983009808
      %v2721 = vunpack.c.0.s8 %v2720
      %v2722 = vlaneseq
      %v2723 = vshrl.u32 %v2722, 7
      %v2724 = vsub.s32 %v2721, %v2723
      %v2725 = vrot.slane %v2718, %v2724
      %v2726 = vcombine.low %v2701, %v2709
      %v2727 = vcombine.high %v2701, %v2709
      %v2729 = vunpack.c.l.s4 1934713408
      %v2730 = vunpack.c.0.s8 %v2729
      %v2731 = vlaneseq
      %v2732 = vshrl.u32 %v2731, 7
      %v2733 = vsub.s32 %v2730, %v2732
      %v2734 = vrot.slane %v2726, %v2733
      %v2736 = vunpack.c.l.s4 1934713408
      %v2737 = vunpack.c.0.s8 %v2736
      %v2738 = vlaneseq
      %v2739 = vshrl.u32 %v2738, 7
      %v2740 = vsub.s32 %v2737, %v2739
      %v2741 = vrot.slane %v2727, %v2740
      %v2742 = vcombine.low %v2717, %v2725
      %v2743 = vcombine.high %v2717, %v2725
      %v2745 = vunpack.c.l.s4 1934713408
      %v2746 = vunpack.c.0.s8 %v2745
      %v2747 = vlaneseq
      %v2748 = vshrl.u32 %v2747, 7
      %v2749 = vsub.s32 %v2746, %v2748
      %v2750 = vrot.slane %v2742, %v2749
      %v2752 = vunpack.c.l.s4 1934713408
      %v2753 = vunpack.c.0.s8 %v2752
      %v2754 = vlaneseq
      %v2755 = vshrl.u32 %v2754, 7
      %v2756 = vsub.s32 %v2753, %v2755
      %v2757 = vrot.slane %v2743, %v2756
      %v2758 = vcombine.low %v2734, %v2750
      %v2759 = vcombine.high %v2734, %v2750
      %v2760 = vcombine.low %v2741, %v2757
      %v2761 = vcombine.high %v2741, %v2757
      %v2762 = vpack.c.bf16 %v2758, %v2758
      %v2763 = vpack.c.bf16 %v2759, %v2759
      %v2764 = vpack.c.bf16 %v2760, %v2760
      %v2765 = vpack.c.bf16 %v2761, %v2761
      %2766 = vrot.lane.b32.xlu0 %v2460, 96
      %v2767 = vpop.permute.xlu0 %2766
      %2768 = vrot.lane.b32.xlu0 %v2618, 96
      %v2769 = vpop.permute.xlu0 %2768
      %2770 = vrot.lane.b32.xlu0 %v2621, 96
      %v2771 = vpop.permute.xlu0 %2770
      %2772 = vrot.lane.b32.xlu0 %v2624, 96
      %v2773 = vpop.permute.xlu0 %2772
      %v2778 = vcombine.low %v2767, %v2771
      %v2779 = vcombine.high %v2767, %v2771
      %v2781 = vunpack.c.l.s4 1983009808
      %v2782 = vunpack.c.0.s8 %v2781
      %v2783 = vlaneseq
      %v2784 = vshrl.u32 %v2783, 7
      %v2785 = vsub.s32 %v2782, %v2784
      %v2786 = vrot.slane %v2778, %v2785
      %v2788 = vunpack.c.l.s4 1983009808
      %v2789 = vunpack.c.0.s8 %v2788
      %v2790 = vlaneseq
      %v2791 = vshrl.u32 %v2790, 7
      %v2792 = vsub.s32 %v2789, %v2791
      %v2793 = vrot.slane %v2779, %v2792
      %v2794 = vcombine.low %v2769, %v2773
      %v2795 = vcombine.high %v2769, %v2773
      %v2797 = vunpack.c.l.s4 1983009808
      %v2798 = vunpack.c.0.s8 %v2797
      %v2799 = vlaneseq
      %v2800 = vshrl.u32 %v2799, 7
      %v2801 = vsub.s32 %v2798, %v2800
      %v2802 = vrot.slane %v2794, %v2801
      %v2804 = vunpack.c.l.s4 1983009808
      %v2805 = vunpack.c.0.s8 %v2804
      %v2806 = vlaneseq
      %v2807 = vshrl.u32 %v2806, 7
      %v2808 = vsub.s32 %v2805, %v2807
      %v2809 = vrot.slane %v2795, %v2808
      %v2810 = vcombine.low %v2786, %v2802
      %v2811 = vcombine.high %v2786, %v2802
      %v2813 = vunpack.c.l.s4 1934713408
      %v2814 = vunpack.c.0.s8 %v2813
      %v2815 = vlaneseq
      %v2816 = vshrl.u32 %v2815, 7
      %v2817 = vsub.s32 %v2814, %v2816
      %v2818 = vrot.slane %v2810, %v2817
      %v2820 = vunpack.c.l.s4 1934713408
      %v2821 = vunpack.c.0.s8 %v2820
      %v2822 = vlaneseq
      %v2823 = vshrl.u32 %v2822, 7
      %v2824 = vsub.s32 %v2821, %v2823
      %v2825 = vrot.slane %v2811, %v2824
      %v2826 = vcombine.low %v2793, %v2809
      %v2827 = vcombine.high %v2793, %v2809
      %v2829 = vunpack.c.l.s4 1934713408
      %v2830 = vunpack.c.0.s8 %v2829
      %v2831 = vlaneseq
      %v2832 = vshrl.u32 %v2831, 7
      %v2833 = vsub.s32 %v2830, %v2832
      %v2834 = vrot.slane %v2826, %v2833
      %v2836 = vunpack.c.l.s4 1934713408
      %v2837 = vunpack.c.0.s8 %v2836
      %v2838 = vlaneseq
      %v2839 = vshrl.u32 %v2838, 7
      %v2840 = vsub.s32 %v2837, %v2839
      %v2841 = vrot.slane %v2827, %v2840
      %v2842 = vcombine.high %v2818, 0.0
      %v2843 = vcombine.high %v2825, 0.0
      %v2844 = vcombine.high %v2834, 0.0
      %v2845 = vcombine.high %v2841, 0.0
      %v2846 = vcombine.low %v2818, %v2825
      %v2848 = vunpack.c.l.s4 1983009808
      %v2849 = vunpack.c.0.s8 %v2848
      %v2850 = vlaneseq
      %v2851 = vshrl.u32 %v2850, 7
      %v2852 = vsub.s32 %v2849, %v2851
      %v2853 = vrot.slane %v2846, %v2852
      %v2854 = vcombine.low %v2842, %v2843
      %v2856 = vunpack.c.l.s4 1983009808
      %v2857 = vunpack.c.0.s8 %v2856
      %v2858 = vlaneseq
      %v2859 = vshrl.u32 %v2858, 7
      %v2860 = vsub.s32 %v2857, %v2859
      %v2861 = vrot.slane %v2854, %v2860
      %v2862 = vcombine.low %v2834, %v2841
      %v2864 = vunpack.c.l.s4 1983009808
      %v2865 = vunpack.c.0.s8 %v2864
      %v2866 = vlaneseq
      %v2867 = vshrl.u32 %v2866, 7
      %v2868 = vsub.s32 %v2865, %v2867
      %v2869 = vrot.slane %v2862, %v2868
      %v2870 = vcombine.low %v2844, %v2845
      %v2872 = vunpack.c.l.s4 1983009808
      %v2873 = vunpack.c.0.s8 %v2872
      %v2874 = vlaneseq
      %v2875 = vshrl.u32 %v2874, 7
      %v2876 = vsub.s32 %v2873, %v2875
      %v2877 = vrot.slane %v2870, %v2876
      %v2878 = vcombine.low %v2853, %v2861
      %v2879 = vcombine.high %v2853, %v2861
      %v2881 = vunpack.c.l.s4 1934713408
      %v2882 = vunpack.c.0.s8 %v2881
      %v2883 = vlaneseq
      %v2884 = vshrl.u32 %v2883, 7
      %v2885 = vsub.s32 %v2882, %v2884
      %v2886 = vrot.slane %v2878, %v2885
      %v2888 = vunpack.c.l.s4 1934713408
      %v2889 = vunpack.c.0.s8 %v2888
      %v2890 = vlaneseq
      %v2891 = vshrl.u32 %v2890, 7
      %v2892 = vsub.s32 %v2889, %v2891
      %v2893 = vrot.slane %v2879, %v2892
      %v2894 = vcombine.low %v2869, %v2877
      %v2895 = vcombine.high %v2869, %v2877
      %v2897 = vunpack.c.l.s4 1934713408
      %v2898 = vunpack.c.0.s8 %v2897
      %v2899 = vlaneseq
      %v2900 = vshrl.u32 %v2899, 7
      %v2901 = vsub.s32 %v2898, %v2900
      %v2902 = vrot.slane %v2894, %v2901
      %v2904 = vunpack.c.l.s4 1934713408
      %v2905 = vunpack.c.0.s8 %v2904
      %v2906 = vlaneseq
      %v2907 = vshrl.u32 %v2906, 7
      %v2908 = vsub.s32 %v2905, %v2907
      %v2909 = vrot.slane %v2895, %v2908
      %v2910 = vcombine.low %v2886, %v2902
      %v2911 = vcombine.high %v2886, %v2902
      %v2912 = vcombine.low %v2893, %v2909
      %v2913 = vcombine.high %v2893, %v2909
      %v2914 = vpack.c.bf16 %v2910, %v2910
      %v2915 = vpack.c.bf16 %v2911, %v2911
      %v2916 = vpack.c.bf16 %v2912, %v2912
      %v2917 = vpack.c.bf16 %v2913, %v2913
      %v2919 = vsel %vm1650, %v2612, 0
      %v2922 = vsel %vm1650, %v2762, 0
      %2924 = vmatprep.subr.bf16.mxu0 0
      %2925 = vmatpush1.bf16.xpose.msra.mxu0 %v2922
      %2926 = vmatprep.subr.bf16.mxu0 0
      %2927 = vmatpush1.bf16.xpose.msra.mxu0 0
      %2928 = vmatprep.subr.bf16.mxu0 0
      %2929 = vmatpush1.bf16.xpose.msra.mxu0 0
      %2930 = vmatprep.subr.bf16.mxu0 0
      %2931 = vmatpush1.bf16.xpose.msra.mxu0 0
      %2932 = vmatprep.subr.bf16.mxu0 0
      %2933 = vmatpush1.bf16.xpose.msra.mxu0 0
      %2934 = vmatprep.subr.bf16.mxu0 0
      %2935 = vmatpush1.bf16.xpose.msra.mxu0 0
      %2936 = vmatprep.subr.bf16.mxu0 0
      %2937 = vmatpush1.bf16.xpose.msra.mxu0 0
      %2938 = vmatprep.subr.bf16.mxu0 0
      %2939 = vmatpush1.bf16.xpose.msra.mxu0 0
      %2940 = vmatprep.subr.bf16.mxu0 0
      %2941 = vmatpush1.bf16.xpose.msra.mxu0 0
      %2942 = vmatprep.subr.bf16.mxu0 0
      %2943 = vmatpush1.bf16.xpose.msra.mxu0 0
      %2944 = vmatprep.subr.bf16.mxu0 0
      %2945 = vmatpush1.bf16.xpose.msra.mxu0 0
      %2946 = vmatprep.subr.bf16.mxu0 0
      %2947 = vmatpush1.bf16.xpose.msra.mxu0 0
      %2948 = vmatprep.subr.bf16.mxu0 0
      %2949 = vmatpush1.bf16.xpose.msra.mxu0 0
      %2950 = vmatprep.subr.bf16.mxu0 0
      %2951 = vmatpush1.bf16.xpose.msra.mxu0 0
      %2952 = vmatprep.subr.bf16.mxu0 0
      %2953 = vmatpush1.bf16.xpose.msra.mxu0 0
      %2954 = vmatprep.subr.bf16.mxu0 0
      %2955 = vmatpush1.bf16.xpose.msra.mxu0 0
      %2956 = vmatprep.mubr.bf16.mxu0 0
      %2957 = vmatmul.mubr.bf16.gmra.mrb[0].mxu0 %v2919
      %v2958 = vpop.f32.mrb[0].mxu0
      %v2959 = vadd.f32 0.0, %v2958
      %v2960 = vpop.f32.mrb[0].mxu0
      %v2961 = vpop.f32.mrb[0].mxu0
      %v2962 = vpop.f32.mrb[0].mxu0
      %2963 = vdwg.mxu0
      %v2965 = vsel %vm1650, %v2613, 0
      %v2968 = vsel %vm1650, %v2763, 0
      %2970 = vmatprep.subr.bf16.mxu0 0
      %2971 = vmatpush1.bf16.xpose.msra.mxu0 %v2968
      %2972 = vmatprep.subr.bf16.mxu0 0
      %2973 = vmatpush1.bf16.xpose.msra.mxu0 0
      %2974 = vmatprep.subr.bf16.mxu0 0
      %2975 = vmatpush1.bf16.xpose.msra.mxu0 0
      %2976 = vmatprep.subr.bf16.mxu0 0
      %2977 = vmatpush1.bf16.xpose.msra.mxu0 0
      %2978 = vmatprep.subr.bf16.mxu0 0
      %2979 = vmatpush1.bf16.xpose.msra.mxu0 0
      %2980 = vmatprep.subr.bf16.mxu0 0
      %2981 = vmatpush1.bf16.xpose.msra.mxu0 0
      %2982 = vmatprep.subr.bf16.mxu0 0
      %2983 = vmatpush1.bf16.xpose.msra.mxu0 0
      %2984 = vmatprep.subr.bf16.mxu0 0
      %2985 = vmatpush1.bf16.xpose.msra.mxu0 0
      %2986 = vmatprep.subr.bf16.mxu0 0
      %2987 = vmatpush1.bf16.xpose.msra.mxu0 0
      %2988 = vmatprep.subr.bf16.mxu0 0
      %2989 = vmatpush1.bf16.xpose.msra.mxu0 0
      %2990 = vmatprep.subr.bf16.mxu0 0
      %2991 = vmatpush1.bf16.xpose.msra.mxu0 0
      %2992 = vmatprep.subr.bf16.mxu0 0
      %2993 = vmatpush1.bf16.xpose.msra.mxu0 0
      %2994 = vmatprep.subr.bf16.mxu0 0
      %2995 = vmatpush1.bf16.xpose.msra.mxu0 0
      %2996 = vmatprep.subr.bf16.mxu0 0
      %2997 = vmatpush1.bf16.xpose.msra.mxu0 0
      %2998 = vmatprep.subr.bf16.mxu0 0
      %2999 = vmatpush1.bf16.xpose.msra.mxu0 0
      %3000 = vmatprep.subr.bf16.mxu0 0
      %3001 = vmatpush1.bf16.xpose.msra.mxu0 0
      %3002 = vmatprep.mubr.bf16.mxu0 0
      %3003 = vmatmul.mubr.bf16.gmra.mrb[0].mxu0 %v2965
      %v3004 = vpop.f32.mrb[0].mxu0
      %v3005 = vadd.f32 0.0, %v3004
      %v3006 = vpop.f32.mrb[0].mxu0
      %v3007 = vpop.f32.mrb[0].mxu0
      %v3008 = vpop.f32.mrb[0].mxu0
      %3009 = vdwg.mxu0
      %v3011 = vsel %vm1650, %v2614, 0
      %v3014 = vsel %vm1650, %v2764, 0
      %3016 = vmatprep.subr.bf16.mxu0 0
      %3017 = vmatpush1.bf16.xpose.msra.mxu0 %v3014
      %3018 = vmatprep.subr.bf16.mxu0 0
      %3019 = vmatpush1.bf16.xpose.msra.mxu0 0
      %3020 = vmatprep.subr.bf16.mxu0 0
      %3021 = vmatpush1.bf16.xpose.msra.mxu0 0
      %3022 = vmatprep.subr.bf16.mxu0 0
      %3023 = vmatpush1.bf16.xpose.msra.mxu0 0
      %3024 = vmatprep.subr.bf16.mxu0 0
      %3025 = vmatpush1.bf16.xpose.msra.mxu0 0
      %3026 = vmatprep.subr.bf16.mxu0 0
      %3027 = vmatpush1.bf16.xpose.msra.mxu0 0
      %3028 = vmatprep.subr.bf16.mxu0 0
      %3029 = vmatpush1.bf16.xpose.msra.mxu0 0
      %3030 = vmatprep.subr.bf16.mxu0 0
      %3031 = vmatpush1.bf16.xpose.msra.mxu0 0
      %3032 = vmatprep.subr.bf16.mxu0 0
      %3033 = vmatpush1.bf16.xpose.msra.mxu0 0
      %3034 = vmatprep.subr.bf16.mxu0 0
      %3035 = vmatpush1.bf16.xpose.msra.mxu0 0
      %3036 = vmatprep.subr.bf16.mxu0 0
      %3037 = vmatpush1.bf16.xpose.msra.mxu0 0
      %3038 = vmatprep.subr.bf16.mxu0 0
      %3039 = vmatpush1.bf16.xpose.msra.mxu0 0
      %3040 = vmatprep.subr.bf16.mxu0 0
      %3041 = vmatpush1.bf16.xpose.msra.mxu0 0
      %3042 = vmatprep.subr.bf16.mxu0 0
      %3043 = vmatpush1.bf16.xpose.msra.mxu0 0
      %3044 = vmatprep.subr.bf16.mxu0 0
      %3045 = vmatpush1.bf16.xpose.msra.mxu0 0
      %3046 = vmatprep.subr.bf16.mxu0 0
      %3047 = vmatpush1.bf16.xpose.msra.mxu0 0
      %3048 = vmatprep.mubr.bf16.mxu0 0
      %3049 = vmatmul.mubr.bf16.gmra.mrb[0].mxu0 %v3011
      %v3050 = vpop.f32.mrb[0].mxu0
      %v3051 = vadd.f32 0.0, %v3050
      %v3052 = vpop.f32.mrb[0].mxu0
      %v3053 = vpop.f32.mrb[0].mxu0
      %v3054 = vpop.f32.mrb[0].mxu0
      %3055 = vdwg.mxu0
      %v3057 = vsel %vm1650, %v2615, 0
      %v3060 = vsel %vm1650, %v2765, 0
      %3062 = vmatprep.subr.bf16.mxu0 0
      %3063 = vmatpush1.bf16.xpose.msra.mxu0 %v3060
      %3064 = vmatprep.subr.bf16.mxu0 0
      %3065 = vmatpush1.bf16.xpose.msra.mxu0 0
      %3066 = vmatprep.subr.bf16.mxu0 0
      %3067 = vmatpush1.bf16.xpose.msra.mxu0 0
      %3068 = vmatprep.subr.bf16.mxu0 0
      %3069 = vmatpush1.bf16.xpose.msra.mxu0 0
      %3070 = vmatprep.subr.bf16.mxu0 0
      %3071 = vmatpush1.bf16.xpose.msra.mxu0 0
      %3072 = vmatprep.subr.bf16.mxu0 0
      %3073 = vmatpush1.bf16.xpose.msra.mxu0 0
      %3074 = vmatprep.subr.bf16.mxu0 0
      %3075 = vmatpush1.bf16.xpose.msra.mxu0 0
      %3076 = vmatprep.subr.bf16.mxu0 0
      %3077 = vmatpush1.bf16.xpose.msra.mxu0 0
      %3078 = vmatprep.subr.bf16.mxu0 0
      %3079 = vmatpush1.bf16.xpose.msra.mxu0 0
      %3080 = vmatprep.subr.bf16.mxu0 0
      %3081 = vmatpush1.bf16.xpose.msra.mxu0 0
      %3082 = vmatprep.subr.bf16.mxu0 0
      %3083 = vmatpush1.bf16.xpose.msra.mxu0 0
      %3084 = vmatprep.subr.bf16.mxu0 0
      %3085 = vmatpush1.bf16.xpose.msra.mxu0 0
      %3086 = vmatprep.subr.bf16.mxu0 0
      %3087 = vmatpush1.bf16.xpose.msra.mxu0 0
      %3088 = vmatprep.subr.bf16.mxu0 0
      %3089 = vmatpush1.bf16.xpose.msra.mxu0 0
      %3090 = vmatprep.subr.bf16.mxu0 0
      %3091 = vmatpush1.bf16.xpose.msra.mxu0 0
      %3092 = vmatprep.subr.bf16.mxu0 0
      %3093 = vmatpush1.bf16.xpose.msra.mxu0 0
      %3094 = vmatprep.mubr.bf16.mxu0 0
      %3095 = vmatmul.mubr.bf16.gmra.mrb[0].mxu0 %v3057
      %v3096 = vpop.f32.mrb[0].mxu0
      %v3097 = vadd.f32 0.0, %v3096
      %v3098 = vpop.f32.mrb[0].mxu0
      %v3099 = vpop.f32.mrb[0].mxu0
      %v3100 = vpop.f32.mrb[0].mxu0
      %3101 = vdwg.mxu0
      %v3102 = vmul.f32 %v2959, 0.35355338
      %v3103 = vmul.f32 %v3005, 0.35355338
      %v3104 = vmul.f32 %v3051, 0.35355338
      %v3105 = vmul.f32 %v3097, 0.35355338
      %vm3106 = vcmp.eq.f32.partialorder %v2465, 0.0
      %v3107 = vsel %vm3106, -10000.0, 0.0
      %v3108 = vadd.f32 %v3102, %v3107
      %v3109 = vadd.f32 %v3103, %v3107
      %v3110 = vadd.f32 %v3104, %v3107
      %v3111 = vadd.f32 %v3105, %v3107
      %v3112 = vsel %vm1650, %v3108, -inf
      %3113 = vmax.xlane.f32.xlu0 %v3112
      %v3114 = vpop.xlane.xlu0 %3113
      %v3115 = vsel %vm1650, %v3109, -inf
      %3116 = vmax.xlane.f32.xlu0 %v3115
      %v3117 = vpop.xlane.xlu0 %3116
      %v3118 = vsel %vm1650, %v3110, -inf
      %3119 = vmax.xlane.f32.xlu0 %v3118
      %v3120 = vpop.xlane.xlu0 %3119
      %v3121 = vsel %vm1650, %v3111, -inf
      %3122 = vmax.xlane.f32.xlu0 %v3121
      %v3123 = vpop.xlane.xlu0 %3122
      %v3124 = vsub.f32 %v3108, %v3114
      %v3125 = vsub.f32 %v3109, %v3117
      %v3126 = vsub.f32 %v3110, %v3120
      %v3127 = vsub.f32 %v3111, %v3123
      %v3128 = vmul.f32 %v3124, 1.442695
      %v3129 = vpow.pop %v3128
      %v3130 = vmul.f32 %v3125, 1.442695
      %v3131 = vpow.pop %v3130
      %v3132 = vmul.f32 %v3126, 1.442695
      %v3133 = vpow.pop %v3132
      %v3134 = vmul.f32 %v3127, 1.442695
      %v3135 = vpow.pop %v3134
      %v3136 = vsel %vm1650, %v3129, 0.0
      %3137 = vadd.xlane.f32.xlu0 %v3136
      %v3138 = vpop.xlane.xlu0 %3137
      %v3139 = vsel %vm1650, %v3131, 0.0
      %3140 = vadd.xlane.f32.xlu0 %v3139
      %v3141 = vpop.xlane.xlu0 %3140
      %v3142 = vsel %vm1650, %v3133, 0.0
      %3143 = vadd.xlane.f32.xlu0 %v3142
      %v3144 = vpop.xlane.xlu0 %3143
      %v3145 = vsel %vm1650, %v3135, 0.0
      %3146 = vadd.xlane.f32.xlu0 %v3145
      %v3147 = vpop.xlane.xlu0 %3146
      %v3148 = vrcp.pop %v3138
      %v3149 = vrcp.pop %v3141
      %v3150 = vrcp.pop %v3144
      %v3151 = vrcp.pop %v3147
      %v3152 = vmul.f32 %v3129, %v3148
      %v3153 = vmul.f32 %v3131, %v3149
      %v3154 = vmul.f32 %v3133, %v3150
      %v3155 = vmul.f32 %v3135, %v3151
      %v3156 = vpack.c.bf16 %v3152, %v3152
      %v3157 = vpack.c.bf16 %v3153, %v3153
      %v3158 = vpack.c.bf16 %v3154, %v3154
      %v3159 = vpack.c.bf16 %v3155, %v3155
      %v3161 = vsel %vm1650, %v3156, 0
      %v3164 = vsel %vm1896, %v2914, 0
      %3166 = vmatprep.subr.bf16.mxu0 0
      %3167 = vmatpush1.bf16.msra.mxu0 %v3164
      %3168 = vmatprep.subr.bf16.mxu0 0
      %3169 = vmatpush1.bf16.msra.mxu0 0
      %3170 = vmatprep.subr.bf16.mxu0 0
      %3171 = vmatpush1.bf16.msra.mxu0 0
      %3172 = vmatprep.subr.bf16.mxu0 0
      %3173 = vmatpush1.bf16.msra.mxu0 0
      %3174 = vmatprep.subr.bf16.mxu0 0
      %3175 = vmatpush1.bf16.msra.mxu0 0
      %3176 = vmatprep.subr.bf16.mxu0 0
      %3177 = vmatpush1.bf16.msra.mxu0 0
      %3178 = vmatprep.subr.bf16.mxu0 0
      %3179 = vmatpush1.bf16.msra.mxu0 0
      %3180 = vmatprep.subr.bf16.mxu0 0
      %3181 = vmatpush1.bf16.msra.mxu0 0
      %3182 = vmatprep.subr.bf16.mxu0 0
      %3183 = vmatpush1.bf16.msra.mxu0 0
      %3184 = vmatprep.subr.bf16.mxu0 0
      %3185 = vmatpush1.bf16.msra.mxu0 0
      %3186 = vmatprep.subr.bf16.mxu0 0
      %3187 = vmatpush1.bf16.msra.mxu0 0
      %3188 = vmatprep.subr.bf16.mxu0 0
      %3189 = vmatpush1.bf16.msra.mxu0 0
      %3190 = vmatprep.subr.bf16.mxu0 0
      %3191 = vmatpush1.bf16.msra.mxu0 0
      %3192 = vmatprep.subr.bf16.mxu0 0
      %3193 = vmatpush1.bf16.msra.mxu0 0
      %3194 = vmatprep.subr.bf16.mxu0 0
      %3195 = vmatpush1.bf16.msra.mxu0 0
      %3196 = vmatprep.subr.bf16.mxu0 0
      %3197 = vmatpush1.bf16.msra.mxu0 0
      %3198 = vmatprep.mubr.bf16.mxu0 0
      %3199 = vmatmul.mubr.bf16.gmra.mrb[0].mxu0 %v3161
      %v3200 = vpop.f32.mrb[0].mxu0
      %v3201 = vadd.f32 0.0, %v3200
      %v3202 = vpop.f32.mrb[0].mxu0
      %v3203 = vpop.f32.mrb[0].mxu0
      %v3204 = vpop.f32.mrb[0].mxu0
      %3205 = vdwg.mxu0
      %v3207 = vsel %vm1650, %v3157, 0
      %v3210 = vsel %vm1896, %v2915, 0
      %3212 = vmatprep.subr.bf16.mxu0 0
      %3213 = vmatpush1.bf16.msra.mxu0 %v3210
      %3214 = vmatprep.subr.bf16.mxu0 0
      %3215 = vmatpush1.bf16.msra.mxu0 0
      %3216 = vmatprep.subr.bf16.mxu0 0
      %3217 = vmatpush1.bf16.msra.mxu0 0
      %3218 = vmatprep.subr.bf16.mxu0 0
      %3219 = vmatpush1.bf16.msra.mxu0 0
      %3220 = vmatprep.subr.bf16.mxu0 0
      %3221 = vmatpush1.bf16.msra.mxu0 0
      %3222 = vmatprep.subr.bf16.mxu0 0
      %3223 = vmatpush1.bf16.msra.mxu0 0
      %3224 = vmatprep.subr.bf16.mxu0 0
      %3225 = vmatpush1.bf16.msra.mxu0 0
      %3226 = vmatprep.subr.bf16.mxu0 0
      %3227 = vmatpush1.bf16.msra.mxu0 0
      %3228 = vmatprep.subr.bf16.mxu0 0
      %3229 = vmatpush1.bf16.msra.mxu0 0
      %3230 = vmatprep.subr.bf16.mxu0 0
      %3231 = vmatpush1.bf16.msra.mxu0 0
      %3232 = vmatprep.subr.bf16.mxu0 0
      %3233 = vmatpush1.bf16.msra.mxu0 0
      %3234 = vmatprep.subr.bf16.mxu0 0
      %3235 = vmatpush1.bf16.msra.mxu0 0
      %3236 = vmatprep.subr.bf16.mxu0 0
      %3237 = vmatpush1.bf16.msra.mxu0 0
      %3238 = vmatprep.subr.bf16.mxu0 0
      %3239 = vmatpush1.bf16.msra.mxu0 0
      %3240 = vmatprep.subr.bf16.mxu0 0
      %3241 = vmatpush1.bf16.msra.mxu0 0
      %3242 = vmatprep.subr.bf16.mxu0 0
      %3243 = vmatpush1.bf16.msra.mxu0 0
      %3244 = vmatprep.mubr.bf16.mxu0 0
      %3245 = vmatmul.mubr.bf16.gmra.mrb[0].mxu0 %v3207
      %v3246 = vpop.f32.mrb[0].mxu0
      %v3247 = vadd.f32 0.0, %v3246
      %v3248 = vpop.f32.mrb[0].mxu0
      %v3249 = vpop.f32.mrb[0].mxu0
      %v3250 = vpop.f32.mrb[0].mxu0
      %3251 = vdwg.mxu0
      %v3253 = vsel %vm1650, %v3158, 0
      %v3256 = vsel %vm1896, %v2916, 0
      %3258 = vmatprep.subr.bf16.mxu0 0
      %3259 = vmatpush1.bf16.msra.mxu0 %v3256
      %3260 = vmatprep.subr.bf16.mxu0 0
      %3261 = vmatpush1.bf16.msra.mxu0 0
      %3262 = vmatprep.subr.bf16.mxu0 0
      %3263 = vmatpush1.bf16.msra.mxu0 0
      %3264 = vmatprep.subr.bf16.mxu0 0
      %3265 = vmatpush1.bf16.msra.mxu0 0
      %3266 = vmatprep.subr.bf16.mxu0 0
      %3267 = vmatpush1.bf16.msra.mxu0 0
      %3268 = vmatprep.subr.bf16.mxu0 0
      %3269 = vmatpush1.bf16.msra.mxu0 0
      %3270 = vmatprep.subr.bf16.mxu0 0
      %3271 = vmatpush1.bf16.msra.mxu0 0
      %3272 = vmatprep.subr.bf16.mxu0 0
      %3273 = vmatpush1.bf16.msra.mxu0 0
      %3274 = vmatprep.subr.bf16.mxu0 0
      %3275 = vmatpush1.bf16.msra.mxu0 0
      %3276 = vmatprep.subr.bf16.mxu0 0
      %3277 = vmatpush1.bf16.msra.mxu0 0
      %3278 = vmatprep.subr.bf16.mxu0 0
      %3279 = vmatpush1.bf16.msra.mxu0 0
      %3280 = vmatprep.subr.bf16.mxu0 0
      %3281 = vmatpush1.bf16.msra.mxu0 0
      %3282 = vmatprep.subr.bf16.mxu0 0
      %3283 = vmatpush1.bf16.msra.mxu0 0
      %3284 = vmatprep.subr.bf16.mxu0 0
      %3285 = vmatpush1.bf16.msra.mxu0 0
      %3286 = vmatprep.subr.bf16.mxu0 0
      %3287 = vmatpush1.bf16.msra.mxu0 0
      %3288 = vmatprep.subr.bf16.mxu0 0
      %3289 = vmatpush1.bf16.msra.mxu0 0
      %3290 = vmatprep.mubr.bf16.mxu0 0
      %3291 = vmatmul.mubr.bf16.gmra.mrb[0].mxu0 %v3253
      %v3292 = vpop.f32.mrb[0].mxu0
      %v3293 = vadd.f32 0.0, %v3292
      %v3294 = vpop.f32.mrb[0].mxu0
      %v3295 = vpop.f32.mrb[0].mxu0
      %v3296 = vpop.f32.mrb[0].mxu0
      %3297 = vdwg.mxu0
      %v3299 = vsel %vm1650, %v3159, 0
      %v3302 = vsel %vm1896, %v2917, 0
      %3304 = vmatprep.subr.bf16.mxu0 0
      %3305 = vmatpush1.bf16.msra.mxu0 %v3302
      %3306 = vmatprep.subr.bf16.mxu0 0
      %3307 = vmatpush1.bf16.msra.mxu0 0
      %3308 = vmatprep.subr.bf16.mxu0 0
      %3309 = vmatpush1.bf16.msra.mxu0 0
      %3310 = vmatprep.subr.bf16.mxu0 0
      %3311 = vmatpush1.bf16.msra.mxu0 0
      %3312 = vmatprep.subr.bf16.mxu0 0
      %3313 = vmatpush1.bf16.msra.mxu0 0
      %3314 = vmatprep.subr.bf16.mxu0 0
      %3315 = vmatpush1.bf16.msra.mxu0 0
      %3316 = vmatprep.subr.bf16.mxu0 0
      %3317 = vmatpush1.bf16.msra.mxu0 0
      %3318 = vmatprep.subr.bf16.mxu0 0
      %3319 = vmatpush1.bf16.msra.mxu0 0
      %3320 = vmatprep.subr.bf16.mxu0 0
      %3321 = vmatpush1.bf16.msra.mxu0 0
      %3322 = vmatprep.subr.bf16.mxu0 0
      %3323 = vmatpush1.bf16.msra.mxu0 0
      %3324 = vmatprep.subr.bf16.mxu0 0
      %3325 = vmatpush1.bf16.msra.mxu0 0
      %3326 = vmatprep.subr.bf16.mxu0 0
      %3327 = vmatpush1.bf16.msra.mxu0 0
      %3328 = vmatprep.subr.bf16.mxu0 0
      %3329 = vmatpush1.bf16.msra.mxu0 0
      %3330 = vmatprep.subr.bf16.mxu0 0
      %3331 = vmatpush1.bf16.msra.mxu0 0
      %3332 = vmatprep.subr.bf16.mxu0 0
      %3333 = vmatpush1.bf16.msra.mxu0 0
      %3334 = vmatprep.subr.bf16.mxu0 0
      %3335 = vmatpush1.bf16.msra.mxu0 0
      %3336 = vmatprep.mubr.bf16.mxu0 0
      %3337 = vmatmul.mubr.bf16.gmra.mrb[0].mxu0 %v3299
      %v3338 = vpop.f32.mrb[0].mxu0
      %v3339 = vadd.f32 0.0, %v3338
      %v3340 = vpop.f32.mrb[0].mxu0
      %v3341 = vpop.f32.mrb[0].mxu0
      %v3342 = vpop.f32.mrb[0].mxu0
      %3343 = vdwg.mxu0
      %v3344 = vcombine.low %v3201, %v3293
      %v3345 = vcombine.high %v3201, %v3293
      %v3347 = vunpack.c.l.s4 1983009808
      %v3348 = vunpack.c.0.s8 %v3347
      %v3349 = vlaneseq
      %v3350 = vshrl.u32 %v3349, 7
      %v3351 = vsub.s32 %v3348, %v3350
      %v3352 = vrot.slane %v3344, %v3351
      %v3354 = vunpack.c.l.s4 1983009808
      %v3355 = vunpack.c.0.s8 %v3354
      %v3356 = vlaneseq
      %v3357 = vshrl.u32 %v3356, 7
      %v3358 = vsub.s32 %v3355, %v3357
      %v3359 = vrot.slane %v3345, %v3358
      %v3360 = vcombine.low %v3247, %v3339
      %v3361 = vcombine.high %v3247, %v3339
      %v3363 = vunpack.c.l.s4 1983009808
      %v3364 = vunpack.c.0.s8 %v3363
      %v3365 = vlaneseq
      %v3366 = vshrl.u32 %v3365, 7
      %v3367 = vsub.s32 %v3364, %v3366
      %v3368 = vrot.slane %v3360, %v3367
      %v3370 = vunpack.c.l.s4 1983009808
      %v3371 = vunpack.c.0.s8 %v3370
      %v3372 = vlaneseq
      %v3373 = vshrl.u32 %v3372, 7
      %v3374 = vsub.s32 %v3371, %v3373
      %v3375 = vrot.slane %v3361, %v3374
      %v3376 = vcombine.low %v3352, %v3368
      %v3377 = vcombine.high %v3352, %v3368
      %v3379 = vunpack.c.l.s4 1934713408
      %v3380 = vunpack.c.0.s8 %v3379
      %v3381 = vlaneseq
      %v3382 = vshrl.u32 %v3381, 7
      %v3383 = vsub.s32 %v3380, %v3382
      %v3384 = vrot.slane %v3376, %v3383
      %v3386 = vunpack.c.l.s4 1934713408
      %v3387 = vunpack.c.0.s8 %v3386
      %v3388 = vlaneseq
      %v3389 = vshrl.u32 %v3388, 7
      %v3390 = vsub.s32 %v3387, %v3389
      %v3391 = vrot.slane %v3377, %v3390
      %v3392 = vcombine.low %v3359, %v3375
      %v3393 = vcombine.high %v3359, %v3375
      %v3395 = vunpack.c.l.s4 1934713408
      %v3396 = vunpack.c.0.s8 %v3395
      %v3397 = vlaneseq
      %v3398 = vshrl.u32 %v3397, 7
      %v3399 = vsub.s32 %v3396, %v3398
      %v3400 = vrot.slane %v3392, %v3399
      %v3402 = vunpack.c.l.s4 1934713408
      %v3403 = vunpack.c.0.s8 %v3402
      %v3404 = vlaneseq
      %v3405 = vshrl.u32 %v3404, 7
      %v3406 = vsub.s32 %v3403, %v3405
      %v3407 = vrot.slane %v3393, %v3406
      %v3408 = vcombine.high %v3384, 0.0
      %v3409 = vcombine.high %v3391, 0.0
      %v3410 = vcombine.high %v3400, 0.0
      %v3411 = vcombine.high %v3407, 0.0
      %v3412 = vcombine.low %v3384, %v3391
      %v3414 = vunpack.c.l.s4 1983009808
      %v3415 = vunpack.c.0.s8 %v3414
      %v3416 = vlaneseq
      %v3417 = vshrl.u32 %v3416, 7
      %v3418 = vsub.s32 %v3415, %v3417
      %v3419 = vrot.slane %v3412, %v3418
      %v3420 = vcombine.low %v3408, %v3409
      %v3422 = vunpack.c.l.s4 1983009808
      %v3423 = vunpack.c.0.s8 %v3422
      %v3424 = vlaneseq
      %v3425 = vshrl.u32 %v3424, 7
      %v3426 = vsub.s32 %v3423, %v3425
      %v3427 = vrot.slane %v3420, %v3426
      %v3428 = vcombine.low %v3400, %v3407
      %v3430 = vunpack.c.l.s4 1983009808
      %v3431 = vunpack.c.0.s8 %v3430
      %v3432 = vlaneseq
      %v3433 = vshrl.u32 %v3432, 7
      %v3434 = vsub.s32 %v3431, %v3433
      %v3435 = vrot.slane %v3428, %v3434
      %v3436 = vcombine.low %v3410, %v3411
      %v3438 = vunpack.c.l.s4 1983009808
      %v3439 = vunpack.c.0.s8 %v3438
      %v3440 = vlaneseq
      %v3441 = vshrl.u32 %v3440, 7
      %v3442 = vsub.s32 %v3439, %v3441
      %v3443 = vrot.slane %v3436, %v3442
      %v3444 = vcombine.low %v3419, %v3427
      %v3445 = vcombine.high %v3419, %v3427
      %v3447 = vunpack.c.l.s4 1934713408
      %v3448 = vunpack.c.0.s8 %v3447
      %v3449 = vlaneseq
      %v3450 = vshrl.u32 %v3449, 7
      %v3451 = vsub.s32 %v3448, %v3450
      %v3452 = vrot.slane %v3444, %v3451
      %v3454 = vunpack.c.l.s4 1934713408
      %v3455 = vunpack.c.0.s8 %v3454
      %v3456 = vlaneseq
      %v3457 = vshrl.u32 %v3456, 7
      %v3458 = vsub.s32 %v3455, %v3457
      %v3459 = vrot.slane %v3445, %v3458
      %v3460 = vcombine.low %v3435, %v3443
      %v3461 = vcombine.high %v3435, %v3443
      %v3463 = vunpack.c.l.s4 1934713408
      %v3464 = vunpack.c.0.s8 %v3463
      %v3465 = vlaneseq
      %v3466 = vshrl.u32 %v3465, 7
      %v3467 = vsub.s32 %v3464, %v3466
      %v3468 = vrot.slane %v3460, %v3467
      %v3470 = vunpack.c.l.s4 1934713408
      %v3471 = vunpack.c.0.s8 %v3470
      %v3472 = vlaneseq
      %v3473 = vshrl.u32 %v3472, 7
      %v3474 = vsub.s32 %v3471, %v3473
      %v3475 = vrot.slane %v3461, %v3474
      %v3476 = vcombine.low %v3452, %v3468
      %v3477 = vcombine.high %v3452, %v3468
      %v3478 = vcombine.low %v3459, %v3475
      %v3479 = vcombine.high %v3459, %v3475
      %3481 = vrot.lane.b32.xlu0 %v3477, 8
      %v3482 = vpop.permute.xlu0 %3481
      %3485 = vrot.lane.b32.xlu0 %v3478, 16
      %v3486 = vpop.permute.xlu0 %3485
      %3489 = vrot.lane.b32.xlu0 %v3479, 24
      %v3490 = vpop.permute.xlu0 %3489
      %v3492 = vsel %vm1650, %v3476, %v3482
      %v3493 = vsel %vm2227, %v3492, %v3486
      %v3494 = vsel %vm2229, %v3493, %v3490
      %v3495 = vpack.c.bf16 %v3494, %v3494
      %v3496 = vld [vmem:[%s1082] sm:$0xf]
      %v3497 = vld [vmem:[%s1082 + $0x4] sm:$0xf]
      %v3498 = vld [vmem:[%s1082 + $0x8] sm:$0xf]
      %v3499 = vld [vmem:[%s1082 + $0xc] sm:$0xf]
      %v3500 = vld [vmem:[%s1085] sm:$0x1]
      %v3502 = vlaneseq
      %v3503 = vshrl.u32 %v3502, 7
      %v3504 = vsub.s32 0, %v3503
      %v3505 = vrot.slane %v3500, %v3504
      %v3511 = vunpack.c.l.b16 %v3496
      %v3512 = vunpack.c.l.b16 %v3497
      %v3513 = vunpack.c.l.b16 %v3498
      %v3514 = vunpack.c.l.b16 %v3499
      %v3515 = vpack.c.b16 %v3512, %v3511
      %v3516 = vpack.c.b16 %v3514, %v3513
      %v3520 = vsel %vm1151, %v3495, 0
      %3522 = vmatprep.subr.bf16.mxu0 0
      %3523 = vmatpush1.bf16.msra.mxu0 %v3515
      %3524 = vmatprep.subr.bf16.mxu0 0
      %3525 = vmatpush1.bf16.msra.mxu0 %v3516
      %3526 = vmatprep.subr.bf16.mxu0 0
      %3527 = vmatpush1.bf16.msra.mxu0 0
      %3528 = vmatprep.subr.bf16.mxu0 0
      %3529 = vmatpush1.bf16.msra.mxu0 0
      %3530 = vmatprep.subr.bf16.mxu0 0
      %3531 = vmatpush1.bf16.msra.mxu0 0
      %3532 = vmatprep.subr.bf16.mxu0 0
      %3533 = vmatpush1.bf16.msra.mxu0 0
      %3534 = vmatprep.subr.bf16.mxu0 0
      %3535 = vmatpush1.bf16.msra.mxu0 0
      %3536 = vmatprep.subr.bf16.mxu0 0
      %3537 = vmatpush1.bf16.msra.mxu0 0
      %3538 = vmatprep.subr.bf16.mxu0 0
      %3539 = vmatpush1.bf16.msra.mxu0 0
      %3540 = vmatprep.subr.bf16.mxu0 0
      %3541 = vmatpush1.bf16.msra.mxu0 0
      %3542 = vmatprep.subr.bf16.mxu0 0
      %3543 = vmatpush1.bf16.msra.mxu0 0
      %3544 = vmatprep.subr.bf16.mxu0 0
      %3545 = vmatpush1.bf16.msra.mxu0 0
      %3546 = vmatprep.subr.bf16.mxu0 0
      %3547 = vmatpush1.bf16.msra.mxu0 0
      %3548 = vmatprep.subr.bf16.mxu0 0
      %3549 = vmatpush1.bf16.msra.mxu0 0
      %3550 = vmatprep.subr.bf16.mxu0 0
      %3551 = vmatpush1.bf16.msra.mxu0 0
      %3552 = vmatprep.subr.bf16.mxu0 0
      %3553 = vmatpush1.bf16.msra.mxu0 0
      %3554 = vmatprep.mubr.bf16.mxu0 0
      %3555 = vmatmul.mubr.bf16.gmra.mrb[0].mxu0 %v3520
      %v3556 = vpop.f32.mrb[0].mxu0
      %v3557 = vadd.f32 %v3505, %v3556
      %v3558 = vpop.f32.mrb[0].mxu0
      %v3559 = vpop.f32.mrb[0].mxu0
      %v3560 = vpop.f32.mrb[0].mxu0
      %3561 = vdwg.mxu0
      %v3562 = vadd.f32 %v3557, %v2329
      %v3563 = vld [vmem:[%s1088] sm:$0x1]
      %v3564 = vld [vmem:[%s1091] sm:$0x1]
      %v3565 = vsel %vm1151, %v3562, 0.0
      %3566 = vadd.xlane.f32.xlu0 %v3565
      %v3567 = vpop.xlane.xlu0 %3566
      %v3568 = vmul.f32 %v3567, %v2304
      %v3569 = vsub.f32 %v3562, %v3568
      %v3570 = vmul.f32 %v3569, %v3569
      %v3571 = vsel %vm1151, %v3570, 0.0
      %3572 = vadd.xlane.f32.xlu0 %v3571
      %v3573 = vpop.xlane.xlu0 %3572
      %v3574 = vmul.f32 %v3573, %v2304
      %v3575 = vmax.f32 %v3574, 1e-10
      %v3576 = vadd.f32 %v3575, 1e-10
      %v3577 = vrsqrt.pop %v3576
      %v3578 = vmul.f32 %v3569, %v3577
      %v3580 = vlaneseq
      %v3581 = vshrl.u32 %v3580, 7
      %v3582 = vsub.s32 0, %v3581
      %v3583 = vrot.slane %v3563, %v3582
      %v3585 = vmul.f32 %v3583, %v3578
      %v3587 = vlaneseq
      %v3588 = vshrl.u32 %v3587, 7
      %v3589 = vsub.s32 0, %v3588
      %v3590 = vrot.slane %v3564, %v3589
      %v3592 = vadd.f32 %v3585, %v3590
      %v3593 = vpack.c.bf16 %v3592, %v3592
      %v3594 = vld [vmem:[%s1096] sm:$0xf]
      %v3595 = vld [vmem:[%s1096 + $0x4] sm:$0xf]
      %v3596 = vld [vmem:[%s1096 + $0x8] sm:$0xf]
      %v3597 = vld [vmem:[%s1096 + $0xc] sm:$0xf]
      %v3598 = vld [vmem:[%s1099] sm:$0x1]
      %v3600 = vlaneseq
      %v3601 = vshrl.u32 %v3600, 7
      %v3602 = vsub.s32 0, %v3601
      %v3603 = vrot.slane %v3598, %v3602
      %v3609 = vunpack.c.l.b16 %v3594
      %v3610 = vunpack.c.l.b16 %v3595
      %v3611 = vunpack.c.l.b16 %v3596
      %v3612 = vunpack.c.l.b16 %v3597
      %v3613 = vpack.c.b16 %v3610, %v3609
      %v3614 = vpack.c.b16 %v3612, %v3611
      %v3618 = vsel %vm1151, %v3593, 0
      %3620 = vmatprep.subr.bf16.mxu0 0
      %3621 = vmatpush1.bf16.msra.mxu0 %v3613
      %3622 = vmatprep.subr.bf16.mxu0 0
      %3623 = vmatpush1.bf16.msra.mxu0 %v3614
      %3624 = vmatprep.subr.bf16.mxu0 0
      %3625 = vmatpush1.bf16.msra.mxu0 0
      %3626 = vmatprep.subr.bf16.mxu0 0
      %3627 = vmatpush1.bf16.msra.mxu0 0
      %3628 = vmatprep.subr.bf16.mxu0 0
      %3629 = vmatpush1.bf16.msra.mxu0 0
      %3630 = vmatprep.subr.bf16.mxu0 0
      %3631 = vmatpush1.bf16.msra.mxu0 0
      %3632 = vmatprep.subr.bf16.mxu0 0
      %3633 = vmatpush1.bf16.msra.mxu0 0
      %3634 = vmatprep.subr.bf16.mxu0 0
      %3635 = vmatpush1.bf16.msra.mxu0 0
      %3636 = vmatprep.subr.bf16.mxu0 0
      %3637 = vmatpush1.bf16.msra.mxu0 0
      %3638 = vmatprep.subr.bf16.mxu0 0
      %3639 = vmatpush1.bf16.msra.mxu0 0
      %3640 = vmatprep.subr.bf16.mxu0 0
      %3641 = vmatpush1.bf16.msra.mxu0 0
      %3642 = vmatprep.subr.bf16.mxu0 0
      %3643 = vmatpush1.bf16.msra.mxu0 0
      %3644 = vmatprep.subr.bf16.mxu0 0
      %3645 = vmatpush1.bf16.msra.mxu0 0
      %3646 = vmatprep.subr.bf16.mxu0 0
      %3647 = vmatpush1.bf16.msra.mxu0 0
      %3648 = vmatprep.subr.bf16.mxu0 0
      %3649 = vmatpush1.bf16.msra.mxu0 0
      %3650 = vmatprep.subr.bf16.mxu0 0
      %3651 = vmatpush1.bf16.msra.mxu0 0
      %3652 = vmatprep.mubr.bf16.mxu0 0
      %3653 = vmatmul.mubr.bf16.gmra.mrb[0].mxu0 %v3618
      %v3654 = vpop.f32.mrb[0].mxu0
      %v3655 = vadd.f32 %v3603, %v3654
      %v3656 = vpop.f32.mrb[0].mxu0
      %v3657 = vpop.f32.mrb[0].mxu0
      %v3658 = vpop.f32.mrb[0].mxu0
      %3659 = vdwg.mxu0
      %v3660 = vmax.f32 %v3655, 0.0
      %v3661 = vpack.c.bf16 %v3660, %v3660
      %v3662 = vld [vmem:[%s1104] sm:$0xf]
      %v3663 = vld [vmem:[%s1104 + $0x4] sm:$0xf]
      %v3664 = vld [vmem:[%s1104 + $0x8] sm:$0xf]
      %v3665 = vld [vmem:[%s1104 + $0xc] sm:$0xf]
      %v3666 = vld [vmem:[%s1104 + $0x10] sm:$0xf]
      %v3667 = vld [vmem:[%s1104 + $0x14] sm:$0xf]
      %v3668 = vld [vmem:[%s1104 + $0x18] sm:$0xf]
      %v3669 = vld [vmem:[%s1104 + $0x1c] sm:$0xf]
      %v3670 = vld [vmem:[%s1107] sm:$0x1]
      %v3672 = vlaneseq
      %v3673 = vshrl.u32 %v3672, 7
      %v3674 = vsub.s32 0, %v3673
      %v3675 = vrot.slane %v3670, %v3674
      %v3685 = vunpack.c.l.b16 %v3662
      %v3686 = vunpack.c.l.b16 %v3663
      %v3687 = vunpack.c.l.b16 %v3664
      %v3688 = vunpack.c.l.b16 %v3665
      %v3689 = vunpack.c.l.b16 %v3666
      %v3690 = vunpack.c.l.b16 %v3667
      %v3691 = vunpack.c.l.b16 %v3668
      %v3692 = vunpack.c.l.b16 %v3669
      %v3693 = vpack.c.b16 %v3686, %v3685
      %v3694 = vpack.c.b16 %v3688, %v3687
      %v3695 = vpack.c.b16 %v3690, %v3689
      %v3696 = vpack.c.b16 %v3692, %v3691
      %vm3701 = vcmask 523264
      %v3703 = vsel %vm3701, %v3661, 0
      %3705 = vmatprep.subr.bf16.mxu0 0
      %3706 = vmatpush1.bf16.msra.mxu0 %v3693
      %3707 = vmatprep.subr.bf16.mxu0 0
      %3708 = vmatpush1.bf16.msra.mxu0 %v3694
      %3709 = vmatprep.subr.bf16.mxu0 0
      %3710 = vmatpush1.bf16.msra.mxu0 %v3695
      %3711 = vmatprep.subr.bf16.mxu0 0
      %3712 = vmatpush1.bf16.msra.mxu0 %v3696
      %3713 = vmatprep.subr.bf16.mxu0 0
      %3714 = vmatpush1.bf16.msra.mxu0 0
      %3715 = vmatprep.subr.bf16.mxu0 0
      %3716 = vmatpush1.bf16.msra.mxu0 0
      %3717 = vmatprep.subr.bf16.mxu0 0
      %3718 = vmatpush1.bf16.msra.mxu0 0
      %3719 = vmatprep.subr.bf16.mxu0 0
      %3720 = vmatpush1.bf16.msra.mxu0 0
      %3721 = vmatprep.subr.bf16.mxu0 0
      %3722 = vmatpush1.bf16.msra.mxu0 0
      %3723 = vmatprep.subr.bf16.mxu0 0
      %3724 = vmatpush1.bf16.msra.mxu0 0
      %3725 = vmatprep.subr.bf16.mxu0 0
      %3726 = vmatpush1.bf16.msra.mxu0 0
      %3727 = vmatprep.subr.bf16.mxu0 0
      %3728 = vmatpush1.bf16.msra.mxu0 0
      %3729 = vmatprep.subr.bf16.mxu0 0
      %3730 = vmatpush1.bf16.msra.mxu0 0
      %3731 = vmatprep.subr.bf16.mxu0 0
      %3732 = vmatpush1.bf16.msra.mxu0 0
      %3733 = vmatprep.subr.bf16.mxu0 0
      %3734 = vmatpush1.bf16.msra.mxu0 0
      %3735 = vmatprep.subr.bf16.mxu0 0
      %3736 = vmatpush1.bf16.msra.mxu0 0
      %3737 = vmatprep.mubr.bf16.mxu0 0
      %3738 = vmatmul.mubr.bf16.gmra.mrb[0].mxu0 %v3703
      %v3739 = vpop.f32.mrb[0].mxu0
      %v3740 = vadd.f32 %v3675, %v3739
      %v3741 = vpop.f32.mrb[0].mxu0
      %v3742 = vpop.f32.mrb[0].mxu0
      %v3743 = vpop.f32.mrb[0].mxu0
      %3744 = vdwg.mxu0
      %v3745 = vadd.f32 %v3740, %v3592
      %v3746 = vld [vmem:[%s1110] sm:$0x1]
      %v3747 = vld [vmem:[%s1113] sm:$0x1]
      %v3748 = vsel %vm1151, %v3745, 0.0
      %3749 = vadd.xlane.f32.xlu0 %v3748
      %v3750 = vpop.xlane.xlu0 %3749
      %v3751 = vmul.f32 %v3750, %v2304
      %v3752 = vsub.f32 %v3745, %v3751
      %v3753 = vmul.f32 %v3752, %v3752
      %v3754 = vsel %vm1151, %v3753, 0.0
      %3755 = vadd.xlane.f32.xlu0 %v3754
      %v3756 = vpop.xlane.xlu0 %3755
      %v3757 = vmul.f32 %v3756, %v2304
      %v3758 = vmax.f32 %v3757, 1e-10
      %v3759 = vadd.f32 %v3758, 1e-10
      %v3760 = vrsqrt.pop %v3759
      %v3761 = vmul.f32 %v3752, %v3760
      %v3763 = vlaneseq
      %v3764 = vshrl.u32 %v3763, 7
      %v3765 = vsub.s32 0, %v3764
      %v3766 = vrot.slane %v3746, %v3765
      %v3768 = vmul.f32 %v3766, %v3761
      %v3770 = vlaneseq
      %v3771 = vshrl.u32 %v3770, 7
      %v3772 = vsub.s32 0, %v3771
      %v3773 = vrot.slane %v3747, %v3772
      %v3775 = vadd.f32 %v3768, %v3773
      %3776 = vst.msk [vmem:[%s1117] sm:$0xff] %vm1151, %v3775
      %p3777 = scmp.lt.s32.totalorder %s39, 1
      %s3778 = scalar_select %p3777, %s39, 1
      %s3779 = smul.addr %s3778, 8
      %s3780 = scalar_lea.vmem %s24, %s3779
      // Predicated region
      $region121: #{decoder_forward.2} parent=115 // pred_check
        %p3781 = pneg %p689
      $region122: #{decoder_forward.2} parent=115 // pred_check_branch
        %3783 = sbr.rel (%p3781) target = $region124
      $region123: #{decoder_forward.2} parent=115 // pred_region
        _
      $region124: #{decoder_forward.2} parent=115 // pred_fallthru
        _
    $region116: #{decoder_forward.2} parent=5 // pred_fallthru
      _
    %p3784 = scmp.le.s32.totalorder 2, %s30
    // Predicated region
    $region125: #{decoder_forward.2} parent=5 // pred_check
      %p3785 = pneg %p3784
    $region126: #{decoder_forward.2} parent=5 // pred_check_branch
      %3787 = sbr.rel (%p3785) target = $region128
    $region127: #{decoder_forward.2} parent=5 // pred_region
      %s3788 = ssub.s32 %s30, 2
      // Predicated region
      $region129: #{decoder_forward.2} parent=127 // pred_check
        %p3789 = pneg %p695
      $region130: #{decoder_forward.2} parent=127 // pred_check_branch
        %3791 = sbr.rel (%p3789) target = $region132
      $region131: #{decoder_forward.2} parent=127 // pred_region
        %p3792 = scmp.lt.s32.totalorder %s41, 1
        %s3793 = scalar_select %p3792, %s41, 1
        %s3794 = smul.addr %s3793, 8
        %s3795 = scalar_lea.vmem %s24, %s3794
      $region132: #{decoder_forward.2} parent=127 // pred_fallthru
        _
    $region128: #{decoder_forward.2} parent=5 // pred_fallthru
      _
  $region6: #{decoder_forward.2} parent=0 // loop_footer
    %s34 = sadd.s32 1, %s30
  $region7: #{decoder_forward.2} parent=0 // loop_footer_branch
    %29 = sbr.rel target = $region3
  $region8: #{decoder_forward.2} parent=0 // loop_exit
    _

</llo_original>
